<compile_context>
chip_gen: v5e
topology: v5e:2x2
jax: 0.10.0
libtpu: 0.0.40
codegen_flags: <defaults>
</compile_context>

<pallas_src>
import functools

import jax
import jax.numpy as jnp
from jax.experimental import pallas as pl
from jax.experimental.pallas import tpu as pltpu

_VMEM = pl.BlockSpec(memory_space=pltpu.MemorySpace.VMEM)


# ----------------------------- Pallas kernels -----------------------------

def _bilstm_stack_kernel(*args, n_layers, S, Bp, H):
    """Whole stacked bidirectional LSTM in one kernel.

    args = x_ref, (wih, whh_f, whh_b, b) * n_layers, out_ref, xw_ref, hf_ref, hb_ref
      x_ref : [S*Bp, D]      time-major, batch padded to Bp (multiple of 8)
      wih   : [D_l, 8H]      input weights, cols 0:4H fwd, 4H:8H bwd (i,f,g,o order)
      whh_* : [H, 4H]        recurrent weights per direction
      b     : [1, 8H]        b_ih + b_hh folded, fwd | bwd
      out   : [S*Bp, 2H]     concat(fwd, bwd) hidden sequence of the last layer
    """
    x_ref = args[0]
    w_refs = args[1:1 + 4 * n_layers]
    out_ref = args[1 + 4 * n_layers]
    xw_ref, hf_ref, hb_ref = args[2 + 4 * n_layers:]
    f32 = jnp.float32

    # lane mask: tanh on the 'g' (cell-candidate) gate lanes, sigmoid elsewhere
    lane = jax.lax.broadcasted_iota(jnp.int32, (Bp, 4 * H), 1)
    g_mask = (lane >= 2 * H) & (lane < 3 * H)
    zeros = jnp.zeros((Bp, H), f32)

    def cell(gates, c_prev):
        # One tanh over the whole [Bp, 4H] vreg:
        #   g lanes     -> tanh(x)
        #   i,f,o lanes -> sigmoid(x) = 0.5 * (1 + tanh(x / 2))
        t = jnp.tanh(jnp.where(g_mask, gates, gates * 0.5))
        act = jnp.where(g_mask, t, 0.5 * (t + 1.0))
        i = act[:, 0:H]
        f = act[:, H:2 * H]
        g = act[:, 2 * H:3 * H]
        o = act[:, 3 * H:4 * H]
        c = f * c_prev + i * g
        return o * jnp.tanh(c), c

    for layer in range(n_layers):
        wih_ref, whh_f_ref, whh_b_ref, b_ref = w_refs[4 * layer:4 * (layer + 1)]
        if layer == 0:
            src = x_ref[...]                                            # [S*Bp, D]
        else:
            # previous layer's [fwd | bwd] activations, still resident in VMEM
            src = jnp.concatenate([hf_ref[...], hb_ref[...]], axis=-1)  # [S*Bp, 2H]

        # Hoisted input projection for BOTH directions: one big matmul per layer.
        xw_ref[...] = (jnp.dot(src, wih_ref[...], preferred_element_type=f32)
                       + b_ref[...])                                    # [S*Bp, 8H]

        whh_f = whh_f_ref[...]
        whh_b = whh_b_ref[...]

        def step(t, carry):
            h_f, c_f, h_b, c_b = carry
            r_f = pl.multiple_of(t * Bp, Bp)
            r_b = pl.multiple_of((S - 1 - t) * Bp, Bp)
            g_f = xw_ref[pl.ds(r_f, Bp), 0:4 * H] + jnp.dot(
                h_f, whh_f, preferred_element_type=f32)
            g_b = xw_ref[pl.ds(r_b, Bp), 4 * H:8 * H] + jnp.dot(
                h_b, whh_b, preferred_element_type=f32)
            h_f, c_f = cell(g_f, c_f)
            h_b, c_b = cell(g_b, c_b)
            hf_ref[pl.ds(r_f, Bp), :] = h_f
            hb_ref[pl.ds(r_b, Bp), :] = h_b
            return h_f, c_f, h_b, c_b

        jax.lax.fori_loop(0, S, step, (zeros, zeros, zeros, zeros),
                          unroll=(S <= 16))

    out_ref[...] = jnp.concatenate([hf_ref[...], hb_ref[...]], axis=-1)


def _head_kernel(x_ref, wl1_ref, bl1_ref, wl2_ref, bl2_ref,
                 wr1_ref, br1_ref, wr2_ref, br2_ref,
                 w1_ref, b1_ref, w2_ref, b2_ref, w3_ref, b3_ref, o_ref):
    """fc_left / fc_right / pairwise fc / combine, fused in one kernel.

    x_ref: [S, 2H] (out[0]);  o_ref: [S, S] = pair_scores + left @ right.T
    """
    x = x_ref[...]
    S = x.shape[0]
    twoH = x.shape[1]
    f32 = jnp.float32

    # ---- fc_left / fc_right: Linear -> ReLU -> (Dropout=no-op) -> Linear
    hl = jnp.maximum(jnp.dot(x, wl1_ref[...], preferred_element_type=f32)
                     + bl1_ref[...], 0.0)
    left = jnp.dot(hl, wl2_ref[...], preferred_element_type=f32) + bl2_ref[...]   # [S,128]
    hr = jnp.maximum(jnp.dot(x, wr1_ref[...], preferred_element_type=f32)
                     + br1_ref[...], 0.0)
    right = jnp.dot(hr, wr2_ref[...], preferred_element_type=f32) + br2_ref[...]  # [S,128]

    # ---- 0/1 selection matrices for the cartesian-product pairing,
    #      built from 2D iotas (pair row p = (i = p // S, j = p % S)).
    r = jax.lax.broadcasted_iota(jnp.int32, (S * S, S), 0)
    c = jax.lax.broadcasted_iota(jnp.int32, (S * S, S), 1)
    a_sel = jnp.where((r >= S * c) & (r < S * (c + 1)), 1.0, 0.0)        # [S*S,S]: p -> i
    eye = jnp.where(jax.lax.broadcasted_iota(jnp.int32, (S, S), 0) ==
                    jax.lax.broadcasted_iota(jnp.int32, (S, S), 1), 1.0, 0.0)
    b_sel = jnp.concatenate([eye] * S, axis=0)                           # [S*S,S]: p -> j
    ri = jax.lax.broadcasted_iota(jnp.int32, (S, S * S), 0)
    cp = jax.lax.broadcasted_iota(jnp.int32, (S, S * S), 1)
    a_selT = jnp.where((cp >= S * ri) & (cp < S * (ri + 1)), 1.0, 0.0)   # [S, S*S]

    # ---- pairwise fc: fc1(concat(x_i, x_j)) == x_i @ W1[:2H] + x_j @ W1[2H:] + b1
    a_feat = jnp.dot(x, w1_ref[0:twoH, :], preferred_element_type=f32) + b1_ref[...]  # [S,128]
    b_feat = jnp.dot(x, w1_ref[twoH:2 * twoH, :], preferred_element_type=f32)         # [S,128]
    h1 = jnp.maximum(jnp.dot(a_sel, a_feat, preferred_element_type=f32)
                     + jnp.dot(b_sel, b_feat, preferred_element_type=f32), 0.0)       # [S*S,128]
    h2 = jnp.maximum(jnp.dot(h1, w2_ref[...], preferred_element_type=f32)
                     + b2_ref[...], 0.0)                                              # [S*S,64]
    # final Linear(64 -> 1) as a lane reduction
    sc = jnp.sum(h2 * w3_ref[...], axis=-1, keepdims=True) + b3_ref[...]              # [S*S,1]
    # unflatten [S*S,1] -> dense [S,S] on the MXU (scores[i,j] = sc[i*S + j])
    scores = jnp.dot(a_selT, b_sel * sc, preferred_element_type=f32)                  # [S,S]

    lr = jax.lax.dot_general(left, right, (((1,), (1,)), ((), ())),
                             preferred_element_type=f32)                              # [S,S]
    o_ref[...] = scores + lr


# ------------------------------ wrappers -----------------------------------

def bilstm_stack(x_tm, lstm_params):
    """x_tm: [S, Bp, D] time-major input (batch already padded to multiple of 8)."""
    S, Bp, D = x_tm.shape
    H = lstm_params[0][1].shape[0]
    n_layers = len(lstm_params)
    flat_w = [w for layer in lstm_params for w in layer]
    kernel = functools.partial(_bilstm_stack_kernel,
                               n_layers=n_layers, S=S, Bp=Bp, H=H)
    y = pl.pallas_call(
        kernel,
        out_shape=jax.ShapeDtypeStruct((S * Bp, 2 * H), jnp.float32),
        in_specs=[_VMEM] * (1 + 4 * n_layers),
        out_specs=_VMEM,
        scratch_shapes=[pltpu.VMEM((S * Bp, 8 * H), jnp.float32),   # hoisted X @ W_ih
                        pltpu.VMEM((S * Bp, H), jnp.float32),       # fwd hidden sequence
                        pltpu.VMEM((S * Bp, H), jnp.float32)],      # bwd hidden sequence
    )(x_tm.reshape(S * Bp, D), *flat_w)
    return y.reshape(S, Bp, 2 * H)


def pair_head(out0, fc_left, fc_right, fc):
    S = out0.shape[0]
    return pl.pallas_call(
        _head_kernel,
        out_shape=jax.ShapeDtypeStruct((S, S), jnp.float32),
        in_specs=[_VMEM] * 15,
        out_specs=_VMEM,
    )(out0, *fc_left, *fc_right, *fc)


# --------------------------- parameter setup --------------------------------

def init_params(key, *, n_word_embed, d_word_embed, n_pos_embed, d_pos_embed,
                d_hidden, n_layers, d_pretrained_embed):
    d_lstm_input = d_word_embed + d_pretrained_embed  # ignore_pos=True

    def u(k, shape, scale=0.1):
        return jax.random.uniform(k, shape, jnp.float32, -scale, scale)

    keys = iter(jax.random.split(key, 64))
    params = {}
    params["word_embed"] = u(next(keys), (n_word_embed, d_word_embed))
    params["pos_embed"] = u(next(keys), (n_pos_embed, d_pos_embed))  # unused (ignore_pos)

    H = d_hidden
    lstm = []
    for layer in range(n_layers):
        in_dim = d_lstm_input if layer == 0 else 2 * H
        wih_f = u(next(keys), (in_dim, 4 * H))      # gate order (i, f, g, o)
        wih_b = u(next(keys), (in_dim, 4 * H))
        whh_f = u(next(keys), (H, 4 * H))
        whh_b = u(next(keys), (H, 4 * H))
        b_f = u(next(keys), (1, 4 * H))             # b_ih + b_hh folded
        b_b = u(next(keys), (1, 4 * H))
        wih = jnp.concatenate([wih_f, wih_b], axis=1)   # [in, 8H]  fwd | bwd
        b = jnp.concatenate([b_f, b_b], axis=1)         # [1, 8H]
        lstm.append((wih, whh_f, whh_b, b))
    params["lstm"] = lstm

    params["fc_left"] = (u(next(keys), (2 * H, 256)), u(next(keys), (1, 256)),
                         u(next(keys), (256, 128)), u(next(keys), (1, 128)))
    params["fc_right"] = (u(next(keys), (2 * H, 256)), u(next(keys), (1, 256)),
                          u(next(keys), (256, 128)), u(next(keys), (1, 128)))
    params["fc"] = (u(next(keys), (4 * H, 128)), u(next(keys), (1, 128)),
                    u(next(keys), (128, 64)), u(next(keys), (1, 64)),
                    u(next(keys), (1, 64)), u(next(keys), (1, 1)))
    return params


# ------------------------------ forward pass --------------------------------

def model_forward(params, X, P, w2v):
    del P  # ignore_pos=True -> pos_embed not used
    B, S = X.shape

    # Embedding lookup + concat with pretrained w2v vectors (XLA glue).
    emb = jnp.take(params["word_embed"], X, axis=0)                  # [B, S, d_word]
    x = jnp.concatenate([emb, w2v], axis=-1).astype(jnp.float32)     # [B, S, D]
    x = jnp.transpose(x, (1, 0, 2))                                  # time-major [S, B, D]

    # Pad batch to a sublane multiple so every per-step LSTM access is aligned.
    Bp = ((B + 7) // 8) * 8
    if Bp != B:
        x = jnp.pad(x, ((0, 0), (0, Bp - B), (0, 0)))

    h = bilstm_stack(x, params["lstm"])                              # [S, Bp, 2H]
    out0 = h[:, 0, :]                                                # out[0] -> [S, 2H]

    # fc_left / fc_right / pairwise fc / combine fused into one kernel.
    return pair_head(out0, params["fc_left"], params["fc_right"], params["fc"])


# --------------------------------- main --------------------------------------

if __name__ == "__main__":
    key = jax.random.PRNGKey(0)
    k_param, k_x, k_p, k_w = jax.random.split(key, 4)

    # Small, module-consistent shapes.
    B, S = 2, 8
    n_word_embed, d_word_embed = 50, 16
    n_pos_embed, d_pos_embed = 10, 8
    d_hidden, n_layers = 32, 2
    d_pretrained_embed = 48   # (module default is 300; kept small for the demo)

    params = init_params(
        k_param,
        n_word_embed=n_word_embed, d_word_embed=d_word_embed,
        n_pos_embed=n_pos_embed, d_pos_embed=d_pos_embed,
        d_hidden=d_hidden, n_layers=n_layers,
        d_pretrained_embed=d_pretrained_embed)

    X = jax.random.randint(k_x, (B, S), 0, n_word_embed, dtype=jnp.int32)
    P = jax.random.randint(k_p, (B, S), 0, n_pos_embed, dtype=jnp.int32)
    w2v = jax.random.normal(k_w, (B, S, d_pretrained_embed), dtype=jnp.float32)

    out = jax.jit(model_forward)(params, X, P, w2v)
    out = jax.block_until_ready(out)

    assert out.shape == (S, S), out.shape
    assert bool(jnp.all(jnp.isfinite(out)))
    print("KERNEL_OK")
</pallas_src>

<mosaic_0001>
module attributes {stable_mosaic.version = 11 : i64} {
  func.func @_head_kernel(%arg0: memref<8x64xf32, #tpu.memory_space<vmem>>, %arg1: memref<64x256xf32, #tpu.memory_space<vmem>>, %arg2: memref<1x256xf32, #tpu.memory_space<vmem>>, %arg3: memref<256x128xf32, #tpu.memory_space<vmem>>, %arg4: memref<1x128xf32, #tpu.memory_space<vmem>>, %arg5: memref<64x256xf32, #tpu.memory_space<vmem>>, %arg6: memref<1x256xf32, #tpu.memory_space<vmem>>, %arg7: memref<256x128xf32, #tpu.memory_space<vmem>>, %arg8: memref<1x128xf32, #tpu.memory_space<vmem>>, %arg9: memref<128x128xf32, #tpu.memory_space<vmem>>, %arg10: memref<1x128xf32, #tpu.memory_space<vmem>>, %arg11: memref<128x64xf32, #tpu.memory_space<vmem>>, %arg12: memref<1x64xf32, #tpu.memory_space<vmem>>, %arg13: memref<1x64xf32, #tpu.memory_space<vmem>>, %arg14: memref<1x1xf32, #tpu.memory_space<vmem>>, %arg15: memref<8x8xf32, #tpu.memory_space<vmem>>) attributes {dimension_semantics = [], scalar_prefetch = 0 : i64, scratch_operands = 0 : i64, tpu.core_type = #tpu.core_type<tc>} {
    %c0 = arith.constant 0 : index
    %c0_0 = arith.constant 0 : index
    %0 = vector.load %arg0[%c0, %c0_0] : memref<8x64xf32, #tpu.memory_space<vmem>>, vector<8x64xf32>
    %c0_1 = arith.constant 0 : index
    %c0_2 = arith.constant 0 : index
    %1 = vector.load %arg1[%c0_1, %c0_2] : memref<64x256xf32, #tpu.memory_space<vmem>>, vector<64x256xf32>
    %cst = arith.constant dense<0.000000e+00> : vector<8x256xf32>
    %2 = tpu.matmul %0, %1, %cst {dimension_numbers = #tpu.dot_dimension_numbers<[1], [0], [0], [1], [0, 0, 1, 1], [], []>} : vector<8x64xf32>, vector<64x256xf32>, vector<8x256xf32> -> vector<8x256xf32>
    %c0_3 = arith.constant 0 : index
    %c0_4 = arith.constant 0 : index
    %3 = vector.load %arg2[%c0_3, %c0_4] : memref<1x256xf32, #tpu.memory_space<vmem>>, vector<1x256xf32>
    %4 = vector.broadcast %3 : vector<1x256xf32> to vector<8x256xf32>
    %5 = arith.addf %2, %4 : vector<8x256xf32>
    %cst_5 = arith.constant 0.000000e+00 : f32
    %6 = vector.broadcast %cst_5 : f32 to vector<8x256xf32>
    %7 = arith.maximumf %5, %6 : vector<8x256xf32>
    %c0_6 = arith.constant 0 : index
    %c0_7 = arith.constant 0 : index
    %8 = vector.load %arg3[%c0_6, %c0_7] : memref<256x128xf32, #tpu.memory_space<vmem>>, vector<256x128xf32>
    %cst_8 = arith.constant dense<0.000000e+00> : vector<8x128xf32>
    %9 = tpu.matmul %7, %8, %cst_8 {dimension_numbers = #tpu.dot_dimension_numbers<[1], [0], [0], [1], [0, 0, 1, 1], [], []>} : vector<8x256xf32>, vector<256x128xf32>, vector<8x128xf32> -> vector<8x128xf32>
    %c0_9 = arith.constant 0 : index
    %c0_10 = arith.constant 0 : index
    %10 = vector.load %arg4[%c0_9, %c0_10] : memref<1x128xf32, #tpu.memory_space<vmem>>, vector<1x128xf32>
    %11 = vector.broadcast %10 : vector<1x128xf32> to vector<8x128xf32>
    %12 = arith.addf %9, %11 : vector<8x128xf32>
    %c0_11 = arith.constant 0 : index
    %c0_12 = arith.constant 0 : index
    %13 = vector.load %arg5[%c0_11, %c0_12] : memref<64x256xf32, #tpu.memory_space<vmem>>, vector<64x256xf32>
    %cst_13 = arith.constant dense<0.000000e+00> : vector<8x256xf32>
    %14 = tpu.matmul %0, %13, %cst_13 {dimension_numbers = #tpu.dot_dimension_numbers<[1], [0], [0], [1], [0, 0, 1, 1], [], []>} : vector<8x64xf32>, vector<64x256xf32>, vector<8x256xf32> -> vector<8x256xf32>
    %c0_14 = arith.constant 0 : index
    %c0_15 = arith.constant 0 : index
    %15 = vector.load %arg6[%c0_14, %c0_15] : memref<1x256xf32, #tpu.memory_space<vmem>>, vector<1x256xf32>
    %16 = vector.broadcast %15 : vector<1x256xf32> to vector<8x256xf32>
    %17 = arith.addf %14, %16 : vector<8x256xf32>
    %cst_16 = arith.constant 0.000000e+00 : f32
    %18 = vector.broadcast %cst_16 : f32 to vector<8x256xf32>
    %19 = arith.maximumf %17, %18 : vector<8x256xf32>
    %c0_17 = arith.constant 0 : index
    %c0_18 = arith.constant 0 : index
    %20 = vector.load %arg7[%c0_17, %c0_18] : memref<256x128xf32, #tpu.memory_space<vmem>>, vector<256x128xf32>
    %cst_19 = arith.constant dense<0.000000e+00> : vector<8x128xf32>
    %21 = tpu.matmul %19, %20, %cst_19 {dimension_numbers = #tpu.dot_dimension_numbers<[1], [0], [0], [1], [0, 0, 1, 1], [], []>} : vector<8x256xf32>, vector<256x128xf32>, vector<8x128xf32> -> vector<8x128xf32>
    %c0_20 = arith.constant 0 : index
    %c0_21 = arith.constant 0 : index
    %22 = vector.load %arg8[%c0_20, %c0_21] : memref<1x128xf32, #tpu.memory_space<vmem>>, vector<1x128xf32>
    %23 = vector.broadcast %22 : vector<1x128xf32> to vector<8x128xf32>
    %24 = arith.addf %21, %23 : vector<8x128xf32>
    %25 = tpu.iota {dimensions = array<i32: 0>} : vector<64x8xi32>
    %26 = tpu.iota {dimensions = array<i32: 1>} : vector<64x8xi32>
    %c8_i32 = arith.constant 8 : i32
    %27 = vector.broadcast %c8_i32 : i32 to vector<64x8xi32>
    %28 = arith.muli %27, %26 : vector<64x8xi32>
    %29 = arith.cmpi sge, %25, %28 : vector<64x8xi32>
    %c1_i32 = arith.constant 1 : i32
    %30 = vector.broadcast %c1_i32 : i32 to vector<64x8xi32>
    %31 = arith.addi %26, %30 : vector<64x8xi32>
    %c8_i32_22 = arith.constant 8 : i32
    %32 = vector.broadcast %c8_i32_22 : i32 to vector<64x8xi32>
    %33 = arith.muli %32, %31 : vector<64x8xi32>
    %34 = arith.cmpi slt, %25, %33 : vector<64x8xi32>
    %35 = arith.andi %29, %34 : vector<64x8xi1>
    %cst_23 = arith.constant 1.000000e+00 : f32
    %cst_24 = arith.constant 0.000000e+00 : f32
    %36 = vector.broadcast %cst_23 : f32 to vector<64x8xf32>
    %37 = vector.broadcast %cst_24 : f32 to vector<64x8xf32>
    %38 = arith.select %35, %36, %37 : vector<64x8xi1>, vector<64x8xf32>
    %39 = tpu.iota {dimensions = array<i32: 0>} : vector<8x8xi32>
    %40 = tpu.iota {dimensions = array<i32: 1>} : vector<8x8xi32>
    %41 = arith.cmpi eq, %39, %40 : vector<8x8xi32>
    %cst_25 = arith.constant 1.000000e+00 : f32
    %cst_26 = arith.constant 0.000000e+00 : f32
    %42 = vector.broadcast %cst_25 : f32 to vector<8x8xf32>
    %43 = vector.broadcast %cst_26 : f32 to vector<8x8xf32>
    %44 = arith.select %41, %42, %43 : vector<8x8xi1>, vector<8x8xf32>
    %45 = tpu.concatenate %44, %44, %44, %44, %44, %44, %44, %44 in 0 : vector<8x8xf32>, vector<8x8xf32>, vector<8x8xf32>, vector<8x8xf32>, vector<8x8xf32>, vector<8x8xf32>, vector<8x8xf32>, vector<8x8xf32> -> vector<64x8xf32>
    %46 = tpu.iota {dimensions = array<i32: 0>} : vector<8x64xi32>
    %47 = tpu.iota {dimensions = array<i32: 1>} : vector<8x64xi32>
    %c8_i32_27 = arith.constant 8 : i32
    %48 = vector.broadcast %c8_i32_27 : i32 to vector<8x64xi32>
    %49 = arith.muli %48, %46 : vector<8x64xi32>
    %50 = arith.cmpi sge, %47, %49 : vector<8x64xi32>
    %c1_i32_28 = arith.constant 1 : i32
    %51 = vector.broadcast %c1_i32_28 : i32 to vector<8x64xi32>
    %52 = arith.addi %46, %51 : vector<8x64xi32>
    %c8_i32_29 = arith.constant 8 : i32
    %53 = vector.broadcast %c8_i32_29 : i32 to vector<8x64xi32>
    %54 = arith.muli %53, %52 : vector<8x64xi32>
    %55 = arith.cmpi slt, %47, %54 : vector<8x64xi32>
    %56 = arith.andi %50, %55 : vector<8x64xi1>
    %cst_30 = arith.constant 1.000000e+00 : f32
    %cst_31 = arith.constant 0.000000e+00 : f32
    %57 = vector.broadcast %cst_30 : f32 to vector<8x64xf32>
    %58 = vector.broadcast %cst_31 : f32 to vector<8x64xf32>
    %59 = arith.select %56, %57, %58 : vector<8x64xi1>, vector<8x64xf32>
    %c0_32 = arith.constant 0 : index
    %c0_33 = arith.constant 0 : index
    %60 = vector.load %arg9[%c0_32, %c0_33] : memref<128x128xf32, #tpu.memory_space<vmem>>, vector<64x128xf32>
    %cst_34 = arith.constant dense<0.000000e+00> : vector<8x128xf32>
    %61 = tpu.matmul %0, %60, %cst_34 {dimension_numbers = #tpu.dot_dimension_numbers<[1], [0], [0], [1], [0, 0, 1, 1], [], []>} : vector<8x64xf32>, vector<64x128xf32>, vector<8x128xf32> -> vector<8x128xf32>
    %c0_35 = arith.constant 0 : index
    %c0_36 = arith.constant 0 : index
    %62 = vector.load %arg10[%c0_35, %c0_36] : memref<1x128xf32, #tpu.memory_space<vmem>>, vector<1x128xf32>
    %63 = vector.broadcast %62 : vector<1x128xf32> to vector<8x128xf32>
    %64 = arith.addf %61, %63 : vector<8x128xf32>
    %c64 = arith.constant 64 : index
    %c0_37 = arith.constant 0 : index
    %65 = vector.load %arg9[%c64, %c0_37] : memref<128x128xf32, #tpu.memory_space<vmem>>, vector<64x128xf32>
    %cst_38 = arith.constant dense<0.000000e+00> : vector<8x128xf32>
    %66 = tpu.matmul %0, %65, %cst_38 {dimension_numbers = #tpu.dot_dimension_numbers<[1], [0], [0], [1], [0, 0, 1, 1], [], []>} : vector<8x64xf32>, vector<64x128xf32>, vector<8x128xf32> -> vector<8x128xf32>
    %cst_39 = arith.constant dense<0.000000e+00> : vector<64x128xf32>
    %67 = tpu.matmul %38, %64, %cst_39 {dimension_numbers = #tpu.dot_dimension_numbers<[1], [0], [0], [1], [0, 0, 1, 1], [], []>} : vector<64x8xf32>, vector<8x128xf32>, vector<64x128xf32> -> vector<64x128xf32>
    %cst_40 = arith.constant dense<0.000000e+00> : vector<64x128xf32>
    %68 = tpu.matmul %45, %66, %cst_40 {dimension_numbers = #tpu.dot_dimension_numbers<[1], [0], [0], [1], [0, 0, 1, 1], [], []>} : vector<64x8xf32>, vector<8x128xf32>, vector<64x128xf32> -> vector<64x128xf32>
    %69 = arith.addf %67, %68 : vector<64x128xf32>
    %cst_41 = arith.constant 0.000000e+00 : f32
    %70 = vector.broadcast %cst_41 : f32 to vector<64x128xf32>
    %71 = arith.maximumf %69, %70 : vector<64x128xf32>
    %c0_42 = arith.constant 0 : index
    %c0_43 = arith.constant 0 : index
    %72 = vector.load %arg11[%c0_42, %c0_43] : memref<128x64xf32, #tpu.memory_space<vmem>>, vector<128x64xf32>
    %cst_44 = arith.constant dense<0.000000e+00> : vector<64x64xf32>
    %73 = tpu.matmul %71, %72, %cst_44 {dimension_numbers = #tpu.dot_dimension_numbers<[1], [0], [0], [1], [0, 0, 1, 1], [], []>} : vector<64x128xf32>, vector<128x64xf32>, vector<64x64xf32> -> vector<64x64xf32>
    %c0_45 = arith.constant 0 : index
    %c0_46 = arith.constant 0 : index
    %74 = vector.load %arg12[%c0_45, %c0_46] : memref<1x64xf32, #tpu.memory_space<vmem>>, vector<1x64xf32>
    %75 = vector.broadcast %74 : vector<1x64xf32> to vector<64x64xf32>
    %76 = arith.addf %73, %75 : vector<64x64xf32>
    %cst_47 = arith.constant 0.000000e+00 : f32
    %77 = vector.broadcast %cst_47 : f32 to vector<64x64xf32>
    %78 = arith.maximumf %76, %77 : vector<64x64xf32>
    %c0_48 = arith.constant 0 : index
    %c0_49 = arith.constant 0 : index
    %79 = vector.load %arg13[%c0_48, %c0_49] : memref<1x64xf32, #tpu.memory_space<vmem>>, vector<1x64xf32>
    %80 = vector.broadcast %79 : vector<1x64xf32> to vector<64x64xf32>
    %81 = arith.mulf %78, %80 : vector<64x64xf32>
    %cst_50 = arith.constant dense<0.000000e+00> : vector<64xf32>
    %82 = vector.multi_reduction <add>, %81, %cst_50 [1] : vector<64x64xf32> to vector<64xf32>
    %83 = vector.shape_cast %82 : vector<64xf32> to vector<64x1xf32>
    %c0_51 = arith.constant 0 : index
    %c0_52 = arith.constant 0 : index
    %84 = vector.load %arg14[%c0_51, %c0_52] : memref<1x1xf32, #tpu.memory_space<vmem>>, vector<1x1xf32>
    %85 = vector.broadcast %84 : vector<1x1xf32> to vector<64x1xf32>
    %86 = arith.addf %83, %85 : vector<64x1xf32>
    %87 = vector.broadcast %86 : vector<64x1xf32> to vector<64x8xf32>
    %88 = arith.mulf %45, %87 : vector<64x8xf32>
    %cst_53 = arith.constant dense<0.000000e+00> : vector<8x8xf32>
    %89 = tpu.matmul %59, %88, %cst_53 {dimension_numbers = #tpu.dot_dimension_numbers<[1], [0], [0], [1], [0, 0, 1, 1], [], []>} : vector<8x64xf32>, vector<64x8xf32>, vector<8x8xf32> -> vector<8x8xf32>
    %cst_54 = arith.constant dense<0.000000e+00> : vector<8x8xf32>
    %90 = tpu.matmul %12, %24, %cst_54 {dimension_numbers = #tpu.dot_dimension_numbers<[1], [1], [0], [0], [0, 0, 1, 0], [], []>} : vector<8x128xf32>, vector<8x128xf32>, vector<8x8xf32> -> vector<8x8xf32>
    %91 = arith.addf %89, %90 : vector<8x8xf32>
    %c0_55 = arith.constant 0 : index
    %c0_56 = arith.constant 0 : index
    %92 = vector.load %arg15[%c0_55, %c0_56] : memref<8x8xf32, #tpu.memory_space<vmem>>, vector<8x8xf32>
    tpu.vector_store %arg15[%c0_55, %c0_56], %91 {strides = array<i32>} : memref<8x8xf32, #tpu.memory_space<vmem>>, vector<8x8xf32>,
    return
  }
}

module attributes {stable_mosaic.version = 11 : i64} {
  func.func @_bilstm_stack_kernel(%arg0: memref<64x64xf32, #tpu.memory_space<vmem>>, %arg1: memref<64x256xf32, #tpu.memory_space<vmem>>, %arg2: memref<32x128xf32, #tpu.memory_space<vmem>>, %arg3: memref<32x128xf32, #tpu.memory_space<vmem>>, %arg4: memref<1x256xf32, #tpu.memory_space<vmem>>, %arg5: memref<64x256xf32, #tpu.memory_space<vmem>>, %arg6: memref<32x128xf32, #tpu.memory_space<vmem>>, %arg7: memref<32x128xf32, #tpu.memory_space<vmem>>, %arg8: memref<1x256xf32, #tpu.memory_space<vmem>>, %arg9: memref<64x64xf32, #tpu.memory_space<vmem>>, %arg10: memref<64x256xf32, #tpu.memory_space<vmem>>, %arg11: memref<64x32xf32, #tpu.memory_space<vmem>>, %arg12: memref<64x32xf32, #tpu.memory_space<vmem>>) attributes {dimension_semantics = [], scalar_prefetch = 0 : i64, scratch_operands = 3 : i64, tpu.core_type = #tpu.core_type<tc>} {
    %0 = tpu.iota {dimensions = array<i32: 1>} : vector<8x128xi32>
    %c64_i32 = arith.constant 64 : i32
    %1 = vector.broadcast %c64_i32 : i32 to vector<8x128xi32>
    %2 = arith.cmpi sge, %0, %1 : vector<8x128xi32>
    %c96_i32 = arith.constant 96 : i32
    %3 = vector.broadcast %c96_i32 : i32 to vector<8x128xi32>
    %4 = arith.cmpi slt, %0, %3 : vector<8x128xi32>
    %5 = arith.andi %2, %4 : vector<8x128xi1>
    %cst = arith.constant 0.000000e+00 : f32
    %6 = vector.broadcast %cst : f32 to vector<8x32xf32>
    %c0 = arith.constant 0 : index
    %c0_0 = arith.constant 0 : index
    %7 = vector.load %arg0[%c0, %c0_0] : memref<64x64xf32, #tpu.memory_space<vmem>>, vector<64x64xf32>
    %c0_1 = arith.constant 0 : index
    %c0_2 = arith.constant 0 : index
    %8 = vector.load %arg1[%c0_1, %c0_2] : memref<64x256xf32, #tpu.memory_space<vmem>>, vector<64x256xf32>
    %cst_3 = arith.constant dense<0.000000e+00> : vector<64x256xf32>
    %9 = tpu.matmul %7, %8, %cst_3 {dimension_numbers = #tpu.dot_dimension_numbers<[1], [0], [0], [1], [0, 0, 1, 1], [], []>} : vector<64x64xf32>, vector<64x256xf32>, vector<64x256xf32> -> vector<64x256xf32>
    %c0_4 = arith.constant 0 : index
    %c0_5 = arith.constant 0 : index
    %10 = vector.load %arg4[%c0_4, %c0_5] : memref<1x256xf32, #tpu.memory_space<vmem>>, vector<1x256xf32>
    %11 = vector.broadcast %10 : vector<1x256xf32> to vector<64x256xf32>
    %12 = arith.addf %9, %11 : vector<64x256xf32>
    %c0_6 = arith.constant 0 : index
    %c0_7 = arith.constant 0 : index
    %13 = vector.load %arg10[%c0_6, %c0_7] : memref<64x256xf32, #tpu.memory_space<vmem>>, vector<64x256xf32>
    tpu.vector_store %arg10[%c0_6, %c0_7], %12 {strides = array<i32>} : memref<64x256xf32, #tpu.memory_space<vmem>>, vector<64x256xf32>,
    %c0_8 = arith.constant 0 : index
    %c0_9 = arith.constant 0 : index
    %14 = vector.load %arg2[%c0_8, %c0_9] : memref<32x128xf32, #tpu.memory_space<vmem>>, vector<32x128xf32>
    %c0_10 = arith.constant 0 : index
    %c0_11 = arith.constant 0 : index
    %15 = vector.load %arg3[%c0_10, %c0_11] : memref<32x128xf32, #tpu.memory_space<vmem>>, vector<32x128xf32>
    %c0_i32 = arith.constant 0 : i32
    %c8_i32 = arith.constant 8 : i32
    %16 = arith.muli %c0_i32, %c8_i32 : i32
    %17 = tpu.assume_multiple %16, 8 : i32
    %c7_i32 = arith.constant 7 : i32
    %18 = arith.subi %c7_i32, %c0_i32 : i32
    %c8_i32_12 = arith.constant 8 : i32
    %19 = arith.muli %18, %c8_i32_12 : i32
    %20 = tpu.assume_multiple %19, 8 : i32
    %21 = arith.index_cast %17 : i32 to index
    %c0_13 = arith.constant 0 : index
    %22 = vector.load %arg10[%21, %c0_13] : memref<64x256xf32, #tpu.memory_space<vmem>>, vector<8x128xf32>
    %cst_14 = arith.constant dense<0.000000e+00> : vector<8x128xf32>
    %23 = tpu.matmul %6, %14, %cst_14 {dimension_numbers = #tpu.dot_dimension_numbers<[1], [0], [0], [1], [0, 0, 1, 1], [], []>} : vector<8x32xf32>, vector<32x128xf32>, vector<8x128xf32> -> vector<8x128xf32>
    %24 = arith.addf %22, %23 : vector<8x128xf32>
    %25 = arith.index_cast %20 : i32 to index
    %c128 = arith.constant 128 : index
    %26 = vector.load %arg10[%25, %c128] : memref<64x256xf32, #tpu.memory_space<vmem>>, vector<8x128xf32>
    %cst_15 = arith.constant dense<0.000000e+00> : vector<8x128xf32>
    %27 = tpu.matmul %6, %15, %cst_15 {dimension_numbers = #tpu.dot_dimension_numbers<[1], [0], [0], [1], [0, 0, 1, 1], [], []>} : vector<8x32xf32>, vector<32x128xf32>, vector<8x128xf32> -> vector<8x128xf32>
    %28 = arith.addf %26, %27 : vector<8x128xf32>
    %cst_16 = arith.constant 5.000000e-01 : f32
    %29 = vector.broadcast %cst_16 : f32 to vector<8x128xf32>
    %30 = arith.mulf %24, %29 : vector<8x128xf32>
    %31 = arith.select %5, %24, %30 : vector<8x128xi1>, vector<8x128xf32>
    %32 = math.tanh %31 : vector<8x128xf32>
    %cst_17 = arith.constant 1.000000e+00 : f32
    %33 = vector.broadcast %cst_17 : f32 to vector<8x128xf32>
    %34 = arith.addf %32, %33 : vector<8x128xf32>
    %cst_18 = arith.constant 5.000000e-01 : f32
    %35 = vector.broadcast %cst_18 : f32 to vector<8x128xf32>
    %36 = arith.mulf %35, %34 : vector<8x128xf32>
    %37 = arith.select %5, %32, %36 : vector<8x128xi1>, vector<8x128xf32>
    %38 = vector.extract_strided_slice %37 {offsets = [0, 0], sizes = [8, 32], strides = [1, 1]} : vector<8x128xf32> to vector<8x32xf32>
    %39 = vector.extract_strided_slice %37 {offsets = [0, 32], sizes = [8, 32], strides = [1, 1]} : vector<8x128xf32> to vector<8x32xf32>
    %40 = vector.extract_strided_slice %37 {offsets = [0, 64], sizes = [8, 32], strides = [1, 1]} : vector<8x128xf32> to vector<8x32xf32>
    %41 = vector.extract_strided_slice %37 {offsets = [0, 96], sizes = [8, 32], strides = [1, 1]} : vector<8x128xf32> to vector<8x32xf32>
    %42 = arith.mulf %39, %6 : vector<8x32xf32>
    %43 = arith.mulf %38, %40 : vector<8x32xf32>
    %44 = arith.addf %42, %43 : vector<8x32xf32>
    %45 = math.tanh %44 : vector<8x32xf32>
    %46 = arith.mulf %41, %45 : vector<8x32xf32>
    %cst_19 = arith.constant 5.000000e-01 : f32
    %47 = vector.broadcast %cst_19 : f32 to vector<8x128xf32>
    %48 = arith.mulf %28, %47 : vector<8x128xf32>
    %49 = arith.select %5, %28, %48 : vector<8x128xi1>, vector<8x128xf32>
    %50 = math.tanh %49 : vector<8x128xf32>
    %cst_20 = arith.constant 1.000000e+00 : f32
    %51 = vector.broadcast %cst_20 : f32 to vector<8x128xf32>
    %52 = arith.addf %50, %51 : vector<8x128xf32>
    %cst_21 = arith.constant 5.000000e-01 : f32
    %53 = vector.broadcast %cst_21 : f32 to vector<8x128xf32>
    %54 = arith.mulf %53, %52 : vector<8x128xf32>
    %55 = arith.select %5, %50, %54 : vector<8x128xi1>, vector<8x128xf32>
    %56 = vector.extract_strided_slice %55 {offsets = [0, 0], sizes = [8, 32], strides = [1, 1]} : vector<8x128xf32> to vector<8x32xf32>
    %57 = vector.extract_strided_slice %55 {offsets = [0, 32], sizes = [8, 32], strides = [1, 1]} : vector<8x128xf32> to vector<8x32xf32>
    %58 = vector.extract_strided_slice %55 {offsets = [0, 64], sizes = [8, 32], strides = [1, 1]} : vector<8x128xf32> to vector<8x32xf32>
    %59 = vector.extract_strided_slice %55 {offsets = [0, 96], sizes = [8, 32], strides = [1, 1]} : vector<8x128xf32> to vector<8x32xf32>
    %60 = arith.mulf %57, %6 : vector<8x32xf32>
    %61 = arith.mulf %56, %58 : vector<8x32xf32>
    %62 = arith.addf %60, %61 : vector<8x32xf32>
    %63 = math.tanh %62 : vector<8x32xf32>
    %64 = arith.mulf %59, %63 : vector<8x32xf32>
    %65 = arith.index_cast %17 : i32 to index
    %c0_22 = arith.constant 0 : index
    %66 = vector.load %arg11[%65, %c0_22] : memref<64x32xf32, #tpu.memory_space<vmem>>, vector<8x32xf32>
    tpu.vector_store %arg11[%65, %c0_22], %46 {strides = array<i32>} : memref<64x32xf32, #tpu.memory_space<vmem>>, vector<8x32xf32>,
    %67 = arith.index_cast %20 : i32 to index
    %c0_23 = arith.constant 0 : index
    %68 = vector.load %arg12[%67, %c0_23] : memref<64x32xf32, #tpu.memory_space<vmem>>, vector<8x32xf32>
    tpu.vector_store %arg12[%67, %c0_23], %64 {strides = array<i32>} : memref<64x32xf32, #tpu.memory_space<vmem>>, vector<8x32xf32>,
    %c1_i32 = arith.constant 1 : i32
    %c8_i32_24 = arith.constant 8 : i32
    %69 = arith.muli %c1_i32, %c8_i32_24 : i32
    %70 = tpu.assume_multiple %69, 8 : i32
    %c7_i32_25 = arith.constant 7 : i32
    %71 = arith.subi %c7_i32_25, %c1_i32 : i32
    %c8_i32_26 = arith.constant 8 : i32
    %72 = arith.muli %71, %c8_i32_26 : i32
    %73 = tpu.assume_multiple %72, 8 : i32
    %74 = arith.index_cast %70 : i32 to index
    %c0_27 = arith.constant 0 : index
    %75 = vector.load %arg10[%74, %c0_27] : memref<64x256xf32, #tpu.memory_space<vmem>>, vector<8x128xf32>
    %cst_28 = arith.constant dense<0.000000e+00> : vector<8x128xf32>
    %76 = tpu.matmul %46, %14, %cst_28 {dimension_numbers = #tpu.dot_dimension_numbers<[1], [0], [0], [1], [0, 0, 1, 1], [], []>} : vector<8x32xf32>, vector<32x128xf32>, vector<8x128xf32> -> vector<8x128xf32>
    %77 = arith.addf %75, %76 : vector<8x128xf32>
    %78 = arith.index_cast %73 : i32 to index
    %c128_29 = arith.constant 128 : index
    %79 = vector.load %arg10[%78, %c128_29] : memref<64x256xf32, #tpu.memory_space<vmem>>, vector<8x128xf32>
    %cst_30 = arith.constant dense<0.000000e+00> : vector<8x128xf32>
    %80 = tpu.matmul %64, %15, %cst_30 {dimension_numbers = #tpu.dot_dimension_numbers<[1], [0], [0], [1], [0, 0, 1, 1], [], []>} : vector<8x32xf32>, vector<32x128xf32>, vector<8x128xf32> -> vector<8x128xf32>
    %81 = arith.addf %79, %80 : vector<8x128xf32>
    %cst_31 = arith.constant 5.000000e-01 : f32
    %82 = vector.broadcast %cst_31 : f32 to vector<8x128xf32>
    %83 = arith.mulf %77, %82 : vector<8x128xf32>
    %84 = arith.select %5, %77, %83 : vector<8x128xi1>, vector<8x128xf32>
    %85 = math.tanh %84 : vector<8x128xf32>
    %cst_32 = arith.constant 1.000000e+00 : f32
    %86 = vector.broadcast %cst_32 : f32 to vector<8x128xf32>
    %87 = arith.addf %85, %86 : vector<8x128xf32>
    %cst_33 = arith.constant 5.000000e-01 : f32
    %88 = vector.broadcast %cst_33 : f32 to vector<8x128xf32>
    %89 = arith.mulf %88, %87 : vector<8x128xf32>
    %90 = arith.select %5, %85, %89 : vector<8x128xi1>, vector<8x128xf32>
    %91 = vector.extract_strided_slice %90 {offsets = [0, 0], sizes = [8, 32], strides = [1, 1]} : vector<8x128xf32> to vector<8x32xf32>
    %92 = vector.extract_strided_slice %90 {offsets = [0, 32], sizes = [8, 32], strides = [1, 1]} : vector<8x128xf32> to vector<8x32xf32>
    %93 = vector.extract_strided_slice %90 {offsets = [0, 64], sizes = [8, 32], strides = [1, 1]} : vector<8x128xf32> to vector<8x32xf32>
    %94 = vector.extract_strided_slice %90 {offsets = [0, 96], sizes = [8, 32], strides = [1, 1]} : vector<8x128xf32> to vector<8x32xf32>
    %95 = arith.mulf %92, %44 : vector<8x32xf32>
    %96 = arith.mulf %91, %93 : vector<8x32xf32>
    %97 = arith.addf %95, %96 : vector<8x32xf32>
    %98 = math.tanh %97 : vector<8x32xf32>
    %99 = arith.mulf %94, %98 : vector<8x32xf32>
    %cst_34 = arith.constant 5.000000e-01 : f32
    %100 = vector.broadcast %cst_34 : f32 to vector<8x128xf32>
    %101 = arith.mulf %81, %100 : vector<8x128xf32>
    %102 = arith.select %5, %81, %101 : vector<8x128xi1>, vector<8x128xf32>
    %103 = math.tanh %102 : vector<8x128xf32>
    %cst_35 = arith.constant 1.000000e+00 : f32
    %104 = vector.broadcast %cst_35 : f32 to vector<8x128xf32>
    %105 = arith.addf %103, %104 : vector<8x128xf32>
    %cst_36 = arith.constant 5.000000e-01 : f32
    %106 = vector.broadcast %cst_36 : f32 to vector<8x128xf32>
    %107 = arith.mulf %106, %105 : vector<8x128xf32>
    %108 = arith.select %5, %103, %107 : vector<8x128xi1>, vector<8x128xf32>
    %109 = vector.extract_strided_slice %108 {offsets = [0, 0], sizes = [8, 32], strides = [1, 1]} : vector<8x128xf32> to vector<8x32xf32>
    %110 = vector.extract_strided_slice %108 {offsets = [0, 32], sizes = [8, 32], strides = [1, 1]} : vector<8x128xf32> to vector<8x32xf32>
    %111 = vector.extract_strided_slice %108 {offsets = [0, 64], sizes = [8, 32], strides = [1, 1]} : vector<8x128xf32> to vector<8x32xf32>
    %112 = vector.extract_strided_slice %108 {offsets = [0, 96], sizes = [8, 32], strides = [1, 1]} : vector<8x128xf32> to vector<8x32xf32>
    %113 = arith.mulf %110, %62 : vector<8x32xf32>
    %114 = arith.mulf %109, %111 : vector<8x32xf32>
    %115 = arith.addf %113, %114 : vector<8x32xf32>
    %116 = math.tanh %115 : vector<8x32xf32>
    %117 = arith.mulf %112, %116 : vector<8x32xf32>
    %118 = arith.index_cast %70 : i32 to index
    %c0_37 = arith.constant 0 : index
    %119 = vector.load %arg11[%118, %c0_37] : memref<64x32xf32, #tpu.memory_space<vmem>>, vector<8x32xf32>
    tpu.vector_store %arg11[%118, %c0_37], %99 {strides = array<i32>} : memref<64x32xf32, #tpu.memory_space<vmem>>, vector<8x32xf32>,
    %120 = arith.index_cast %73 : i32 to index
    %c0_38 = arith.constant 0 : index
    %121 = vector.load %arg12[%120, %c0_38] : memref<64x32xf32, #tpu.memory_space<vmem>>, vector<8x32xf32>
    tpu.vector_store %arg12[%120, %c0_38], %117 {strides = array<i32>} : memref<64x32xf32, #tpu.memory_space<vmem>>, vector<8x32xf32>,
    %c2_i32 = arith.constant 2 : i32
    %c8_i32_39 = arith.constant 8 : i32
    %122 = arith.muli %c2_i32, %c8_i32_39 : i32
    %123 = tpu.assume_multiple %122, 8 : i32
    %c7_i32_40 = arith.constant 7 : i32
    %124 = arith.subi %c7_i32_40, %c2_i32 : i32
    %c8_i32_41 = arith.constant 8 : i32
    %125 = arith.muli %124, %c8_i32_41 : i32
    %126 = tpu.assume_multiple %125, 8 : i32
    %127 = arith.index_cast %123 : i32 to index
    %c0_42 = arith.constant 0 : index
    %128 = vector.load %arg10[%127, %c0_42] : memref<64x256xf32, #tpu.memory_space<vmem>>, vector<8x128xf32>
    %cst_43 = arith.constant dense<0.000000e+00> : vector<8x128xf32>
    %129 = tpu.matmul %99, %14, %cst_43 {dimension_numbers = #tpu.dot_dimension_numbers<[1], [0], [0], [1], [0, 0, 1, 1], [], []>} : vector<8x32xf32>, vector<32x128xf32>, vector<8x128xf32> -> vector<8x128xf32>
    %130 = arith.addf %128, %129 : vector<8x128xf32>
    %131 = arith.index_cast %126 : i32 to index
    %c128_44 = arith.constant 128 : index
    %132 = vector.load %arg10[%131, %c128_44] : memref<64x256xf32, #tpu.memory_space<vmem>>, vector<8x128xf32>
    %cst_45 = arith.constant dense<0.000000e+00> : vector<8x128xf32>
    %133 = tpu.matmul %117, %15, %cst_45 {dimension_numbers = #tpu.dot_dimension_numbers<[1], [0], [0], [1], [0, 0, 1, 1], [], []>} : vector<8x32xf32>, vector<32x128xf32>, vector<8x128xf32> -> vector<8x128xf32>
    %134 = arith.addf %132, %133 : vector<8x128xf32>
    %cst_46 = arith.constant 5.000000e-01 : f32
    %135 = vector.broadcast %cst_46 : f32 to vector<8x128xf32>
    %136 = arith.mulf %130, %135 : vector<8x128xf32>
    %137 = arith.select %5, %130, %136 : vector<8x128xi1>, vector<8x128xf32>
    %138 = math.tanh %137 : vector<8x128xf32>
    %cst_47 = arith.constant 1.000000e+00 : f32
    %139 = vector.broadcast %cst_47 : f32 to vector<8x128xf32>
    %140 = arith.addf %138, %139 : vector<8x128xf32>
    %cst_48 = arith.constant 5.000000e-01 : f32
    %141 = vector.broadcast %cst_48 : f32 to vector<8x128xf32>
    %142 = arith.mulf %141, %140 : vector<8x128xf32>
    %143 = arith.select %5, %138, %142 : vector<8x128xi1>, vector<8x128xf32>
    %144 = vector.extract_strided_slice %143 {offsets = [0, 0], sizes = [8, 32], strides = [1, 1]} : vector<8x128xf32> to vector<8x32xf32>
    %145 = vector.extract_strided_slice %143 {offsets = [0, 32], sizes = [8, 32], strides = [1, 1]} : vector<8x128xf32> to vector<8x32xf32>
    %146 = vector.extract_strided_slice %143 {offsets = [0, 64], sizes = [8, 32], strides = [1, 1]} : vector<8x128xf32> to vector<8x32xf32>
    %147 = vector.extract_strided_slice %143 {offsets = [0, 96], sizes = [8, 32], strides = [1, 1]} : vector<8x128xf32> to vector<8x32xf32>
    %148 = arith.mulf %145, %97 : vector<8x32xf32>
    %149 = arith.mulf %144, %146 : vector<8x32xf32>
    %150 = arith.addf %148, %149 : vector<8x32xf32>
    %151 = math.tanh %150 : vector<8x32xf32>
    %152 = arith.mulf %147, %151 : vector<8x32xf32>
    %cst_49 = arith.constant 5.000000e-01 : f32
    %153 = vector.broadcast %cst_49 : f32 to vector<8x128xf32>
    %154 = arith.mulf %134, %153 : vector<8x128xf32>
    %155 = arith.select %5, %134, %154 : vector<8x128xi1>, vector<8x128xf32>
    %156 = math.tanh %155 : vector<8x128xf32>
    %cst_50 = arith.constant 1.000000e+00 : f32
    %157 = vector.broadcast %cst_50 : f32 to vector<8x128xf32>
    %158 = arith.addf %156, %157 : vector<8x128xf32>
    %cst_51 = arith.constant 5.000000e-01 : f32
    %159 = vector.broadcast %cst_51 : f32 to vector<8x128xf32>
    %160 = arith.mulf %159, %158 : vector<8x128xf32>
    %161 = arith.select %5, %156, %160 : vector<8x128xi1>, vector<8x128xf32>
    %162 = vector.extract_strided_slice %161 {offsets = [0, 0], sizes = [8, 32], strides = [1, 1]} : vector<8x128xf32> to vector<8x32xf32>
    %163 = vector.extract_strided_slice %161 {offsets = [0, 32], sizes = [8, 32], strides = [1, 1]} : vector<8x128xf32> to vector<8x32xf32>
    %164 = vector.extract_strided_slice %161 {offsets = [0, 64], sizes = [8, 32], strides = [1, 1]} : vector<8x128xf32> to vector<8x32xf32>
    %165 = vector.extract_strided_slice %161 {offsets = [0, 96], sizes = [8, 32], strides = [1, 1]} : vector<8x128xf32> to vector<8x32xf32>
    %166 = arith.mulf %163, %115 : vector<8x32xf32>
    %167 = arith.mulf %162, %164 : vector<8x32xf32>
    %168 = arith.addf %166, %167 : vector<8x32xf32>
    %169 = math.tanh %168 : vector<8x32xf32>
    %170 = arith.mulf %165, %169 : vector<8x32xf32>
    %171 = arith.index_cast %123 : i32 to index
    %c0_52 = arith.constant 0 : index
    %172 = vector.load %arg11[%171, %c0_52] : memref<64x32xf32, #tpu.memory_space<vmem>>, vector<8x32xf32>
    tpu.vector_store %arg11[%171, %c0_52], %152 {strides = array<i32>} : memref<64x32xf32, #tpu.memory_space<vmem>>, vector<8x32xf32>,
    %173 = arith.index_cast %126 : i32 to index
    %c0_53 = arith.constant 0 : index
    %174 = vector.load %arg12[%173, %c0_53] : memref<64x32xf32, #tpu.memory_space<vmem>>, vector<8x32xf32>
    tpu.vector_store %arg12[%173, %c0_53], %170 {strides = array<i32>} : memref<64x32xf32, #tpu.memory_space<vmem>>, vector<8x32xf32>,
    %c3_i32 = arith.constant 3 : i32
    %c8_i32_54 = arith.constant 8 : i32
    %175 = arith.muli %c3_i32, %c8_i32_54 : i32
    %176 = tpu.assume_multiple %175, 8 : i32
    %c7_i32_55 = arith.constant 7 : i32
    %177 = arith.subi %c7_i32_55, %c3_i32 : i32
    %c8_i32_56 = arith.constant 8 : i32
    %178 = arith.muli %177, %c8_i32_56 : i32
    %179 = tpu.assume_multiple %178, 8 : i32
    %180 = arith.index_cast %176 : i32 to index
    %c0_57 = arith.constant 0 : index
    %181 = vector.load %arg10[%180, %c0_57] : memref<64x256xf32, #tpu.memory_space<vmem>>, vector<8x128xf32>
    %cst_58 = arith.constant dense<0.000000e+00> : vector<8x128xf32>
    %182 = tpu.matmul %152, %14, %cst_58 {dimension_numbers = #tpu.dot_dimension_numbers<[1], [0], [0], [1], [0, 0, 1, 1], [], []>} : vector<8x32xf32>, vector<32x128xf32>, vector<8x128xf32> -> vector<8x128xf32>
    %183 = arith.addf %181, %182 : vector<8x128xf32>
    %184 = arith.index_cast %179 : i32 to index
    %c128_59 = arith.constant 128 : index
    %185 = vector.load %arg10[%184, %c128_59] : memref<64x256xf32, #tpu.memory_space<vmem>>, vector<8x128xf32>
    %cst_60 = arith.constant dense<0.000000e+00> : vector<8x128xf32>
    %186 = tpu.matmul %170, %15, %cst_60 {dimension_numbers = #tpu.dot_dimension_numbers<[1], [0], [0], [1], [0, 0, 1, 1], [], []>} : vector<8x32xf32>, vector<32x128xf32>, vector<8x128xf32> -> vector<8x128xf32>
    %187 = arith.addf %185, %186 : vector<8x128xf32>
    %cst_61 = arith.constant 5.000000e-01 : f32
    %188 = vector.broadcast %cst_61 : f32 to vector<8x128xf32>
    %189 = arith.mulf %183, %188 : vector<8x128xf32>
    %190 = arith.select %5, %183, %189 : vector<8x128xi1>, vector<8x128xf32>
    %191 = math.tanh %190 : vector<8x128xf32>
    %cst_62 = arith.constant 1.000000e+00 : f32
    %192 = vector.broadcast %cst_62 : f32 to vector<8x128xf32>
    %193 = arith.addf %191, %192 : vector<8x128xf32>
    %cst_63 = arith.constant 5.000000e-01 : f32
    %194 = vector.broadcast %cst_63 : f32 to vector<8x128xf32>
    %195 = arith.mulf %194, %193 : vector<8x128xf32>
    %196 = arith.select %5, %191, %195 : vector<8x128xi1>, vector<8x128xf32>
    %197 = vector.extract_strided_slice %196 {offsets = [0, 0], sizes = [8, 32], strides = [1, 1]} : vector<8x128xf32> to vector<8x32xf32>
    %198 = vector.extract_strided_slice %196 {offsets = [0, 32], sizes = [8, 32], strides = [1, 1]} : vector<8x128xf32> to vector<8x32xf32>
    %199 = vector.extract_strided_slice %196 {offsets = [0, 64], sizes = [8, 32], strides = [1, 1]} : vector<8x128xf32> to vector<8x32xf32>
    %200 = vector.extract_strided_slice %196 {offsets = [0, 96], sizes = [8, 32], strides = [1, 1]} : vector<8x128xf32> to vector<8x32xf32>
    %201 = arith.mulf %198, %150 : vector<8x32xf32>
    %202 = arith.mulf %197, %199 : vector<8x32xf32>
    %203 = arith.addf %201, %202 : vector<8x32xf32>
    %204 = math.tanh %203 : vector<8x32xf32>
    %205 = arith.mulf %200, %204 : vector<8x32xf32>
    %cst_64 = arith.constant 5.000000e-01 : f32
    %206 = vector.broadcast %cst_64 : f32 to vector<8x128xf32>
    %207 = arith.mulf %187, %206 : vector<8x128xf32>
    %208 = arith.select %5, %187, %207 : vector<8x128xi1>, vector<8x128xf32>
    %209 = math.tanh %208 : vector<8x128xf32>
    %cst_65 = arith.constant 1.000000e+00 : f32
    %210 = vector.broadcast %cst_65 : f32 to vector<8x128xf32>
    %211 = arith.addf %209, %210 : vector<8x128xf32>
    %cst_66 = arith.constant 5.000000e-01 : f32
    %212 = vector.broadcast %cst_66 : f32 to vector<8x128xf32>
    %213 = arith.mulf %212, %211 : vector<8x128xf32>
    %214 = arith.select %5, %209, %213 : vector<8x128xi1>, vector<8x128xf32>
    %215 = vector.extract_strided_slice %214 {offsets = [0, 0], sizes = [8, 32], strides = [1, 1]} : vector<8x128xf32> to vector<8x32xf32>
    %216 = vector.extract_strided_slice %214 {offsets = [0, 32], sizes = [8, 32], strides = [1, 1]} : vector<8x128xf32> to vector<8x32xf32>
    %217 = vector.extract_strided_slice %214 {offsets = [0, 64], sizes = [8, 32], strides = [1, 1]} : vector<8x128xf32> to vector<8x32xf32>
    %218 = vector.extract_strided_slice %214 {offsets = [0, 96], sizes = [8, 32], strides = [1, 1]} : vector<8x128xf32> to vector<8x32xf32>
    %219 = arith.mulf %216, %168 : vector<8x32xf32>
    %220 = arith.mulf %215, %217 : vector<8x32xf32>
    %221 = arith.addf %219, %220 : vector<8x32xf32>
    %222 = math.tanh %221 : vector<8x32xf32>
    %223 = arith.mulf %218, %222 : vector<8x32xf32>
    %224 = arith.index_cast %176 : i32 to index
    %c0_67 = arith.constant 0 : index
    %225 = vector.load %arg11[%224, %c0_67] : memref<64x32xf32, #tpu.memory_space<vmem>>, vector<8x32xf32>
    tpu.vector_store %arg11[%224, %c0_67], %205 {strides = array<i32>} : memref<64x32xf32, #tpu.memory_space<vmem>>, vector<8x32xf32>,
    %226 = arith.index_cast %179 : i32 to index
    %c0_68 = arith.constant 0 : index
    %227 = vector.load %arg12[%226, %c0_68] : memref<64x32xf32, #tpu.memory_space<vmem>>, vector<8x32xf32>
    tpu.vector_store %arg12[%226, %c0_68], %223 {strides = array<i32>} : memref<64x32xf32, #tpu.memory_space<vmem>>, vector<8x32xf32>,
    %c4_i32 = arith.constant 4 : i32
    %c8_i32_69 = arith.constant 8 : i32
    %228 = arith.muli %c4_i32, %c8_i32_69 : i32
    %229 = tpu.assume_multiple %228, 8 : i32
    %c7_i32_70 = arith.constant 7 : i32
    %230 = arith.subi %c7_i32_70, %c4_i32 : i32
    %c8_i32_71 = arith.constant 8 : i32
    %231 = arith.muli %230, %c8_i32_71 : i32
    %232 = tpu.assume_multiple %231, 8 : i32
    %233 = arith.index_cast %229 : i32 to index
    %c0_72 = arith.constant 0 : index
    %234 = vector.load %arg10[%233, %c0_72] : memref<64x256xf32, #tpu.memory_space<vmem>>, vector<8x128xf32>
    %cst_73 = arith.constant dense<0.000000e+00> : vector<8x128xf32>
    %235 = tpu.matmul %205, %14, %cst_73 {dimension_numbers = #tpu.dot_dimension_numbers<[1], [0], [0], [1], [0, 0, 1, 1], [], []>} : vector<8x32xf32>, vector<32x128xf32>, vector<8x128xf32> -> vector<8x128xf32>
    %236 = arith.addf %234, %235 : vector<8x128xf32>
    %237 = arith.index_cast %232 : i32 to index
    %c128_74 = arith.constant 128 : index
    %238 = vector.load %arg10[%237, %c128_74] : memref<64x256xf32, #tpu.memory_space<vmem>>, vector<8x128xf32>
    %cst_75 = arith.constant dense<0.000000e+00> : vector<8x128xf32>
    %239 = tpu.matmul %223, %15, %cst_75 {dimension_numbers = #tpu.dot_dimension_numbers<[1], [0], [0], [1], [0, 0, 1, 1], [], []>} : vector<8x32xf32>, vector<32x128xf32>, vector<8x128xf32> -> vector<8x128xf32>
    %240 = arith.addf %238, %239 : vector<8x128xf32>
    %cst_76 = arith.constant 5.000000e-01 : f32
    %241 = vector.broadcast %cst_76 : f32 to vector<8x128xf32>
    %242 = arith.mulf %236, %241 : vector<8x128xf32>
    %243 = arith.select %5, %236, %242 : vector<8x128xi1>, vector<8x128xf32>
    %244 = math.tanh %243 : vector<8x128xf32>
    %cst_77 = arith.constant 1.000000e+00 : f32
    %245 = vector.broadcast %cst_77 : f32 to vector<8x128xf32>
    %246 = arith.addf %244, %245 : vector<8x128xf32>
    %cst_78 = arith.constant 5.000000e-01 : f32
    %247 = vector.broadcast %cst_78 : f32 to vector<8x128xf32>
    %248 = arith.mulf %247, %246 : vector<8x128xf32>
    %249 = arith.select %5, %244, %248 : vector<8x128xi1>, vector<8x128xf32>
    %250 = vector.extract_strided_slice %249 {offsets = [0, 0], sizes = [8, 32], strides = [1, 1]} : vector<8x128xf32> to vector<8x32xf32>
    %251 = vector.extract_strided_slice %249 {offsets = [0, 32], sizes = [8, 32], strides = [1, 1]} : vector<8x128xf32> to vector<8x32xf32>
    %252 = vector.extract_strided_slice %249 {offsets = [0, 64], sizes = [8, 32], strides = [1, 1]} : vector<8x128xf32> to vector<8x32xf32>
    %253 = vector.extract_strided_slice %249 {offsets = [0, 96], sizes = [8, 32], strides = [1, 1]} : vector<8x128xf32> to vector<8x32xf32>
    %254 = arith.mulf %251, %203 : vector<8x32xf32>
    %255 = arith.mulf %250, %252 : vector<8x32xf32>
    %256 = arith.addf %254, %255 : vector<8x32xf32>
    %257 = math.tanh %256 : vector<8x32xf32>
    %258 = arith.mulf %253, %257 : vector<8x32xf32>
    %cst_79 = arith.constant 5.000000e-01 : f32
    %259 = vector.broadcast %cst_79 : f32 to vector<8x128xf32>
    %260 = arith.mulf %240, %259 : vector<8x128xf32>
    %261 = arith.select %5, %240, %260 : vector<8x128xi1>, vector<8x128xf32>
    %262 = math.tanh %261 : vector<8x128xf32>
    %cst_80 = arith.constant 1.000000e+00 : f32
    %263 = vector.broadcast %cst_80 : f32 to vector<8x128xf32>
    %264 = arith.addf %262, %263 : vector<8x128xf32>
    %cst_81 = arith.constant 5.000000e-01 : f32
    %265 = vector.broadcast %cst_81 : f32 to vector<8x128xf32>
    %266 = arith.mulf %265, %264 : vector<8x128xf32>
    %267 = arith.select %5, %262, %266 : vector<8x128xi1>, vector<8x128xf32>
    %268 = vector.extract_strided_slice %267 {offsets = [0, 0], sizes = [8, 32], strides = [1, 1]} : vector<8x128xf32> to vector<8x32xf32>
    %269 = vector.extract_strided_slice %267 {offsets = [0, 32], sizes = [8, 32], strides = [1, 1]} : vector<8x128xf32> to vector<8x32xf32>
    %270 = vector.extract_strided_slice %267 {offsets = [0, 64], sizes = [8, 32], strides = [1, 1]} : vector<8x128xf32> to vector<8x32xf32>
    %271 = vector.extract_strided_slice %267 {offsets = [0, 96], sizes = [8, 32], strides = [1, 1]} : vector<8x128xf32> to vector<8x32xf32>
    %272 = arith.mulf %269, %221 : vector<8x32xf32>
    %273 = arith.mulf %268, %270 : vector<8x32xf32>
    %274 = arith.addf %272, %273 : vector<8x32xf32>
    %275 = math.tanh %274 : vector<8x32xf32>
    %276 = arith.mulf %271, %275 : vector<8x32xf32>
    %277 = arith.index_cast %229 : i32 to index
    %c0_82 = arith.constant 0 : index
    %278 = vector.load %arg11[%277, %c0_82] : memref<64x32xf32, #tpu.memory_space<vmem>>, vector<8x32xf32>
    tpu.vector_store %arg11[%277, %c0_82], %258 {strides = array<i32>} : memref<64x32xf32, #tpu.memory_space<vmem>>, vector<8x32xf32>,
    %279 = arith.index_cast %232 : i32 to index
    %c0_83 = arith.constant 0 : index
    %280 = vector.load %arg12[%279, %c0_83] : memref<64x32xf32, #tpu.memory_space<vmem>>, vector<8x32xf32>
    tpu.vector_store %arg12[%279, %c0_83], %276 {strides = array<i32>} : memref<64x32xf32, #tpu.memory_space<vmem>>, vector<8x32xf32>,
    %c5_i32 = arith.constant 5 : i32
    %c8_i32_84 = arith.constant 8 : i32
    %281 = arith.muli %c5_i32, %c8_i32_84 : i32
    %282 = tpu.assume_multiple %281, 8 : i32
    %c7_i32_85 = arith.constant 7 : i32
    %283 = arith.subi %c7_i32_85, %c5_i32 : i32
    %c8_i32_86 = arith.constant 8 : i32
    %284 = arith.muli %283, %c8_i32_86 : i32
    %285 = tpu.assume_multiple %284, 8 : i32
    %286 = arith.index_cast %282 : i32 to index
    %c0_87 = arith.constant 0 : index
    %287 = vector.load %arg10[%286, %c0_87] : memref<64x256xf32, #tpu.memory_space<vmem>>, vector<8x128xf32>
    %cst_88 = arith.constant dense<0.000000e+00> : vector<8x128xf32>
    %288 = tpu.matmul %258, %14, %cst_88 {dimension_numbers = #tpu.dot_dimension_numbers<[1], [0], [0], [1], [0, 0, 1, 1], [], []>} : vector<8x32xf32>, vector<32x128xf32>, vector<8x128xf32> -> vector<8x128xf32>
    %289 = arith.addf %287, %288 : vector<8x128xf32>
    %290 = arith.index_cast %285 : i32 to index
    %c128_89 = arith.constant 128 : index
    %291 = vector.load %arg10[%290, %c128_89] : memref<64x256xf32, #tpu.memory_space<vmem>>, vector<8x128xf32>
    %cst_90 = arith.constant dense<0.000000e+00> : vector<8x128xf32>
    %292 = tpu.matmul %276, %15, %cst_90 {dimension_numbers = #tpu.dot_dimension_numbers<[1], [0], [0], [1], [0, 0, 1, 1], [], []>} : vector<8x32xf32>, vector<32x128xf32>, vector<8x128xf32> -> vector<8x128xf32>
    %293 = arith.addf %291, %292 : vector<8x128xf32>
    %cst_91 = arith.constant 5.000000e-01 : f32
    %294 = vector.broadcast %cst_91 : f32 to vector<8x128xf32>
    %295 = arith.mulf %289, %294 : vector<8x128xf32>
    %296 = arith.select %5, %289, %295 : vector<8x128xi1>, vector<8x128xf32>
    %297 = math.tanh %296 : vector<8x128xf32>
    %cst_92 = arith.constant 1.000000e+00 : f32
    %298 = vector.broadcast %cst_92 : f32 to vector<8x128xf32>
    %299 = arith.addf %297, %298 : vector<8x128xf32>
    %cst_93 = arith.constant 5.000000e-01 : f32
    %300 = vector.broadcast %cst_93 : f32 to vector<8x128xf32>
    %301 = arith.mulf %300, %299 : vector<8x128xf32>
    %302 = arith.select %5, %297, %301 : vector<8x128xi1>, vector<8x128xf32>
    %303 = vector.extract_strided_slice %302 {offsets = [0, 0], sizes = [8, 32], strides = [1, 1]} : vector<8x128xf32> to vector<8x32xf32>
    %304 = vector.extract_strided_slice %302 {offsets = [0, 32], sizes = [8, 32], strides = [1, 1]} : vector<8x128xf32> to vector<8x32xf32>
    %305 = vector.extract_strided_slice %302 {offsets = [0, 64], sizes = [8, 32], strides = [1, 1]} : vector<8x128xf32> to vector<8x32xf32>
    %306 = vector.extract_strided_slice %302 {offsets = [0, 96], sizes = [8, 32], strides = [1, 1]} : vector<8x128xf32> to vector<8x32xf32>
    %307 = arith.mulf %304, %256 : vector<8x32xf32>
    %308 = arith.mulf %303, %305 : vector<8x32xf32>
    %309 = arith.addf %307, %308 : vector<8x32xf32>
    %310 = math.tanh %309 : vector<8x32xf32>
    %311 = arith.mulf %306, %310 : vector<8x32xf32>
    %cst_94 = arith.constant 5.000000e-01 : f32
    %312 = vector.broadcast %cst_94 : f32 to vector<8x128xf32>
    %313 = arith.mulf %293, %312 : vector<8x128xf32>
    %314 = arith.select %5, %293, %313 : vector<8x128xi1>, vector<8x128xf32>
    %315 = math.tanh %314 : vector<8x128xf32>
    %cst_95 = arith.constant 1.000000e+00 : f32
    %316 = vector.broadcast %cst_95 : f32 to vector<8x128xf32>
    %317 = arith.addf %315, %316 : vector<8x128xf32>
    %cst_96 = arith.constant 5.000000e-01 : f32
    %318 = vector.broadcast %cst_96 : f32 to vector<8x128xf32>
    %319 = arith.mulf %318, %317 : vector<8x128xf32>
    %320 = arith.select %5, %315, %319 : vector<8x128xi1>, vector<8x128xf32>
    %321 = vector.extract_strided_slice %320 {offsets = [0, 0], sizes = [8, 32], strides = [1, 1]} : vector<8x128xf32> to vector<8x32xf32>
    %322 = vector.extract_strided_slice %320 {offsets = [0, 32], sizes = [8, 32], strides = [1, 1]} : vector<8x128xf32> to vector<8x32xf32>
    %323 = vector.extract_strided_slice %320 {offsets = [0, 64], sizes = [8, 32], strides = [1, 1]} : vector<8x128xf32> to vector<8x32xf32>
    %324 = vector.extract_strided_slice %320 {offsets = [0, 96], sizes = [8, 32], strides = [1, 1]} : vector<8x128xf32> to vector<8x32xf32>
    %325 = arith.mulf %322, %274 : vector<8x32xf32>
    %326 = arith.mulf %321, %323 : vector<8x32xf32>
    %327 = arith.addf %325, %326 : vector<8x32xf32>
    %328 = math.tanh %327 : vector<8x32xf32>
    %329 = arith.mulf %324, %328 : vector<8x32xf32>
    %330 = arith.index_cast %282 : i32 to index
    %c0_97 = arith.constant 0 : index
    %331 = vector.load %arg11[%330, %c0_97] : memref<64x32xf32, #tpu.memory_space<vmem>>, vector<8x32xf32>
    tpu.vector_store %arg11[%330, %c0_97], %311 {strides = array<i32>} : memref<64x32xf32, #tpu.memory_space<vmem>>, vector<8x32xf32>,
    %332 = arith.index_cast %285 : i32 to index
    %c0_98 = arith.constant 0 : index
    %333 = vector.load %arg12[%332, %c0_98] : memref<64x32xf32, #tpu.memory_space<vmem>>, vector<8x32xf32>
    tpu.vector_store %arg12[%332, %c0_98], %329 {strides = array<i32>} : memref<64x32xf32, #tpu.memory_space<vmem>>, vector<8x32xf32>,
    %c6_i32 = arith.constant 6 : i32
    %c8_i32_99 = arith.constant 8 : i32
    %334 = arith.muli %c6_i32, %c8_i32_99 : i32
    %335 = tpu.assume_multiple %334, 8 : i32
    %c7_i32_100 = arith.constant 7 : i32
    %336 = arith.subi %c7_i32_100, %c6_i32 : i32
    %c8_i32_101 = arith.constant 8 : i32
    %337 = arith.muli %336, %c8_i32_101 : i32
    %338 = tpu.assume_multiple %337, 8 : i32
    %339 = arith.index_cast %335 : i32 to index
    %c0_102 = arith.constant 0 : index
    %340 = vector.load %arg10[%339, %c0_102] : memref<64x256xf32, #tpu.memory_space<vmem>>, vector<8x128xf32>
    %cst_103 = arith.constant dense<0.000000e+00> : vector<8x128xf32>
    %341 = tpu.matmul %311, %14, %cst_103 {dimension_numbers = #tpu.dot_dimension_numbers<[1], [0], [0], [1], [0, 0, 1, 1], [], []>} : vector<8x32xf32>, vector<32x128xf32>, vector<8x128xf32> -> vector<8x128xf32>
    %342 = arith.addf %340, %341 : vector<8x128xf32>
    %343 = arith.index_cast %338 : i32 to index
    %c128_104 = arith.constant 128 : index
    %344 = vector.load %arg10[%343, %c128_104] : memref<64x256xf32, #tpu.memory_space<vmem>>, vector<8x128xf32>
    %cst_105 = arith.constant dense<0.000000e+00> : vector<8x128xf32>
    %345 = tpu.matmul %329, %15, %cst_105 {dimension_numbers = #tpu.dot_dimension_numbers<[1], [0], [0], [1], [0, 0, 1, 1], [], []>} : vector<8x32xf32>, vector<32x128xf32>, vector<8x128xf32> -> vector<8x128xf32>
    %346 = arith.addf %344, %345 : vector<8x128xf32>
    %cst_106 = arith.constant 5.000000e-01 : f32
    %347 = vector.broadcast %cst_106 : f32 to vector<8x128xf32>
    %348 = arith.mulf %342, %347 : vector<8x128xf32>
    %349 = arith.select %5, %342, %348 : vector<8x128xi1>, vector<8x128xf32>
    %350 = math.tanh %349 : vector<8x128xf32>
    %cst_107 = arith.constant 1.000000e+00 : f32
    %351 = vector.broadcast %cst_107 : f32 to vector<8x128xf32>
    %352 = arith.addf %350, %351 : vector<8x128xf32>
    %cst_108 = arith.constant 5.000000e-01 : f32
    %353 = vector.broadcast %cst_108 : f32 to vector<8x128xf32>
    %354 = arith.mulf %353, %352 : vector<8x128xf32>
    %355 = arith.select %5, %350, %354 : vector<8x128xi1>, vector<8x128xf32>
    %356 = vector.extract_strided_slice %355 {offsets = [0, 0], sizes = [8, 32], strides = [1, 1]} : vector<8x128xf32> to vector<8x32xf32>
    %357 = vector.extract_strided_slice %355 {offsets = [0, 32], sizes = [8, 32], strides = [1, 1]} : vector<8x128xf32> to vector<8x32xf32>
    %358 = vector.extract_strided_slice %355 {offsets = [0, 64], sizes = [8, 32], strides = [1, 1]} : vector<8x128xf32> to vector<8x32xf32>
    %359 = vector.extract_strided_slice %355 {offsets = [0, 96], sizes = [8, 32], strides = [1, 1]} : vector<8x128xf32> to vector<8x32xf32>
    %360 = arith.mulf %357, %309 : vector<8x32xf32>
    %361 = arith.mulf %356, %358 : vector<8x32xf32>
    %362 = arith.addf %360, %361 : vector<8x32xf32>
    %363 = math.tanh %362 : vector<8x32xf32>
    %364 = arith.mulf %359, %363 : vector<8x32xf32>
    %cst_109 = arith.constant 5.000000e-01 : f32
    %365 = vector.broadcast %cst_109 : f32 to vector<8x128xf32>
    %366 = arith.mulf %346, %365 : vector<8x128xf32>
    %367 = arith.select %5, %346, %366 : vector<8x128xi1>, vector<8x128xf32>
    %368 = math.tanh %367 : vector<8x128xf32>
    %cst_110 = arith.constant 1.000000e+00 : f32
    %369 = vector.broadcast %cst_110 : f32 to vector<8x128xf32>
    %370 = arith.addf %368, %369 : vector<8x128xf32>
    %cst_111 = arith.constant 5.000000e-01 : f32
    %371 = vector.broadcast %cst_111 : f32 to vector<8x128xf32>
    %372 = arith.mulf %371, %370 : vector<8x128xf32>
    %373 = arith.select %5, %368, %372 : vector<8x128xi1>, vector<8x128xf32>
    %374 = vector.extract_strided_slice %373 {offsets = [0, 0], sizes = [8, 32], strides = [1, 1]} : vector<8x128xf32> to vector<8x32xf32>
    %375 = vector.extract_strided_slice %373 {offsets = [0, 32], sizes = [8, 32], strides = [1, 1]} : vector<8x128xf32> to vector<8x32xf32>
    %376 = vector.extract_strided_slice %373 {offsets = [0, 64], sizes = [8, 32], strides = [1, 1]} : vector<8x128xf32> to vector<8x32xf32>
    %377 = vector.extract_strided_slice %373 {offsets = [0, 96], sizes = [8, 32], strides = [1, 1]} : vector<8x128xf32> to vector<8x32xf32>
    %378 = arith.mulf %375, %327 : vector<8x32xf32>
    %379 = arith.mulf %374, %376 : vector<8x32xf32>
    %380 = arith.addf %378, %379 : vector<8x32xf32>
    %381 = math.tanh %380 : vector<8x32xf32>
    %382 = arith.mulf %377, %381 : vector<8x32xf32>
    %383 = arith.index_cast %335 : i32 to index
    %c0_112 = arith.constant 0 : index
    %384 = vector.load %arg11[%383, %c0_112] : memref<64x32xf32, #tpu.memory_space<vmem>>, vector<8x32xf32>
    tpu.vector_store %arg11[%383, %c0_112], %364 {strides = array<i32>} : memref<64x32xf32, #tpu.memory_space<vmem>>, vector<8x32xf32>,
    %385 = arith.index_cast %338 : i32 to index
    %c0_113 = arith.constant 0 : index
    %386 = vector.load %arg12[%385, %c0_113] : memref<64x32xf32, #tpu.memory_space<vmem>>, vector<8x32xf32>
    tpu.vector_store %arg12[%385, %c0_113], %382 {strides = array<i32>} : memref<64x32xf32, #tpu.memory_space<vmem>>, vector<8x32xf32>,
    %c7_i32_114 = arith.constant 7 : i32
    %c8_i32_115 = arith.constant 8 : i32
    %387 = arith.muli %c7_i32_114, %c8_i32_115 : i32
    %388 = tpu.assume_multiple %387, 8 : i32
    %c7_i32_116 = arith.constant 7 : i32
    %389 = arith.subi %c7_i32_116, %c7_i32_114 : i32
    %c8_i32_117 = arith.constant 8 : i32
    %390 = arith.muli %389, %c8_i32_117 : i32
    %391 = tpu.assume_multiple %390, 8 : i32
    %392 = arith.index_cast %388 : i32 to index
    %c0_118 = arith.constant 0 : index
    %393 = vector.load %arg10[%392, %c0_118] : memref<64x256xf32, #tpu.memory_space<vmem>>, vector<8x128xf32>
    %cst_119 = arith.constant dense<0.000000e+00> : vector<8x128xf32>
    %394 = tpu.matmul %364, %14, %cst_119 {dimension_numbers = #tpu.dot_dimension_numbers<[1], [0], [0], [1], [0, 0, 1, 1], [], []>} : vector<8x32xf32>, vector<32x128xf32>, vector<8x128xf32> -> vector<8x128xf32>
    %395 = arith.addf %393, %394 : vector<8x128xf32>
    %396 = arith.index_cast %391 : i32 to index
    %c128_120 = arith.constant 128 : index
    %397 = vector.load %arg10[%396, %c128_120] : memref<64x256xf32, #tpu.memory_space<vmem>>, vector<8x128xf32>
    %cst_121 = arith.constant dense<0.000000e+00> : vector<8x128xf32>
    %398 = tpu.matmul %382, %15, %cst_121 {dimension_numbers = #tpu.dot_dimension_numbers<[1], [0], [0], [1], [0, 0, 1, 1], [], []>} : vector<8x32xf32>, vector<32x128xf32>, vector<8x128xf32> -> vector<8x128xf32>
    %399 = arith.addf %397, %398 : vector<8x128xf32>
    %cst_122 = arith.constant 5.000000e-01 : f32
    %400 = vector.broadcast %cst_122 : f32 to vector<8x128xf32>
    %401 = arith.mulf %395, %400 : vector<8x128xf32>
    %402 = arith.select %5, %395, %401 : vector<8x128xi1>, vector<8x128xf32>
    %403 = math.tanh %402 : vector<8x128xf32>
    %cst_123 = arith.constant 1.000000e+00 : f32
    %404 = vector.broadcast %cst_123 : f32 to vector<8x128xf32>
    %405 = arith.addf %403, %404 : vector<8x128xf32>
    %cst_124 = arith.constant 5.000000e-01 : f32
    %406 = vector.broadcast %cst_124 : f32 to vector<8x128xf32>
    %407 = arith.mulf %406, %405 : vector<8x128xf32>
    %408 = arith.select %5, %403, %407 : vector<8x128xi1>, vector<8x128xf32>
    %409 = vector.extract_strided_slice %408 {offsets = [0, 0], sizes = [8, 32], strides = [1, 1]} : vector<8x128xf32> to vector<8x32xf32>
    %410 = vector.extract_strided_slice %408 {offsets = [0, 32], sizes = [8, 32], strides = [1, 1]} : vector<8x128xf32> to vector<8x32xf32>
    %411 = vector.extract_strided_slice %408 {offsets = [0, 64], sizes = [8, 32], strides = [1, 1]} : vector<8x128xf32> to vector<8x32xf32>
    %412 = vector.extract_strided_slice %408 {offsets = [0, 96], sizes = [8, 32], strides = [1, 1]} : vector<8x128xf32> to vector<8x32xf32>
    %413 = arith.mulf %410, %362 : vector<8x32xf32>
    %414 = arith.mulf %409, %411 : vector<8x32xf32>
    %415 = arith.addf %413, %414 : vector<8x32xf32>
    %416 = math.tanh %415 : vector<8x32xf32>
    %417 = arith.mulf %412, %416 : vector<8x32xf32>
    %cst_125 = arith.constant 5.000000e-01 : f32
    %418 = vector.broadcast %cst_125 : f32 to vector<8x128xf32>
    %419 = arith.mulf %399, %418 : vector<8x128xf32>
    %420 = arith.select %5, %399, %419 : vector<8x128xi1>, vector<8x128xf32>
    %421 = math.tanh %420 : vector<8x128xf32>
    %cst_126 = arith.constant 1.000000e+00 : f32
    %422 = vector.broadcast %cst_126 : f32 to vector<8x128xf32>
    %423 = arith.addf %421, %422 : vector<8x128xf32>
    %cst_127 = arith.constant 5.000000e-01 : f32
    %424 = vector.broadcast %cst_127 : f32 to vector<8x128xf32>
    %425 = arith.mulf %424, %423 : vector<8x128xf32>
    %426 = arith.select %5, %421, %425 : vector<8x128xi1>, vector<8x128xf32>
    %427 = vector.extract_strided_slice %426 {offsets = [0, 0], sizes = [8, 32], strides = [1, 1]} : vector<8x128xf32> to vector<8x32xf32>
    %428 = vector.extract_strided_slice %426 {offsets = [0, 32], sizes = [8, 32], strides = [1, 1]} : vector<8x128xf32> to vector<8x32xf32>
    %429 = vector.extract_strided_slice %426 {offsets = [0, 64], sizes = [8, 32], strides = [1, 1]} : vector<8x128xf32> to vector<8x32xf32>
    %430 = vector.extract_strided_slice %426 {offsets = [0, 96], sizes = [8, 32], strides = [1, 1]} : vector<8x128xf32> to vector<8x32xf32>
    %431 = arith.mulf %428, %380 : vector<8x32xf32>
    %432 = arith.mulf %427, %429 : vector<8x32xf32>
    %433 = arith.addf %431, %432 : vector<8x32xf32>
    %434 = math.tanh %433 : vector<8x32xf32>
    %435 = arith.mulf %430, %434 : vector<8x32xf32>
    %436 = arith.index_cast %388 : i32 to index
    %c0_128 = arith.constant 0 : index
    %437 = vector.load %arg11[%436, %c0_128] : memref<64x32xf32, #tpu.memory_space<vmem>>, vector<8x32xf32>
    tpu.vector_store %arg11[%436, %c0_128], %417 {strides = array<i32>} : memref<64x32xf32, #tpu.memory_space<vmem>>, vector<8x32xf32>,
    %438 = arith.index_cast %391 : i32 to index
    %c0_129 = arith.constant 0 : index
    %439 = vector.load %arg12[%438, %c0_129] : memref<64x32xf32, #tpu.memory_space<vmem>>, vector<8x32xf32>
    tpu.vector_store %arg12[%438, %c0_129], %435 {strides = array<i32>} : memref<64x32xf32, #tpu.memory_space<vmem>>, vector<8x32xf32>,
    %c8_i32_130 = arith.constant 8 : i32
    %c0_131 = arith.constant 0 : index
    %c0_132 = arith.constant 0 : index
    %440 = vector.load %arg11[%c0_131, %c0_132] : memref<64x32xf32, #tpu.memory_space<vmem>>, vector<64x32xf32>
    %c0_133 = arith.constant 0 : index
    %c0_134 = arith.constant 0 : index
    %441 = vector.load %arg12[%c0_133, %c0_134] : memref<64x32xf32, #tpu.memory_space<vmem>>, vector<64x32xf32>
    %442 = tpu.concatenate %440, %441 in 1 : vector<64x32xf32>, vector<64x32xf32> -> vector<64x64xf32>
    %c0_135 = arith.constant 0 : index
    %c0_136 = arith.constant 0 : index
    %443 = vector.load %arg5[%c0_135, %c0_136] : memref<64x256xf32, #tpu.memory_space<vmem>>, vector<64x256xf32>
    %cst_137 = arith.constant dense<0.000000e+00> : vector<64x256xf32>
    %444 = tpu.matmul %442, %443, %cst_137 {dimension_numbers = #tpu.dot_dimension_numbers<[1], [0], [0], [1], [0, 0, 1, 1], [], []>} : vector<64x64xf32>, vector<64x256xf32>, vector<64x256xf32> -> vector<64x256xf32>
    %c0_138 = arith.constant 0 : index
    %c0_139 = arith.constant 0 : index
    %445 = vector.load %arg8[%c0_138, %c0_139] : memref<1x256xf32, #tpu.memory_space<vmem>>, vector<1x256xf32>
    %446 = vector.broadcast %445 : vector<1x256xf32> to vector<64x256xf32>
    %447 = arith.addf %444, %446 : vector<64x256xf32>
    %c0_140 = arith.constant 0 : index
    %c0_141 = arith.constant 0 : index
    %448 = vector.load %arg10[%c0_140, %c0_141] : memref<64x256xf32, #tpu.memory_space<vmem>>, vector<64x256xf32>
    tpu.vector_store %arg10[%c0_140, %c0_141], %447 {strides = array<i32>} : memref<64x256xf32, #tpu.memory_space<vmem>>, vector<64x256xf32>,
    %c0_142 = arith.constant 0 : index
    %c0_143 = arith.constant 0 : index
    %449 = vector.load %arg6[%c0_142, %c0_143] : memref<32x128xf32, #tpu.memory_space<vmem>>, vector<32x128xf32>
    %c0_144 = arith.constant 0 : index
    %c0_145 = arith.constant 0 : index
    %450 = vector.load %arg7[%c0_144, %c0_145] : memref<32x128xf32, #tpu.memory_space<vmem>>, vector<32x128xf32>
    %c0_i32_146 = arith.constant 0 : i32
    %c8_i32_147 = arith.constant 8 : i32
    %451 = arith.muli %c0_i32_146, %c8_i32_147 : i32
    %452 = tpu.assume_multiple %451, 8 : i32
    %c7_i32_148 = arith.constant 7 : i32
    %453 = arith.subi %c7_i32_148, %c0_i32_146 : i32
    %c8_i32_149 = arith.constant 8 : i32
    %454 = arith.muli %453, %c8_i32_149 : i32
    %455 = tpu.assume_multiple %454, 8 : i32
    %456 = arith.index_cast %452 : i32 to index
    %c0_150 = arith.constant 0 : index
    %457 = vector.load %arg10[%456, %c0_150] : memref<64x256xf32, #tpu.memory_space<vmem>>, vector<8x128xf32>
    %cst_151 = arith.constant dense<0.000000e+00> : vector<8x128xf32>
    %458 = tpu.matmul %6, %449, %cst_151 {dimension_numbers = #tpu.dot_dimension_numbers<[1], [0], [0], [1], [0, 0, 1, 1], [], []>} : vector<8x32xf32>, vector<32x128xf32>, vector<8x128xf32> -> vector<8x128xf32>
    %459 = arith.addf %457, %458 : vector<8x128xf32>
    %460 = arith.index_cast %455 : i32 to index
    %c128_152 = arith.constant 128 : index
    %461 = vector.load %arg10[%460, %c128_152] : memref<64x256xf32, #tpu.memory_space<vmem>>, vector<8x128xf32>
    %cst_153 = arith.constant dense<0.000000e+00> : vector<8x128xf32>
    %462 = tpu.matmul %6, %450, %cst_153 {dimension_numbers = #tpu.dot_dimension_numbers<[1], [0], [0], [1], [0, 0, 1, 1], [], []>} : vector<8x32xf32>, vector<32x128xf32>, vector<8x128xf32> -> vector<8x128xf32>
    %463 = arith.addf %461, %462 : vector<8x128xf32>
    %cst_154 = arith.constant 5.000000e-01 : f32
    %464 = vector.broadcast %cst_154 : f32 to vector<8x128xf32>
    %465 = arith.mulf %459, %464 : vector<8x128xf32>
    %466 = arith.select %5, %459, %465 : vector<8x128xi1>, vector<8x128xf32>
    %467 = math.tanh %466 : vector<8x128xf32>
    %cst_155 = arith.constant 1.000000e+00 : f32
    %468 = vector.broadcast %cst_155 : f32 to vector<8x128xf32>
    %469 = arith.addf %467, %468 : vector<8x128xf32>
    %cst_156 = arith.constant 5.000000e-01 : f32
    %470 = vector.broadcast %cst_156 : f32 to vector<8x128xf32>
    %471 = arith.mulf %470, %469 : vector<8x128xf32>
    %472 = arith.select %5, %467, %471 : vector<8x128xi1>, vector<8x128xf32>
    %473 = vector.extract_strided_slice %472 {offsets = [0, 0], sizes = [8, 32], strides = [1, 1]} : vector<8x128xf32> to vector<8x32xf32>
    %474 = vector.extract_strided_slice %472 {offsets = [0, 32], sizes = [8, 32], strides = [1, 1]} : vector<8x128xf32> to vector<8x32xf32>
    %475 = vector.extract_strided_slice %472 {offsets = [0, 64], sizes = [8, 32], strides = [1, 1]} : vector<8x128xf32> to vector<8x32xf32>
    %476 = vector.extract_strided_slice %472 {offsets = [0, 96], sizes = [8, 32], strides = [1, 1]} : vector<8x128xf32> to vector<8x32xf32>
    %477 = arith.mulf %474, %6 : vector<8x32xf32>
    %478 = arith.mulf %473, %475 : vector<8x32xf32>
    %479 = arith.addf %477, %478 : vector<8x32xf32>
    %480 = math.tanh %479 : vector<8x32xf32>
    %481 = arith.mulf %476, %480 : vector<8x32xf32>
    %cst_157 = arith.constant 5.000000e-01 : f32
    %482 = vector.broadcast %cst_157 : f32 to vector<8x128xf32>
    %483 = arith.mulf %463, %482 : vector<8x128xf32>
    %484 = arith.select %5, %463, %483 : vector<8x128xi1>, vector<8x128xf32>
    %485 = math.tanh %484 : vector<8x128xf32>
    %cst_158 = arith.constant 1.000000e+00 : f32
    %486 = vector.broadcast %cst_158 : f32 to vector<8x128xf32>
    %487 = arith.addf %485, %486 : vector<8x128xf32>
    %cst_159 = arith.constant 5.000000e-01 : f32
    %488 = vector.broadcast %cst_159 : f32 to vector<8x128xf32>
    %489 = arith.mulf %488, %487 : vector<8x128xf32>
    %490 = arith.select %5, %485, %489 : vector<8x128xi1>, vector<8x128xf32>
    %491 = vector.extract_strided_slice %490 {offsets = [0, 0], sizes = [8, 32], strides = [1, 1]} : vector<8x128xf32> to vector<8x32xf32>
    %492 = vector.extract_strided_slice %490 {offsets = [0, 32], sizes = [8, 32], strides = [1, 1]} : vector<8x128xf32> to vector<8x32xf32>
    %493 = vector.extract_strided_slice %490 {offsets = [0, 64], sizes = [8, 32], strides = [1, 1]} : vector<8x128xf32> to vector<8x32xf32>
    %494 = vector.extract_strided_slice %490 {offsets = [0, 96], sizes = [8, 32], strides = [1, 1]} : vector<8x128xf32> to vector<8x32xf32>
    %495 = arith.mulf %492, %6 : vector<8x32xf32>
    %496 = arith.mulf %491, %493 : vector<8x32xf32>
    %497 = arith.addf %495, %496 : vector<8x32xf32>
    %498 = math.tanh %497 : vector<8x32xf32>
    %499 = arith.mulf %494, %498 : vector<8x32xf32>
    %500 = arith.index_cast %452 : i32 to index
    %c0_160 = arith.constant 0 : index
    %501 = vector.load %arg11[%500, %c0_160] : memref<64x32xf32, #tpu.memory_space<vmem>>, vector<8x32xf32>
    tpu.vector_store %arg11[%500, %c0_160], %481 {strides = array<i32>} : memref<64x32xf32, #tpu.memory_space<vmem>>, vector<8x32xf32>,
    %502 = arith.index_cast %455 : i32 to index
    %c0_161 = arith.constant 0 : index
    %503 = vector.load %arg12[%502, %c0_161] : memref<64x32xf32, #tpu.memory_space<vmem>>, vector<8x32xf32>
    tpu.vector_store %arg12[%502, %c0_161], %499 {strides = array<i32>} : memref<64x32xf32, #tpu.memory_space<vmem>>, vector<8x32xf32>,
    %c1_i32_162 = arith.constant 1 : i32
    %c8_i32_163 = arith.constant 8 : i32
    %504 = arith.muli %c1_i32_162, %c8_i32_163 : i32
    %505 = tpu.assume_multiple %504, 8 : i32
    %c7_i32_164 = arith.constant 7 : i32
    %506 = arith.subi %c7_i32_164, %c1_i32_162 : i32
    %c8_i32_165 = arith.constant 8 : i32
    %507 = arith.muli %506, %c8_i32_165 : i32
    %508 = tpu.assume_multiple %507, 8 : i32
    %509 = arith.index_cast %505 : i32 to index
    %c0_166 = arith.constant 0 : index
    %510 = vector.load %arg10[%509, %c0_166] : memref<64x256xf32, #tpu.memory_space<vmem>>, vector<8x128xf32>
    %cst_167 = arith.constant dense<0.000000e+00> : vector<8x128xf32>
    %511 = tpu.matmul %481, %449, %cst_167 {dimension_numbers = #tpu.dot_dimension_numbers<[1], [0], [0], [1], [0, 0, 1, 1], [], []>} : vector<8x32xf32>, vector<32x128xf32>, vector<8x128xf32> -> vector<8x128xf32>
    %512 = arith.addf %510, %511 : vector<8x128xf32>
    %513 = arith.index_cast %508 : i32 to index
    %c128_168 = arith.constant 128 : index
    %514 = vector.load %arg10[%513, %c128_168] : memref<64x256xf32, #tpu.memory_space<vmem>>, vector<8x128xf32>
    %cst_169 = arith.constant dense<0.000000e+00> : vector<8x128xf32>
    %515 = tpu.matmul %499, %450, %cst_169 {dimension_numbers = #tpu.dot_dimension_numbers<[1], [0], [0], [1], [0, 0, 1, 1], [], []>} : vector<8x32xf32>, vector<32x128xf32>, vector<8x128xf32> -> vector<8x128xf32>
    %516 = arith.addf %514, %515 : vector<8x128xf32>
    %cst_170 = arith.constant 5.000000e-01 : f32
    %517 = vector.broadcast %cst_170 : f32 to vector<8x128xf32>
    %518 = arith.mulf %512, %517 : vector<8x128xf32>
    %519 = arith.select %5, %512, %518 : vector<8x128xi1>, vector<8x128xf32>
    %520 = math.tanh %519 : vector<8x128xf32>
    %cst_171 = arith.constant 1.000000e+00 : f32
    %521 = vector.broadcast %cst_171 : f32 to vector<8x128xf32>
    %522 = arith.addf %520, %521 : vector<8x128xf32>
    %cst_172 = arith.constant 5.000000e-01 : f32
    %523 = vector.broadcast %cst_172 : f32 to vector<8x128xf32>
    %524 = arith.mulf %523, %522 : vector<8x128xf32>
    %525 = arith.select %5, %520, %524 : vector<8x128xi1>, vector<8x128xf32>
    %526 = vector.extract_strided_slice %525 {offsets = [0, 0], sizes = [8, 32], strides = [1, 1]} : vector<8x128xf32> to vector<8x32xf32>
    %527 = vector.extract_strided_slice %525 {offsets = [0, 32], sizes = [8, 32], strides = [1, 1]} : vector<8x128xf32> to vector<8x32xf32>
    %528 = vector.extract_strided_slice %525 {offsets = [0, 64], sizes = [8, 32], strides = [1, 1]} : vector<8x128xf32> to vector<8x32xf32>
    %529 = vector.extract_strided_slice %525 {offsets = [0, 96], sizes = [8, 32], strides = [1, 1]} : vector<8x128xf32> to vector<8x32xf32>
    %530 = arith.mulf %527, %479 : vector<8x32xf32>
    %531 = arith.mulf %526, %528 : vector<8x32xf32>
    %532 = arith.addf %530, %531 : vector<8x32xf32>
    %533 = math.tanh %532 : vector<8x32xf32>
    %534 = arith.mulf %529, %533 : vector<8x32xf32>
    %cst_173 = arith.constant 5.000000e-01 : f32
    %535 = vector.broadcast %cst_173 : f32 to vector<8x128xf32>
    %536 = arith.mulf %516, %535 : vector<8x128xf32>
    %537 = arith.select %5, %516, %536 : vector<8x128xi1>, vector<8x128xf32>
    %538 = math.tanh %537 : vector<8x128xf32>
    %cst_174 = arith.constant 1.000000e+00 : f32
    %539 = vector.broadcast %cst_174 : f32 to vector<8x128xf32>
    %540 = arith.addf %538, %539 : vector<8x128xf32>
    %cst_175 = arith.constant 5.000000e-01 : f32
    %541 = vector.broadcast %cst_175 : f32 to vector<8x128xf32>
    %542 = arith.mulf %541, %540 : vector<8x128xf32>
    %543 = arith.select %5, %538, %542 : vector<8x128xi1>, vector<8x128xf32>
    %544 = vector.extract_strided_slice %543 {offsets = [0, 0], sizes = [8, 32], strides = [1, 1]} : vector<8x128xf32> to vector<8x32xf32>
    %545 = vector.extract_strided_slice %543 {offsets = [0, 32], sizes = [8, 32], strides = [1, 1]} : vector<8x128xf32> to vector<8x32xf32>
    %546 = vector.extract_strided_slice %543 {offsets = [0, 64], sizes = [8, 32], strides = [1, 1]} : vector<8x128xf32> to vector<8x32xf32>
    %547 = vector.extract_strided_slice %543 {offsets = [0, 96], sizes = [8, 32], strides = [1, 1]} : vector<8x128xf32> to vector<8x32xf32>
    %548 = arith.mulf %545, %497 : vector<8x32xf32>
    %549 = arith.mulf %544, %546 : vector<8x32xf32>
    %550 = arith.addf %548, %549 : vector<8x32xf32>
    %551 = math.tanh %550 : vector<8x32xf32>
    %552 = arith.mulf %547, %551 : vector<8x32xf32>
    %553 = arith.index_cast %505 : i32 to index
    %c0_176 = arith.constant 0 : index
    %554 = vector.load %arg11[%553, %c0_176] : memref<64x32xf32, #tpu.memory_space<vmem>>, vector<8x32xf32>
    tpu.vector_store %arg11[%553, %c0_176], %534 {strides = array<i32>} : memref<64x32xf32, #tpu.memory_space<vmem>>, vector<8x32xf32>,
    %555 = arith.index_cast %508 : i32 to index
    %c0_177 = arith.constant 0 : index
    %556 = vector.load %arg12[%555, %c0_177] : memref<64x32xf32, #tpu.memory_space<vmem>>, vector<8x32xf32>
    tpu.vector_store %arg12[%555, %c0_177], %552 {strides = array<i32>} : memref<64x32xf32, #tpu.memory_space<vmem>>, vector<8x32xf32>,
    %c2_i32_178 = arith.constant 2 : i32
    %c8_i32_179 = arith.constant 8 : i32
    %557 = arith.muli %c2_i32_178, %c8_i32_179 : i32
    %558 = tpu.assume_multiple %557, 8 : i32
    %c7_i32_180 = arith.constant 7 : i32
    %559 = arith.subi %c7_i32_180, %c2_i32_178 : i32
    %c8_i32_181 = arith.constant 8 : i32
    %560 = arith.muli %559, %c8_i32_181 : i32
    %561 = tpu.assume_multiple %560, 8 : i32
    %562 = arith.index_cast %558 : i32 to index
    %c0_182 = arith.constant 0 : index
    %563 = vector.load %arg10[%562, %c0_182] : memref<64x256xf32, #tpu.memory_space<vmem>>, vector<8x128xf32>
    %cst_183 = arith.constant dense<0.000000e+00> : vector<8x128xf32>
    %564 = tpu.matmul %534, %449, %cst_183 {dimension_numbers = #tpu.dot_dimension_numbers<[1], [0], [0], [1], [0, 0, 1, 1], [], []>} : vector<8x32xf32>, vector<32x128xf32>, vector<8x128xf32> -> vector<8x128xf32>
    %565 = arith.addf %563, %564 : vector<8x128xf32>
    %566 = arith.index_cast %561 : i32 to index
    %c128_184 = arith.constant 128 : index
    %567 = vector.load %arg10[%566, %c128_184] : memref<64x256xf32, #tpu.memory_space<vmem>>, vector<8x128xf32>
    %cst_185 = arith.constant dense<0.000000e+00> : vector<8x128xf32>
    %568 = tpu.matmul %552, %450, %cst_185 {dimension_numbers = #tpu.dot_dimension_numbers<[1], [0], [0], [1], [0, 0, 1, 1], [], []>} : vector<8x32xf32>, vector<32x128xf32>, vector<8x128xf32> -> vector<8x128xf32>
    %569 = arith.addf %567, %568 : vector<8x128xf32>
    %cst_186 = arith.constant 5.000000e-01 : f32
    %570 = vector.broadcast %cst_186 : f32 to vector<8x128xf32>
    %571 = arith.mulf %565, %570 : vector<8x128xf32>
    %572 = arith.select %5, %565, %571 : vector<8x128xi1>, vector<8x128xf32>
    %573 = math.tanh %572 : vector<8x128xf32>
    %cst_187 = arith.constant 1.000000e+00 : f32
    %574 = vector.broadcast %cst_187 : f32 to vector<8x128xf32>
    %575 = arith.addf %573, %574 : vector<8x128xf32>
    %cst_188 = arith.constant 5.000000e-01 : f32
    %576 = vector.broadcast %cst_188 : f32 to vector<8x128xf32>
    %577 = arith.mulf %576, %575 : vector<8x128xf32>
    %578 = arith.select %5, %573, %577 : vector<8x128xi1>, vector<8x128xf32>
    %579 = vector.extract_strided_slice %578 {offsets = [0, 0], sizes = [8, 32], strides = [1, 1]} : vector<8x128xf32> to vector<8x32xf32>
    %580 = vector.extract_strided_slice %578 {offsets = [0, 32], sizes = [8, 32], strides = [1, 1]} : vector<8x128xf32> to vector<8x32xf32>
    %581 = vector.extract_strided_slice %578 {offsets = [0, 64], sizes = [8, 32], strides = [1, 1]} : vector<8x128xf32> to vector<8x32xf32>
    %582 = vector.extract_strided_slice %578 {offsets = [0, 96], sizes = [8, 32], strides = [1, 1]} : vector<8x128xf32> to vector<8x32xf32>
    %583 = arith.mulf %580, %532 : vector<8x32xf32>
    %584 = arith.mulf %579, %581 : vector<8x32xf32>
    %585 = arith.addf %583, %584 : vector<8x32xf32>
    %586 = math.tanh %585 : vector<8x32xf32>
    %587 = arith.mulf %582, %586 : vector<8x32xf32>
    %cst_189 = arith.constant 5.000000e-01 : f32
    %588 = vector.broadcast %cst_189 : f32 to vector<8x128xf32>
    %589 = arith.mulf %569, %588 : vector<8x128xf32>
    %590 = arith.select %5, %569, %589 : vector<8x128xi1>, vector<8x128xf32>
    %591 = math.tanh %590 : vector<8x128xf32>
    %cst_190 = arith.constant 1.000000e+00 : f32
    %592 = vector.broadcast %cst_190 : f32 to vector<8x128xf32>
    %593 = arith.addf %591, %592 : vector<8x128xf32>
    %cst_191 = arith.constant 5.000000e-01 : f32
    %594 = vector.broadcast %cst_191 : f32 to vector<8x128xf32>
    %595 = arith.mulf %594, %593 : vector<8x128xf32>
    %596 = arith.select %5, %591, %595 : vector<8x128xi1>, vector<8x128xf32>
    %597 = vector.extract_strided_slice %596 {offsets = [0, 0], sizes = [8, 32], strides = [1, 1]} : vector<8x128xf32> to vector<8x32xf32>
    %598 = vector.extract_strided_slice %596 {offsets = [0, 32], sizes = [8, 32], strides = [1, 1]} : vector<8x128xf32> to vector<8x32xf32>
    %599 = vector.extract_strided_slice %596 {offsets = [0, 64], sizes = [8, 32], strides = [1, 1]} : vector<8x128xf32> to vector<8x32xf32>
    %600 = vector.extract_strided_slice %596 {offsets = [0, 96], sizes = [8, 32], strides = [1, 1]} : vector<8x128xf32> to vector<8x32xf32>
    %601 = arith.mulf %598, %550 : vector<8x32xf32>
    %602 = arith.mulf %597, %599 : vector<8x32xf32>
    %603 = arith.addf %601, %602 : vector<8x32xf32>
    %604 = math.tanh %603 : vector<8x32xf32>
    %605 = arith.mulf %600, %604 : vector<8x32xf32>
    %606 = arith.index_cast %558 : i32 to index
    %c0_192 = arith.constant 0 : index
    %607 = vector.load %arg11[%606, %c0_192] : memref<64x32xf32, #tpu.memory_space<vmem>>, vector<8x32xf32>
    tpu.vector_store %arg11[%606, %c0_192], %587 {strides = array<i32>} : memref<64x32xf32, #tpu.memory_space<vmem>>, vector<8x32xf32>,
    %608 = arith.index_cast %561 : i32 to index
    %c0_193 = arith.constant 0 : index
    %609 = vector.load %arg12[%608, %c0_193] : memref<64x32xf32, #tpu.memory_space<vmem>>, vector<8x32xf32>
    tpu.vector_store %arg12[%608, %c0_193], %605 {strides = array<i32>} : memref<64x32xf32, #tpu.memory_space<vmem>>, vector<8x32xf32>,
    %c3_i32_194 = arith.constant 3 : i32
    %c8_i32_195 = arith.constant 8 : i32
    %610 = arith.muli %c3_i32_194, %c8_i32_195 : i32
    %611 = tpu.assume_multiple %610, 8 : i32
    %c7_i32_196 = arith.constant 7 : i32
    %612 = arith.subi %c7_i32_196, %c3_i32_194 : i32
    %c8_i32_197 = arith.constant 8 : i32
    %613 = arith.muli %612, %c8_i32_197 : i32
    %614 = tpu.assume_multiple %613, 8 : i32
    %615 = arith.index_cast %611 : i32 to index
    %c0_198 = arith.constant 0 : index
    %616 = vector.load %arg10[%615, %c0_198] : memref<64x256xf32, #tpu.memory_space<vmem>>, vector<8x128xf32>
    %cst_199 = arith.constant dense<0.000000e+00> : vector<8x128xf32>
    %617 = tpu.matmul %587, %449, %cst_199 {dimension_numbers = #tpu.dot_dimension_numbers<[1], [0], [0], [1], [0, 0, 1, 1], [], []>} : vector<8x32xf32>, vector<32x128xf32>, vector<8x128xf32> -> vector<8x128xf32>
    %618 = arith.addf %616, %617 : vector<8x128xf32>
    %619 = arith.index_cast %614 : i32 to index
    %c128_200 = arith.constant 128 : index
    %620 = vector.load %arg10[%619, %c128_200] : memref<64x256xf32, #tpu.memory_space<vmem>>, vector<8x128xf32>
    %cst_201 = arith.constant dense<0.000000e+00> : vector<8x128xf32>
    %621 = tpu.matmul %605, %450, %cst_201 {dimension_numbers = #tpu.dot_dimension_numbers<[1], [0], [0], [1], [0, 0, 1, 1], [], []>} : vector<8x32xf32>, vector<32x128xf32>, vector<8x128xf32> -> vector<8x128xf32>
    %622 = arith.addf %620, %621 : vector<8x128xf32>
    %cst_202 = arith.constant 5.000000e-01 : f32
    %623 = vector.broadcast %cst_202 : f32 to vector<8x128xf32>
    %624 = arith.mulf %618, %623 : vector<8x128xf32>
    %625 = arith.select %5, %618, %624 : vector<8x128xi1>, vector<8x128xf32>
    %626 = math.tanh %625 : vector<8x128xf32>
    %cst_203 = arith.constant 1.000000e+00 : f32
    %627 = vector.broadcast %cst_203 : f32 to vector<8x128xf32>
    %628 = arith.addf %626, %627 : vector<8x128xf32>
    %cst_204 = arith.constant 5.000000e-01 : f32
    %629 = vector.broadcast %cst_204 : f32 to vector<8x128xf32>
    %630 = arith.mulf %629, %628 : vector<8x128xf32>
    %631 = arith.select %5, %626, %630 : vector<8x128xi1>, vector<8x128xf32>
    %632 = vector.extract_strided_slice %631 {offsets = [0, 0], sizes = [8, 32], strides = [1, 1]} : vector<8x128xf32> to vector<8x32xf32>
    %633 = vector.extract_strided_slice %631 {offsets = [0, 32], sizes = [8, 32], strides = [1, 1]} : vector<8x128xf32> to vector<8x32xf32>
    %634 = vector.extract_strided_slice %631 {offsets = [0, 64], sizes = [8, 32], strides = [1, 1]} : vector<8x128xf32> to vector<8x32xf32>
    %635 = vector.extract_strided_slice %631 {offsets = [0, 96], sizes = [8, 32], strides = [1, 1]} : vector<8x128xf32> to vector<8x32xf32>
    %636 = arith.mulf %633, %585 : vector<8x32xf32>
    %637 = arith.mulf %632, %634 : vector<8x32xf32>
    %638 = arith.addf %636, %637 : vector<8x32xf32>
    %639 = math.tanh %638 : vector<8x32xf32>
    %640 = arith.mulf %635, %639 : vector<8x32xf32>
    %cst_205 = arith.constant 5.000000e-01 : f32
    %641 = vector.broadcast %cst_205 : f32 to vector<8x128xf32>
    %642 = arith.mulf %622, %641 : vector<8x128xf32>
    %643 = arith.select %5, %622, %642 : vector<8x128xi1>, vector<8x128xf32>
    %644 = math.tanh %643 : vector<8x128xf32>
    %cst_206 = arith.constant 1.000000e+00 : f32
    %645 = vector.broadcast %cst_206 : f32 to vector<8x128xf32>
    %646 = arith.addf %644, %645 : vector<8x128xf32>
    %cst_207 = arith.constant 5.000000e-01 : f32
    %647 = vector.broadcast %cst_207 : f32 to vector<8x128xf32>
    %648 = arith.mulf %647, %646 : vector<8x128xf32>
    %649 = arith.select %5, %644, %648 : vector<8x128xi1>, vector<8x128xf32>
    %650 = vector.extract_strided_slice %649 {offsets = [0, 0], sizes = [8, 32], strides = [1, 1]} : vector<8x128xf32> to vector<8x32xf32>
    %651 = vector.extract_strided_slice %649 {offsets = [0, 32], sizes = [8, 32], strides = [1, 1]} : vector<8x128xf32> to vector<8x32xf32>
    %652 = vector.extract_strided_slice %649 {offsets = [0, 64], sizes = [8, 32], strides = [1, 1]} : vector<8x128xf32> to vector<8x32xf32>
    %653 = vector.extract_strided_slice %649 {offsets = [0, 96], sizes = [8, 32], strides = [1, 1]} : vector<8x128xf32> to vector<8x32xf32>
    %654 = arith.mulf %651, %603 : vector<8x32xf32>
    %655 = arith.mulf %650, %652 : vector<8x32xf32>
    %656 = arith.addf %654, %655 : vector<8x32xf32>
    %657 = math.tanh %656 : vector<8x32xf32>
    %658 = arith.mulf %653, %657 : vector<8x32xf32>
    %659 = arith.index_cast %611 : i32 to index
    %c0_208 = arith.constant 0 : index
    %660 = vector.load %arg11[%659, %c0_208] : memref<64x32xf32, #tpu.memory_space<vmem>>, vector<8x32xf32>
    tpu.vector_store %arg11[%659, %c0_208], %640 {strides = array<i32>} : memref<64x32xf32, #tpu.memory_space<vmem>>, vector<8x32xf32>,
    %661 = arith.index_cast %614 : i32 to index
    %c0_209 = arith.constant 0 : index
    %662 = vector.load %arg12[%661, %c0_209] : memref<64x32xf32, #tpu.memory_space<vmem>>, vector<8x32xf32>
    tpu.vector_store %arg12[%661, %c0_209], %658 {strides = array<i32>} : memref<64x32xf32, #tpu.memory_space<vmem>>, vector<8x32xf32>,
    %c4_i32_210 = arith.constant 4 : i32
    %c8_i32_211 = arith.constant 8 : i32
    %663 = arith.muli %c4_i32_210, %c8_i32_211 : i32
    %664 = tpu.assume_multiple %663, 8 : i32
    %c7_i32_212 = arith.constant 7 : i32
    %665 = arith.subi %c7_i32_212, %c4_i32_210 : i32
    %c8_i32_213 = arith.constant 8 : i32
    %666 = arith.muli %665, %c8_i32_213 : i32
    %667 = tpu.assume_multiple %666, 8 : i32
    %668 = arith.index_cast %664 : i32 to index
    %c0_214 = arith.constant 0 : index
    %669 = vector.load %arg10[%668, %c0_214] : memref<64x256xf32, #tpu.memory_space<vmem>>, vector<8x128xf32>
    %cst_215 = arith.constant dense<0.000000e+00> : vector<8x128xf32>
    %670 = tpu.matmul %640, %449, %cst_215 {dimension_numbers = #tpu.dot_dimension_numbers<[1], [0], [0], [1], [0, 0, 1, 1], [], []>} : vector<8x32xf32>, vector<32x128xf32>, vector<8x128xf32> -> vector<8x128xf32>
    %671 = arith.addf %669, %670 : vector<8x128xf32>
    %672 = arith.index_cast %667 : i32 to index
    %c128_216 = arith.constant 128 : index
    %673 = vector.load %arg10[%672, %c128_216] : memref<64x256xf32, #tpu.memory_space<vmem>>, vector<8x128xf32>
    %cst_217 = arith.constant dense<0.000000e+00> : vector<8x128xf32>
    %674 = tpu.matmul %658, %450, %cst_217 {dimension_numbers = #tpu.dot_dimension_numbers<[1], [0], [0], [1], [0, 0, 1, 1], [], []>} : vector<8x32xf32>, vector<32x128xf32>, vector<8x128xf32> -> vector<8x128xf32>
    %675 = arith.addf %673, %674 : vector<8x128xf32>
    %cst_218 = arith.constant 5.000000e-01 : f32
    %676 = vector.broadcast %cst_218 : f32 to vector<8x128xf32>
    %677 = arith.mulf %671, %676 : vector<8x128xf32>
    %678 = arith.select %5, %671, %677 : vector<8x128xi1>, vector<8x128xf32>
    %679 = math.tanh %678 : vector<8x128xf32>
    %cst_219 = arith.constant 1.000000e+00 : f32
    %680 = vector.broadcast %cst_219 : f32 to vector<8x128xf32>
    %681 = arith.addf %679, %680 : vector<8x128xf32>
    %cst_220 = arith.constant 5.000000e-01 : f32
    %682 = vector.broadcast %cst_220 : f32 to vector<8x128xf32>
    %683 = arith.mulf %682, %681 : vector<8x128xf32>
    %684 = arith.select %5, %679, %683 : vector<8x128xi1>, vector<8x128xf32>
    %685 = vector.extract_strided_slice %684 {offsets = [0, 0], sizes = [8, 32], strides = [1, 1]} : vector<8x128xf32> to vector<8x32xf32>
    %686 = vector.extract_strided_slice %684 {offsets = [0, 32], sizes = [8, 32], strides = [1, 1]} : vector<8x128xf32> to vector<8x32xf32>
    %687 = vector.extract_strided_slice %684 {offsets = [0, 64], sizes = [8, 32], strides = [1, 1]} : vector<8x128xf32> to vector<8x32xf32>
    %688 = vector.extract_strided_slice %684 {offsets = [0, 96], sizes = [8, 32], strides = [1, 1]} : vector<8x128xf32> to vector<8x32xf32>
    %689 = arith.mulf %686, %638 : vector<8x32xf32>
    %690 = arith.mulf %685, %687 : vector<8x32xf32>
    %691 = arith.addf %689, %690 : vector<8x32xf32>
    %692 = math.tanh %691 : vector<8x32xf32>
    %693 = arith.mulf %688, %692 : vector<8x32xf32>
    %cst_221 = arith.constant 5.000000e-01 : f32
    %694 = vector.broadcast %cst_221 : f32 to vector<8x128xf32>
    %695 = arith.mulf %675, %694 : vector<8x128xf32>
    %696 = arith.select %5, %675, %695 : vector<8x128xi1>, vector<8x128xf32>
    %697 = math.tanh %696 : vector<8x128xf32>
    %cst_222 = arith.constant 1.000000e+00 : f32
    %698 = vector.broadcast %cst_222 : f32 to vector<8x128xf32>
    %699 = arith.addf %697, %698 : vector<8x128xf32>
    %cst_223 = arith.constant 5.000000e-01 : f32
    %700 = vector.broadcast %cst_223 : f32 to vector<8x128xf32>
    %701 = arith.mulf %700, %699 : vector<8x128xf32>
    %702 = arith.select %5, %697, %701 : vector<8x128xi1>, vector<8x128xf32>
    %703 = vector.extract_strided_slice %702 {offsets = [0, 0], sizes = [8, 32], strides = [1, 1]} : vector<8x128xf32> to vector<8x32xf32>
    %704 = vector.extract_strided_slice %702 {offsets = [0, 32], sizes = [8, 32], strides = [1, 1]} : vector<8x128xf32> to vector<8x32xf32>
    %705 = vector.extract_strided_slice %702 {offsets = [0, 64], sizes = [8, 32], strides = [1, 1]} : vector<8x128xf32> to vector<8x32xf32>
    %706 = vector.extract_strided_slice %702 {offsets = [0, 96], sizes = [8, 32], strides = [1, 1]} : vector<8x128xf32> to vector<8x32xf32>
    %707 = arith.mulf %704, %656 : vector<8x32xf32>
    %708 = arith.mulf %703, %705 : vector<8x32xf32>
    %709 = arith.addf %707, %708 : vector<8x32xf32>
    %710 = math.tanh %709 : vector<8x32xf32>
    %711 = arith.mulf %706, %710 : vector<8x32xf32>
    %712 = arith.index_cast %664 : i32 to index
    %c0_224 = arith.constant 0 : index
    %713 = vector.load %arg11[%712, %c0_224] : memref<64x32xf32, #tpu.memory_space<vmem>>, vector<8x32xf32>
    tpu.vector_store %arg11[%712, %c0_224], %693 {strides = array<i32>} : memref<64x32xf32, #tpu.memory_space<vmem>>, vector<8x32xf32>,
    %714 = arith.index_cast %667 : i32 to index
    %c0_225 = arith.constant 0 : index
    %715 = vector.load %arg12[%714, %c0_225] : memref<64x32xf32, #tpu.memory_space<vmem>>, vector<8x32xf32>
    tpu.vector_store %arg12[%714, %c0_225], %711 {strides = array<i32>} : memref<64x32xf32, #tpu.memory_space<vmem>>, vector<8x32xf32>,
    %c5_i32_226 = arith.constant 5 : i32
    %c8_i32_227 = arith.constant 8 : i32
    %716 = arith.muli %c5_i32_226, %c8_i32_227 : i32
    %717 = tpu.assume_multiple %716, 8 : i32
    %c7_i32_228 = arith.constant 7 : i32
    %718 = arith.subi %c7_i32_228, %c5_i32_226 : i32
    %c8_i32_229 = arith.constant 8 : i32
    %719 = arith.muli %718, %c8_i32_229 : i32
    %720 = tpu.assume_multiple %719, 8 : i32
    %721 = arith.index_cast %717 : i32 to index
    %c0_230 = arith.constant 0 : index
    %722 = vector.load %arg10[%721, %c0_230] : memref<64x256xf32, #tpu.memory_space<vmem>>, vector<8x128xf32>
    %cst_231 = arith.constant dense<0.000000e+00> : vector<8x128xf32>
    %723 = tpu.matmul %693, %449, %cst_231 {dimension_numbers = #tpu.dot_dimension_numbers<[1], [0], [0], [1], [0, 0, 1, 1], [], []>} : vector<8x32xf32>, vector<32x128xf32>, vector<8x128xf32> -> vector<8x128xf32>
    %724 = arith.addf %722, %723 : vector<8x128xf32>
    %725 = arith.index_cast %720 : i32 to index
    %c128_232 = arith.constant 128 : index
    %726 = vector.load %arg10[%725, %c128_232] : memref<64x256xf32, #tpu.memory_space<vmem>>, vector<8x128xf32>
    %cst_233 = arith.constant dense<0.000000e+00> : vector<8x128xf32>
    %727 = tpu.matmul %711, %450, %cst_233 {dimension_numbers = #tpu.dot_dimension_numbers<[1], [0], [0], [1], [0, 0, 1, 1], [], []>} : vector<8x32xf32>, vector<32x128xf32>, vector<8x128xf32> -> vector<8x128xf32>
    %728 = arith.addf %726, %727 : vector<8x128xf32>
    %cst_234 = arith.constant 5.000000e-01 : f32
    %729 = vector.broadcast %cst_234 : f32 to vector<8x128xf32>
    %730 = arith.mulf %724, %729 : vector<8x128xf32>
    %731 = arith.select %5, %724, %730 : vector<8x128xi1>, vector<8x128xf32>
    %732 = math.tanh %731 : vector<8x128xf32>
    %cst_235 = arith.constant 1.000000e+00 : f32
    %733 = vector.broadcast %cst_235 : f32 to vector<8x128xf32>
    %734 = arith.addf %732, %733 : vector<8x128xf32>
    %cst_236 = arith.constant 5.000000e-01 : f32
    %735 = vector.broadcast %cst_236 : f32 to vector<8x128xf32>
    %736 = arith.mulf %735, %734 : vector<8x128xf32>
    %737 = arith.select %5, %732, %736 : vector<8x128xi1>, vector<8x128xf32>
    %738 = vector.extract_strided_slice %737 {offsets = [0, 0], sizes = [8, 32], strides = [1, 1]} : vector<8x128xf32> to vector<8x32xf32>
    %739 = vector.extract_strided_slice %737 {offsets = [0, 32], sizes = [8, 32], strides = [1, 1]} : vector<8x128xf32> to vector<8x32xf32>
    %740 = vector.extract_strided_slice %737 {offsets = [0, 64], sizes = [8, 32], strides = [1, 1]} : vector<8x128xf32> to vector<8x32xf32>
    %741 = vector.extract_strided_slice %737 {offsets = [0, 96], sizes = [8, 32], strides = [1, 1]} : vector<8x128xf32> to vector<8x32xf32>
    %742 = arith.mulf %739, %691 : vector<8x32xf32>
    %743 = arith.mulf %738, %740 : vector<8x32xf32>
    %744 = arith.addf %742, %743 : vector<8x32xf32>
    %745 = math.tanh %744 : vector<8x32xf32>
    %746 = arith.mulf %741, %745 : vector<8x32xf32>
    %cst_237 = arith.constant 5.000000e-01 : f32
    %747 = vector.broadcast %cst_237 : f32 to vector<8x128xf32>
    %748 = arith.mulf %728, %747 : vector<8x128xf32>
    %749 = arith.select %5, %728, %748 : vector<8x128xi1>, vector<8x128xf32>
    %750 = math.tanh %749 : vector<8x128xf32>
    %cst_238 = arith.constant 1.000000e+00 : f32
    %751 = vector.broadcast %cst_238 : f32 to vector<8x128xf32>
    %752 = arith.addf %750, %751 : vector<8x128xf32>
    %cst_239 = arith.constant 5.000000e-01 : f32
    %753 = vector.broadcast %cst_239 : f32 to vector<8x128xf32>
    %754 = arith.mulf %753, %752 : vector<8x128xf32>
    %755 = arith.select %5, %750, %754 : vector<8x128xi1>, vector<8x128xf32>
    %756 = vector.extract_strided_slice %755 {offsets = [0, 0], sizes = [8, 32], strides = [1, 1]} : vector<8x128xf32> to vector<8x32xf32>
    %757 = vector.extract_strided_slice %755 {offsets = [0, 32], sizes = [8, 32], strides = [1, 1]} : vector<8x128xf32> to vector<8x32xf32>
    %758 = vector.extract_strided_slice %755 {offsets = [0, 64], sizes = [8, 32], strides = [1, 1]} : vector<8x128xf32> to vector<8x32xf32>
    %759 = vector.extract_strided_slice %755 {offsets = [0, 96], sizes = [8, 32], strides = [1, 1]} : vector<8x128xf32> to vector<8x32xf32>
    %760 = arith.mulf %757, %709 : vector<8x32xf32>
    %761 = arith.mulf %756, %758 : vector<8x32xf32>
    %762 = arith.addf %760, %761 : vector<8x32xf32>
    %763 = math.tanh %762 : vector<8x32xf32>
    %764 = arith.mulf %759, %763 : vector<8x32xf32>
    %765 = arith.index_cast %717 : i32 to index
    %c0_240 = arith.constant 0 : index
    %766 = vector.load %arg11[%765, %c0_240] : memref<64x32xf32, #tpu.memory_space<vmem>>, vector<8x32xf32>
    tpu.vector_store %arg11[%765, %c0_240], %746 {strides = array<i32>} : memref<64x32xf32, #tpu.memory_space<vmem>>, vector<8x32xf32>,
    %767 = arith.index_cast %720 : i32 to index
    %c0_241 = arith.constant 0 : index
    %768 = vector.load %arg12[%767, %c0_241] : memref<64x32xf32, #tpu.memory_space<vmem>>, vector<8x32xf32>
    tpu.vector_store %arg12[%767, %c0_241], %764 {strides = array<i32>} : memref<64x32xf32, #tpu.memory_space<vmem>>, vector<8x32xf32>,
    %c6_i32_242 = arith.constant 6 : i32
    %c8_i32_243 = arith.constant 8 : i32
    %769 = arith.muli %c6_i32_242, %c8_i32_243 : i32
    %770 = tpu.assume_multiple %769, 8 : i32
    %c7_i32_244 = arith.constant 7 : i32
    %771 = arith.subi %c7_i32_244, %c6_i32_242 : i32
    %c8_i32_245 = arith.constant 8 : i32
    %772 = arith.muli %771, %c8_i32_245 : i32
    %773 = tpu.assume_multiple %772, 8 : i32
    %774 = arith.index_cast %770 : i32 to index
    %c0_246 = arith.constant 0 : index
    %775 = vector.load %arg10[%774, %c0_246] : memref<64x256xf32, #tpu.memory_space<vmem>>, vector<8x128xf32>
    %cst_247 = arith.constant dense<0.000000e+00> : vector<8x128xf32>
    %776 = tpu.matmul %746, %449, %cst_247 {dimension_numbers = #tpu.dot_dimension_numbers<[1], [0], [0], [1], [0, 0, 1, 1], [], []>} : vector<8x32xf32>, vector<32x128xf32>, vector<8x128xf32> -> vector<8x128xf32>
    %777 = arith.addf %775, %776 : vector<8x128xf32>
    %778 = arith.index_cast %773 : i32 to index
    %c128_248 = arith.constant 128 : index
    %779 = vector.load %arg10[%778, %c128_248] : memref<64x256xf32, #tpu.memory_space<vmem>>, vector<8x128xf32>
    %cst_249 = arith.constant dense<0.000000e+00> : vector<8x128xf32>
    %780 = tpu.matmul %764, %450, %cst_249 {dimension_numbers = #tpu.dot_dimension_numbers<[1], [0], [0], [1], [0, 0, 1, 1], [], []>} : vector<8x32xf32>, vector<32x128xf32>, vector<8x128xf32> -> vector<8x128xf32>
    %781 = arith.addf %779, %780 : vector<8x128xf32>
    %cst_250 = arith.constant 5.000000e-01 : f32
    %782 = vector.broadcast %cst_250 : f32 to vector<8x128xf32>
    %783 = arith.mulf %777, %782 : vector<8x128xf32>
    %784 = arith.select %5, %777, %783 : vector<8x128xi1>, vector<8x128xf32>
    %785 = math.tanh %784 : vector<8x128xf32>
    %cst_251 = arith.constant 1.000000e+00 : f32
    %786 = vector.broadcast %cst_251 : f32 to vector<8x128xf32>
    %787 = arith.addf %785, %786 : vector<8x128xf32>
    %cst_252 = arith.constant 5.000000e-01 : f32
    %788 = vector.broadcast %cst_252 : f32 to vector<8x128xf32>
    %789 = arith.mulf %788, %787 : vector<8x128xf32>
    %790 = arith.select %5, %785, %789 : vector<8x128xi1>, vector<8x128xf32>
    %791 = vector.extract_strided_slice %790 {offsets = [0, 0], sizes = [8, 32], strides = [1, 1]} : vector<8x128xf32> to vector<8x32xf32>
    %792 = vector.extract_strided_slice %790 {offsets = [0, 32], sizes = [8, 32], strides = [1, 1]} : vector<8x128xf32> to vector<8x32xf32>
    %793 = vector.extract_strided_slice %790 {offsets = [0, 64], sizes = [8, 32], strides = [1, 1]} : vector<8x128xf32> to vector<8x32xf32>
    %794 = vector.extract_strided_slice %790 {offsets = [0, 96], sizes = [8, 32], strides = [1, 1]} : vector<8x128xf32> to vector<8x32xf32>
    %795 = arith.mulf %792, %744 : vector<8x32xf32>
    %796 = arith.mulf %791, %793 : vector<8x32xf32>
    %797 = arith.addf %795, %796 : vector<8x32xf32>
    %798 = math.tanh %797 : vector<8x32xf32>
    %799 = arith.mulf %794, %798 : vector<8x32xf32>
    %cst_253 = arith.constant 5.000000e-01 : f32
    %800 = vector.broadcast %cst_253 : f32 to vector<8x128xf32>
    %801 = arith.mulf %781, %800 : vector<8x128xf32>
    %802 = arith.select %5, %781, %801 : vector<8x128xi1>, vector<8x128xf32>
    %803 = math.tanh %802 : vector<8x128xf32>
    %cst_254 = arith.constant 1.000000e+00 : f32
    %804 = vector.broadcast %cst_254 : f32 to vector<8x128xf32>
    %805 = arith.addf %803, %804 : vector<8x128xf32>
    %cst_255 = arith.constant 5.000000e-01 : f32
    %806 = vector.broadcast %cst_255 : f32 to vector<8x128xf32>
    %807 = arith.mulf %806, %805 : vector<8x128xf32>
    %808 = arith.select %5, %803, %807 : vector<8x128xi1>, vector<8x128xf32>
    %809 = vector.extract_strided_slice %808 {offsets = [0, 0], sizes = [8, 32], strides = [1, 1]} : vector<8x128xf32> to vector<8x32xf32>
    %810 = vector.extract_strided_slice %808 {offsets = [0, 32], sizes = [8, 32], strides = [1, 1]} : vector<8x128xf32> to vector<8x32xf32>
    %811 = vector.extract_strided_slice %808 {offsets = [0, 64], sizes = [8, 32], strides = [1, 1]} : vector<8x128xf32> to vector<8x32xf32>
    %812 = vector.extract_strided_slice %808 {offsets = [0, 96], sizes = [8, 32], strides = [1, 1]} : vector<8x128xf32> to vector<8x32xf32>
    %813 = arith.mulf %810, %762 : vector<8x32xf32>
    %814 = arith.mulf %809, %811 : vector<8x32xf32>
    %815 = arith.addf %813, %814 : vector<8x32xf32>
    %816 = math.tanh %815 : vector<8x32xf32>
    %817 = arith.mulf %812, %816 : vector<8x32xf32>
    %818 = arith.index_cast %770 : i32 to index
    %c0_256 = arith.constant 0 : index
    %819 = vector.load %arg11[%818, %c0_256] : memref<64x32xf32, #tpu.memory_space<vmem>>, vector<8x32xf32>
    tpu.vector_store %arg11[%818, %c0_256], %799 {strides = array<i32>} : memref<64x32xf32, #tpu.memory_space<vmem>>, vector<8x32xf32>,
    %820 = arith.index_cast %773 : i32 to index
    %c0_257 = arith.constant 0 : index
    %821 = vector.load %arg12[%820, %c0_257] : memref<64x32xf32, #tpu.memory_space<vmem>>, vector<8x32xf32>
    tpu.vector_store %arg12[%820, %c0_257], %817 {strides = array<i32>} : memref<64x32xf32, #tpu.memory_space<vmem>>, vector<8x32xf32>,
    %c7_i32_258 = arith.constant 7 : i32
    %c8_i32_259 = arith.constant 8 : i32
    %822 = arith.muli %c7_i32_258, %c8_i32_259 : i32
    %823 = tpu.assume_multiple %822, 8 : i32
    %c7_i32_260 = arith.constant 7 : i32
    %824 = arith.subi %c7_i32_260, %c7_i32_258 : i32
    %c8_i32_261 = arith.constant 8 : i32
    %825 = arith.muli %824, %c8_i32_261 : i32
    %826 = tpu.assume_multiple %825, 8 : i32
    %827 = arith.index_cast %823 : i32 to index
    %c0_262 = arith.constant 0 : index
    %828 = vector.load %arg10[%827, %c0_262] : memref<64x256xf32, #tpu.memory_space<vmem>>, vector<8x128xf32>
    %cst_263 = arith.constant dense<0.000000e+00> : vector<8x128xf32>
    %829 = tpu.matmul %799, %449, %cst_263 {dimension_numbers = #tpu.dot_dimension_numbers<[1], [0], [0], [1], [0, 0, 1, 1], [], []>} : vector<8x32xf32>, vector<32x128xf32>, vector<8x128xf32> -> vector<8x128xf32>
    %830 = arith.addf %828, %829 : vector<8x128xf32>
    %831 = arith.index_cast %826 : i32 to index
    %c128_264 = arith.constant 128 : index
    %832 = vector.load %arg10[%831, %c128_264] : memref<64x256xf32, #tpu.memory_space<vmem>>, vector<8x128xf32>
    %cst_265 = arith.constant dense<0.000000e+00> : vector<8x128xf32>
    %833 = tpu.matmul %817, %450, %cst_265 {dimension_numbers = #tpu.dot_dimension_numbers<[1], [0], [0], [1], [0, 0, 1, 1], [], []>} : vector<8x32xf32>, vector<32x128xf32>, vector<8x128xf32> -> vector<8x128xf32>
    %834 = arith.addf %832, %833 : vector<8x128xf32>
    %cst_266 = arith.constant 5.000000e-01 : f32
    %835 = vector.broadcast %cst_266 : f32 to vector<8x128xf32>
    %836 = arith.mulf %830, %835 : vector<8x128xf32>
    %837 = arith.select %5, %830, %836 : vector<8x128xi1>, vector<8x128xf32>
    %838 = math.tanh %837 : vector<8x128xf32>
    %cst_267 = arith.constant 1.000000e+00 : f32
    %839 = vector.broadcast %cst_267 : f32 to vector<8x128xf32>
    %840 = arith.addf %838, %839 : vector<8x128xf32>
    %cst_268 = arith.constant 5.000000e-01 : f32
    %841 = vector.broadcast %cst_268 : f32 to vector<8x128xf32>
    %842 = arith.mulf %841, %840 : vector<8x128xf32>
    %843 = arith.select %5, %838, %842 : vector<8x128xi1>, vector<8x128xf32>
    %844 = vector.extract_strided_slice %843 {offsets = [0, 0], sizes = [8, 32], strides = [1, 1]} : vector<8x128xf32> to vector<8x32xf32>
    %845 = vector.extract_strided_slice %843 {offsets = [0, 32], sizes = [8, 32], strides = [1, 1]} : vector<8x128xf32> to vector<8x32xf32>
    %846 = vector.extract_strided_slice %843 {offsets = [0, 64], sizes = [8, 32], strides = [1, 1]} : vector<8x128xf32> to vector<8x32xf32>
    %847 = vector.extract_strided_slice %843 {offsets = [0, 96], sizes = [8, 32], strides = [1, 1]} : vector<8x128xf32> to vector<8x32xf32>
    %848 = arith.mulf %845, %797 : vector<8x32xf32>
    %849 = arith.mulf %844, %846 : vector<8x32xf32>
    %850 = arith.addf %848, %849 : vector<8x32xf32>
    %851 = math.tanh %850 : vector<8x32xf32>
    %852 = arith.mulf %847, %851 : vector<8x32xf32>
    %cst_269 = arith.constant 5.000000e-01 : f32
    %853 = vector.broadcast %cst_269 : f32 to vector<8x128xf32>
    %854 = arith.mulf %834, %853 : vector<8x128xf32>
    %855 = arith.select %5, %834, %854 : vector<8x128xi1>, vector<8x128xf32>
    %856 = math.tanh %855 : vector<8x128xf32>
    %cst_270 = arith.constant 1.000000e+00 : f32
    %857 = vector.broadcast %cst_270 : f32 to vector<8x128xf32>
    %858 = arith.addf %856, %857 : vector<8x128xf32>
    %cst_271 = arith.constant 5.000000e-01 : f32
    %859 = vector.broadcast %cst_271 : f32 to vector<8x128xf32>
    %860 = arith.mulf %859, %858 : vector<8x128xf32>
    %861 = arith.select %5, %856, %860 : vector<8x128xi1>, vector<8x128xf32>
    %862 = vector.extract_strided_slice %861 {offsets = [0, 0], sizes = [8, 32], strides = [1, 1]} : vector<8x128xf32> to vector<8x32xf32>
    %863 = vector.extract_strided_slice %861 {offsets = [0, 32], sizes = [8, 32], strides = [1, 1]} : vector<8x128xf32> to vector<8x32xf32>
    %864 = vector.extract_strided_slice %861 {offsets = [0, 64], sizes = [8, 32], strides = [1, 1]} : vector<8x128xf32> to vector<8x32xf32>
    %865 = vector.extract_strided_slice %861 {offsets = [0, 96], sizes = [8, 32], strides = [1, 1]} : vector<8x128xf32> to vector<8x32xf32>
    %866 = arith.mulf %863, %815 : vector<8x32xf32>
    %867 = arith.mulf %862, %864 : vector<8x32xf32>
    %868 = arith.addf %866, %867 : vector<8x32xf32>
    %869 = math.tanh %868 : vector<8x32xf32>
    %870 = arith.mulf %865, %869 : vector<8x32xf32>
    %871 = arith.index_cast %823 : i32 to index
    %c0_272 = arith.constant 0 : index
    %872 = vector.load %arg11[%871, %c0_272] : memref<64x32xf32, #tpu.memory_space<vmem>>, vector<8x32xf32>
    tpu.vector_store %arg11[%871, %c0_272], %852 {strides = array<i32>} : memref<64x32xf32, #tpu.memory_space<vmem>>, vector<8x32xf32>,
    %873 = arith.index_cast %826 : i32 to index
    %c0_273 = arith.constant 0 : index
    %874 = vector.load %arg12[%873, %c0_273] : memref<64x32xf32, #tpu.memory_space<vmem>>, vector<8x32xf32>
    tpu.vector_store %arg12[%873, %c0_273], %870 {strides = array<i32>} : memref<64x32xf32, #tpu.memory_space<vmem>>, vector<8x32xf32>,
    %c8_i32_274 = arith.constant 8 : i32
    %c0_275 = arith.constant 0 : index
    %c0_276 = arith.constant 0 : index
    %875 = vector.load %arg11[%c0_275, %c0_276] : memref<64x32xf32, #tpu.memory_space<vmem>>, vector<64x32xf32>
    %c0_277 = arith.constant 0 : index
    %c0_278 = arith.constant 0 : index
    %876 = vector.load %arg12[%c0_277, %c0_278] : memref<64x32xf32, #tpu.memory_space<vmem>>, vector<64x32xf32>
    %877 = tpu.concatenate %875, %876 in 1 : vector<64x32xf32>, vector<64x32xf32> -> vector<64x64xf32>
    %c0_279 = arith.constant 0 : index
    %c0_280 = arith.constant 0 : index
    %878 = vector.load %arg9[%c0_279, %c0_280] : memref<64x64xf32, #tpu.memory_space<vmem>>, vector<64x64xf32>
    tpu.vector_store %arg9[%c0_279, %c0_280], %877 {strides = array<i32>} : memref<64x64xf32, #tpu.memory_space<vmem>>, vector<64x64xf32>,
    return
  }
}

</mosaic_0001>

<llo_original>
// kernel: model_forward.3
$region0: #{model_forward.3}
  #allocation0 [shape = 'u32[]', space=smem, size = 0x4, offset = 0x4, fixed_abs, tag = 'smem constant byte address 0x4 - core index']
  #allocation1 [shape = 'u32[72,128]{1,0:T(1,128)}', space=vmem, size = 0x9000, scoped, tag = 'internal scratch']
  #allocation2 [shape = 'f32[1,1]{1,0:T(1,128)S(1)}', space=vmem, size = 0x200, scoped, tag = 'scoped memory for model_forward.3']
  %s0 = inlined_call_operand.vmem [shape: f32[8,64], index: 0, kind: input, shape index: {}]
  %s1 = inlined_call_operand.hbm [shape: f32[64,256], index: 1, kind: input, shape index: {}]
  %s2 = inlined_call_operand.vmem [shape: f32[1,256], index: 2, kind: input, shape index: {}]
  %s3 = inlined_call_operand.vmem [shape: f32[256,128], index: 3, kind: input, shape index: {}]
  %s4 = inlined_call_operand.vmem [shape: f32[1,128], index: 4, kind: input, shape index: {}]
  %s5 = inlined_call_operand.hbm [shape: f32[64,256], index: 5, kind: input, shape index: {}]
  %s6 = inlined_call_operand.vmem [shape: f32[1,256], index: 6, kind: input, shape index: {}]
  %s7 = inlined_call_operand.hbm [shape: f32[256,128], index: 7, kind: input, shape index: {}]
  %s8 = inlined_call_operand.vmem [shape: f32[1,128], index: 8, kind: input, shape index: {}]
  %s9 = inlined_call_operand.hbm [shape: f32[128,128], index: 9, kind: input, shape index: {}]
  %s10 = inlined_call_operand.vmem [shape: f32[1,128], index: 10, kind: input, shape index: {}]
  %s11 = inlined_call_operand.vmem [shape: f32[128,64], index: 11, kind: input, shape index: {}]
  %s12 = inlined_call_operand.vmem [shape: f32[1,64], index: 12, kind: input, shape index: {}]
  %s13 = inlined_call_operand.vmem [shape: f32[1,64], index: 13, kind: input, shape index: {}]
  %s14 = inlined_call_operand.<no memory space> [shape: f32[1,1], index: 14, kind: input, shape index: {}]
  %s15 = inlined_call_operand.hbm [shape: f32[8,8], index: 15, kind: output, shape index: {}]
  %s16 = sld [smem:[#allocation0]]
  $region86: #{model_forward.3} parent=0
    _
  %s18 = ssub.s32 1, %s16
  %s19 = scalar_select 0, %s18, %s16
  %v20 = vstv %s14
  %21 = vst [vmem:[#allocation2] sm:$0x1] %v20
  $region1: #{model_forward.3} parent=0
    #allocation3 [shape = 'u8[65536]{0}', space=vmem, size = 0x10000, scoped, tag = 'input window, operand 1, single buffered']
    #allocation4 [shape = 's32[1]{0}', space=sflag, size = 0x4, scoped, tag = 'scoped memory for model_forward.3']
    #allocation5 [shape = 's32[1]{0}', space=sflag, size = 0x4, scoped, tag = 'scoped memory for model_forward.3']
    #allocation6 [shape = 'u8[65536]{0}', space=vmem, size = 0x10000, scoped, tag = 'input window, operand 5, single buffered']
    #allocation7 [shape = 's32[1]{0}', space=sflag, size = 0x4, scoped, tag = 'scoped memory for model_forward.3']
    #allocation8 [shape = 'u8[131072]{0}', space=vmem, size = 0x20000, scoped, tag = 'input window, operand 7, single buffered']
    #allocation9 [shape = 'u8[65536]{0}', space=vmem, size = 0x10000, scoped, tag = 'input window, operand 9, single buffered']
    #allocation10 [shape = 's32[1]{0}', space=sflag, size = 0x4, scoped, tag = 'scoped memory for model_forward.3']
    #allocation11 [shape = 'u8[4096]{0}', space=vmem, size = 0x1000, scoped, tag = 'output window, operand 0, single buffered']
    %22 = vsyncpa [#allocation4], 0
    %23 = vsyncpa [#allocation7], 0
    %24 = vsyncpa [#allocation10], 0
    %25 = vsyncpa [#allocation5], 0
    // Predicated region
    $region2: #{model_forward.3} parent=1 // pred_check
      _
    $region3: #{model_forward.3} parent=1 // pred_check_branch
      %27 = sbr.rel (0) target = $region5
    $region4: #{model_forward.3} parent=1 // pred_region
      _
    $region5: #{model_forward.3} parent=1 // pred_fallthru
      _
    // Predicated region
    $region6: #{model_forward.3} parent=1 // pred_check
      _
    $region7: #{model_forward.3} parent=1 // pred_check_branch
      %29 = sbr.rel (0) target = $region9
    $region8: #{model_forward.3} parent=1 // pred_region
      %31 = vsyncadd [#allocation4], 0
      %s32 = sshll.u32 %s1, 4
      %s33 = int_to_ptr.hbm [resolvable:$true] %s32
      %s34 = sshll.u32 [#allocation3], 4
      %s35 = int_to_ptr.vmem [resolvable:$true] %s34
      %40 = dma.hbm_to_vmem [thread:$0]  %s33, 2048, %s35, [#allocation4], 256, 256, 16
    $region9: #{model_forward.3} parent=1 // pred_fallthru
      _
    // Predicated region
    $region10: #{model_forward.3} parent=1 // pred_check
      _
    $region11: #{model_forward.3} parent=1 // pred_check_branch
      %42 = sbr.rel (0) target = $region13
    $region12: #{model_forward.3} parent=1 // pred_region
      _
    $region13: #{model_forward.3} parent=1 // pred_fallthru
      _
    // Predicated region
    $region14: #{model_forward.3} parent=1 // pred_check
      _
    $region15: #{model_forward.3} parent=1 // pred_check_branch
      %44 = sbr.rel (0) target = $region17
    $region16: #{model_forward.3} parent=1 // pred_region
      _
    $region17: #{model_forward.3} parent=1 // pred_fallthru
      _
    // Predicated region
    $region18: #{model_forward.3} parent=1 // pred_check
      _
    $region19: #{model_forward.3} parent=1 // pred_check_branch
      %46 = sbr.rel (0) target = $region21
    $region20: #{model_forward.3} parent=1 // pred_region
      _
    $region21: #{model_forward.3} parent=1 // pred_fallthru
      _
    // Predicated region
    $region22: #{model_forward.3} parent=1 // pred_check
      _
    $region23: #{model_forward.3} parent=1 // pred_check_branch
      %48 = sbr.rel (0) target = $region25
    $region24: #{model_forward.3} parent=1 // pred_region
      %50 = vsyncadd [#allocation7], 0
      %s51 = sshll.u32 %s5, 4
      %s52 = int_to_ptr.hbm [resolvable:$true] %s51
      %s53 = sshll.u32 [#allocation6], 4
      %s54 = int_to_ptr.vmem [resolvable:$true] %s53
      %59 = dma.hbm_to_vmem [thread:$0]  %s52, 2048, %s54, [#allocation7], 256, 256, 16
    $region25: #{model_forward.3} parent=1 // pred_fallthru
      _
    // Predicated region
    $region26: #{model_forward.3} parent=1 // pred_check
      _
    $region27: #{model_forward.3} parent=1 // pred_check_branch
      %61 = sbr.rel (0) target = $region29
    $region28: #{model_forward.3} parent=1 // pred_region
      _
    $region29: #{model_forward.3} parent=1 // pred_fallthru
      _
    // Predicated region
    $region30: #{model_forward.3} parent=1 // pred_check
      _
    $region31: #{model_forward.3} parent=1 // pred_check_branch
      %63 = sbr.rel (0) target = $region33
    $region32: #{model_forward.3} parent=1 // pred_region
      %65 = vsyncadd [#allocation7], 0
      %s66 = sshll.u32 %s7, 4
      %s67 = int_to_ptr.hbm [resolvable:$true] %s66
      %s68 = sshll.u32 [#allocation8], 4
      %s69 = int_to_ptr.vmem [resolvable:$true] %s68
      %74 = dma.hbm_to_vmem [thread:$0]  %s67, 4096, %s69, [#allocation7], 128, 128, 8
    $region33: #{model_forward.3} parent=1 // pred_fallthru
      _
    // Predicated region
    $region34: #{model_forward.3} parent=1 // pred_check
      _
    $region35: #{model_forward.3} parent=1 // pred_check_branch
      %76 = sbr.rel (0) target = $region37
    $region36: #{model_forward.3} parent=1 // pred_region
      _
    $region37: #{model_forward.3} parent=1 // pred_fallthru
      _
    // Predicated region
    $region38: #{model_forward.3} parent=1 // pred_check
      _
    $region39: #{model_forward.3} parent=1 // pred_check_branch
      %78 = sbr.rel (0) target = $region41
    $region40: #{model_forward.3} parent=1 // pred_region
      %80 = vsyncadd [#allocation10], 0
      %s81 = sshll.u32 %s9, 4
      %s82 = int_to_ptr.hbm [resolvable:$true] %s81
      %s83 = sshll.u32 [#allocation9], 4
      %s84 = int_to_ptr.vmem [resolvable:$true] %s83
      %89 = dma.hbm_to_vmem [thread:$0]  %s82, 2048, %s84, [#allocation10], 128, 128, 8
    $region41: #{model_forward.3} parent=1 // pred_fallthru
      _
    // Predicated region
    $region42: #{model_forward.3} parent=1 // pred_check
      _
    $region43: #{model_forward.3} parent=1 // pred_check_branch
      %91 = sbr.rel (0) target = $region45
    $region44: #{model_forward.3} parent=1 // pred_region
      _
    $region45: #{model_forward.3} parent=1 // pred_fallthru
      _
    // Predicated region
    $region46: #{model_forward.3} parent=1 // pred_check
      _
    $region47: #{model_forward.3} parent=1 // pred_check_branch
      %93 = sbr.rel (0) target = $region49
    $region48: #{model_forward.3} parent=1 // pred_region
      _
    $region49: #{model_forward.3} parent=1 // pred_fallthru
      _
    // Predicated region
    $region50: #{model_forward.3} parent=1 // pred_check
      _
    $region51: #{model_forward.3} parent=1 // pred_check_branch
      %95 = sbr.rel (0) target = $region53
    $region52: #{model_forward.3} parent=1 // pred_region
      _
    $region53: #{model_forward.3} parent=1 // pred_fallthru
      _
    // Predicated region
    $region54: #{model_forward.3} parent=1 // pred_check
      _
    $region55: #{model_forward.3} parent=1 // pred_check_branch
      %97 = sbr.rel (0) target = $region57
    $region56: #{model_forward.3} parent=1 // pred_region
      _
    $region57: #{model_forward.3} parent=1 // pred_fallthru
      _
    // Predicated region
    $region58: #{model_forward.3} parent=1 // pred_check
      _
    $region59: #{model_forward.3} parent=1 // pred_check_branch
      %99 = sbr.rel (0) target = $region61
    $region60: #{model_forward.3} parent=1 // pred_region
      _
    $region61: #{model_forward.3} parent=1 // pred_fallthru
      _
    // Predicated region
    $region62: #{model_forward.3} parent=1 // pred_check
      _
    $region63: #{model_forward.3} parent=1 // pred_check_branch
      %101 = sbr.rel (0) target = $region65
    $region64: #{model_forward.3} parent=1 // pred_region
      %103 = dma.done [#allocation4], 2048
    $region65: #{model_forward.3} parent=1 // pred_fallthru
      _
    // Predicated region
    $region66: #{model_forward.3} parent=1 // pred_check
      _
    $region67: #{model_forward.3} parent=1 // pred_check_branch
      %105 = sbr.rel (0) target = $region69
    $region68: #{model_forward.3} parent=1 // pred_region
      %107 = dma.done [#allocation7], 2048
    $region69: #{model_forward.3} parent=1 // pred_fallthru
      _
    // Predicated region
    $region70: #{model_forward.3} parent=1 // pred_check
      _
    $region71: #{model_forward.3} parent=1 // pred_check_branch
      %109 = sbr.rel (0) target = $region73
    $region72: #{model_forward.3} parent=1 // pred_region
      %111 = dma.done [#allocation7], 4096
    $region73: #{model_forward.3} parent=1 // pred_fallthru
      _
    // Predicated region
    $region74: #{model_forward.3} parent=1 // pred_check
      _
    $region75: #{model_forward.3} parent=1 // pred_check_branch
      %113 = sbr.rel (0) target = $region77
    $region76: #{model_forward.3} parent=1 // pred_region
      %115 = dma.done [#allocation10], 2048
    $region77: #{model_forward.3} parent=1 // pred_fallthru
      _
    %v116 = vld [vmem:[%s0] sm:$0xff]
    %v117 = vld [vmem:[#allocation3] sm:$0xff]
    %v118 = vld [vmem:[#allocation3 + $0x8] sm:$0xff]
    %v119 = vld [vmem:[#allocation3 + $0x10] sm:$0xff]
    %v120 = vld [vmem:[#allocation3 + $0x18] sm:$0xff]
    %v121 = vld [vmem:[#allocation3 + $0x20] sm:$0xff]
    %v122 = vld [vmem:[#allocation3 + $0x28] sm:$0xff]
    %v123 = vld [vmem:[#allocation3 + $0x30] sm:$0xff]
    %v124 = vld [vmem:[#allocation3 + $0x38] sm:$0xff]
    %v125 = vld [vmem:[#allocation3 + $0x40] sm:$0xff]
    %v126 = vld [vmem:[#allocation3 + $0x48] sm:$0xff]
    %v127 = vld [vmem:[#allocation3 + $0x50] sm:$0xff]
    %v128 = vld [vmem:[#allocation3 + $0x58] sm:$0xff]
    %v129 = vld [vmem:[#allocation3 + $0x60] sm:$0xff]
    %v130 = vld [vmem:[#allocation3 + $0x68] sm:$0xff]
    %v131 = vld [vmem:[#allocation3 + $0x70] sm:$0xff]
    %v132 = vld [vmem:[#allocation3 + $0x78] sm:$0xff]
    %v133 = vld [vmem:[%s2] sm:$0x3]
    %v135 = vperm.slane %v133, 0
    %v136 = vperm.slane %v133, 1
    %vm139 = vcmask 523264
    %v141 = vsel %vm139, %v116, 0
    %143 = vmatpush.msra.mxu0 0.0
    %144 = vmatpush.msra.mxu0 0.0
    %145 = vmatpush.msra.mxu0 0.0
    %146 = vmatpush.msra.mxu0 0.0
    %147 = vmatpush.msra.mxu0 0.0
    %148 = vmatpush.msra.mxu0 0.0
    %149 = vmatpush.msra.mxu0 0.0
    %150 = vmatpush.msra.mxu0 0.0
    %151 = vmatpush.msra.mxu0 %v131
    %152 = vmatpush.msra.mxu0 %v129
    %153 = vmatpush.msra.mxu0 %v127
    %154 = vmatpush.msra.mxu0 %v125
    %155 = vmatpush.msra.mxu0 %v123
    %156 = vmatpush.msra.mxu0 %v121
    %157 = vmatpush.msra.mxu0 %v119
    %158 = vmatpush.msra.mxu0 %v117
    %159 = vmatmul.f32.gmra.mxu0 %v141
    %v160 = vpop.f32.mrf.mxu0
    %v161 = vadd.f32 %v135, %v160
    %162 = vdwg.mxu0
    %163 = vmatpush.msra.mxu0 0.0
    %164 = vmatpush.msra.mxu0 0.0
    %165 = vmatpush.msra.mxu0 0.0
    %166 = vmatpush.msra.mxu0 0.0
    %167 = vmatpush.msra.mxu0 0.0
    %168 = vmatpush.msra.mxu0 0.0
    %169 = vmatpush.msra.mxu0 0.0
    %170 = vmatpush.msra.mxu0 0.0
    %171 = vmatpush.msra.mxu0 %v132
    %172 = vmatpush.msra.mxu0 %v130
    %173 = vmatpush.msra.mxu0 %v128
    %174 = vmatpush.msra.mxu0 %v126
    %175 = vmatpush.msra.mxu0 %v124
    %176 = vmatpush.msra.mxu0 %v122
    %177 = vmatpush.msra.mxu0 %v120
    %178 = vmatpush.msra.mxu0 %v118
    %179 = vmatmul.f32.gmra.mxu0 %v141
    %v180 = vpop.f32.mrf.mxu0
    %v181 = vadd.f32 %v136, %v180
    %182 = vdwg.mxu0
    %v183 = vmax.f32 %v161, 0.0
    %v184 = vmax.f32 %v181, 0.0
    %v185 = vld [vmem:[%s3] sm:$0xff]
    %v186 = vld [vmem:[%s3 + $0x8] sm:$0xff]
    %v187 = vld [vmem:[%s3 + $0x10] sm:$0xff]
    %v188 = vld [vmem:[%s3 + $0x18] sm:$0xff]
    %v189 = vld [vmem:[%s3 + $0x20] sm:$0xff]
    %v190 = vld [vmem:[%s3 + $0x28] sm:$0xff]
    %v191 = vld [vmem:[%s3 + $0x30] sm:$0xff]
    %v192 = vld [vmem:[%s3 + $0x38] sm:$0xff]
    %v193 = vld [vmem:[%s3 + $0x40] sm:$0xff]
    %v194 = vld [vmem:[%s3 + $0x48] sm:$0xff]
    %v195 = vld [vmem:[%s3 + $0x50] sm:$0xff]
    %v196 = vld [vmem:[%s3 + $0x58] sm:$0xff]
    %v197 = vld [vmem:[%s3 + $0x60] sm:$0xff]
    %v198 = vld [vmem:[%s3 + $0x68] sm:$0xff]
    %v199 = vld [vmem:[%s3 + $0x70] sm:$0xff]
    %v200 = vld [vmem:[%s3 + $0x78] sm:$0xff]
    %v201 = vld [vmem:[%s3 + $0x80] sm:$0xff]
    %v202 = vld [vmem:[%s3 + $0x88] sm:$0xff]
    %v203 = vld [vmem:[%s3 + $0x90] sm:$0xff]
    %v204 = vld [vmem:[%s3 + $0x98] sm:$0xff]
    %v205 = vld [vmem:[%s3 + $0xa0] sm:$0xff]
    %v206 = vld [vmem:[%s3 + $0xa8] sm:$0xff]
    %v207 = vld [vmem:[%s3 + $0xb0] sm:$0xff]
    %v208 = vld [vmem:[%s3 + $0xb8] sm:$0xff]
    %v209 = vld [vmem:[%s3 + $0xc0] sm:$0xff]
    %v210 = vld [vmem:[%s3 + $0xc8] sm:$0xff]
    %v211 = vld [vmem:[%s3 + $0xd0] sm:$0xff]
    %v212 = vld [vmem:[%s3 + $0xd8] sm:$0xff]
    %v213 = vld [vmem:[%s3 + $0xe0] sm:$0xff]
    %v214 = vld [vmem:[%s3 + $0xe8] sm:$0xff]
    %v215 = vld [vmem:[%s3 + $0xf0] sm:$0xff]
    %v216 = vld [vmem:[%s3 + $0xf8] sm:$0xff]
    %v217 = vld [vmem:[%s4] sm:$0x1]
    %v219 = vperm.slane %v217, 0
    %221 = vmatpush.msra.mxu0 %v200
    %222 = vmatpush.msra.mxu0 %v199
    %223 = vmatpush.msra.mxu0 %v198
    %224 = vmatpush.msra.mxu0 %v197
    %225 = vmatpush.msra.mxu0 %v196
    %226 = vmatpush.msra.mxu0 %v195
    %227 = vmatpush.msra.mxu0 %v194
    %228 = vmatpush.msra.mxu0 %v193
    %229 = vmatpush.msra.mxu0 %v192
    %230 = vmatpush.msra.mxu0 %v191
    %231 = vmatpush.msra.mxu0 %v190
    %232 = vmatpush.msra.mxu0 %v189
    %233 = vmatpush.msra.mxu0 %v188
    %234 = vmatpush.msra.mxu0 %v187
    %235 = vmatpush.msra.mxu0 %v186
    %236 = vmatpush.msra.mxu0 %v185
    %237 = vmatmul.f32.gmra.mxu0 %v183
    %v238 = vpop.f32.mrf.mxu0
    %v239 = vadd.f32 %v219, %v238
    %240 = vdwg.mxu0
    %241 = vmatpush.msra.mxu0 %v216
    %242 = vmatpush.msra.mxu0 %v215
    %243 = vmatpush.msra.mxu0 %v214
    %244 = vmatpush.msra.mxu0 %v213
    %245 = vmatpush.msra.mxu0 %v212
    %246 = vmatpush.msra.mxu0 %v211
    %247 = vmatpush.msra.mxu0 %v210
    %248 = vmatpush.msra.mxu0 %v209
    %249 = vmatpush.msra.mxu0 %v208
    %250 = vmatpush.msra.mxu0 %v207
    %251 = vmatpush.msra.mxu0 %v206
    %252 = vmatpush.msra.mxu0 %v205
    %253 = vmatpush.msra.mxu0 %v204
    %254 = vmatpush.msra.mxu0 %v203
    %255 = vmatpush.msra.mxu0 %v202
    %256 = vmatpush.msra.mxu0 %v201
    %257 = vmatmul.f32.gmra.mxu0 %v184
    %v258 = vpop.f32.mrf.mxu0
    %v259 = vadd.f32 %v239, %v258
    %260 = vdwg.mxu0
    %v261 = vld [vmem:[#allocation6] sm:$0xff]
    %v262 = vld [vmem:[#allocation6 + $0x8] sm:$0xff]
    %v263 = vld [vmem:[#allocation6 + $0x10] sm:$0xff]
    %v264 = vld [vmem:[#allocation6 + $0x18] sm:$0xff]
    %v265 = vld [vmem:[#allocation6 + $0x20] sm:$0xff]
    %v266 = vld [vmem:[#allocation6 + $0x28] sm:$0xff]
    %v267 = vld [vmem:[#allocation6 + $0x30] sm:$0xff]
    %v268 = vld [vmem:[#allocation6 + $0x38] sm:$0xff]
    %v269 = vld [vmem:[#allocation6 + $0x40] sm:$0xff]
    %v270 = vld [vmem:[#allocation6 + $0x48] sm:$0xff]
    %v271 = vld [vmem:[#allocation6 + $0x50] sm:$0xff]
    %v272 = vld [vmem:[#allocation6 + $0x58] sm:$0xff]
    %v273 = vld [vmem:[#allocation6 + $0x60] sm:$0xff]
    %v274 = vld [vmem:[#allocation6 + $0x68] sm:$0xff]
    %v275 = vld [vmem:[#allocation6 + $0x70] sm:$0xff]
    %v276 = vld [vmem:[#allocation6 + $0x78] sm:$0xff]
    %v277 = vld [vmem:[%s6] sm:$0x3]
    %v279 = vperm.slane %v277, 0
    %v280 = vperm.slane %v277, 1
    %283 = vmatpush.msra.mxu0 0.0
    %284 = vmatpush.msra.mxu0 0.0
    %285 = vmatpush.msra.mxu0 0.0
    %286 = vmatpush.msra.mxu0 0.0
    %287 = vmatpush.msra.mxu0 0.0
    %288 = vmatpush.msra.mxu0 0.0
    %289 = vmatpush.msra.mxu0 0.0
    %290 = vmatpush.msra.mxu0 0.0
    %291 = vmatpush.msra.mxu0 %v275
    %292 = vmatpush.msra.mxu0 %v273
    %293 = vmatpush.msra.mxu0 %v271
    %294 = vmatpush.msra.mxu0 %v269
    %295 = vmatpush.msra.mxu0 %v267
    %296 = vmatpush.msra.mxu0 %v265
    %297 = vmatpush.msra.mxu0 %v263
    %298 = vmatpush.msra.mxu0 %v261
    %299 = vmatmul.f32.gmra.mxu0 %v141
    %v300 = vpop.f32.mrf.mxu0
    %v301 = vadd.f32 %v279, %v300
    %302 = vdwg.mxu0
    %303 = vmatpush.msra.mxu0 0.0
    %304 = vmatpush.msra.mxu0 0.0
    %305 = vmatpush.msra.mxu0 0.0
    %306 = vmatpush.msra.mxu0 0.0
    %307 = vmatpush.msra.mxu0 0.0
    %308 = vmatpush.msra.mxu0 0.0
    %309 = vmatpush.msra.mxu0 0.0
    %310 = vmatpush.msra.mxu0 0.0
    %311 = vmatpush.msra.mxu0 %v276
    %312 = vmatpush.msra.mxu0 %v274
    %313 = vmatpush.msra.mxu0 %v272
    %314 = vmatpush.msra.mxu0 %v270
    %315 = vmatpush.msra.mxu0 %v268
    %316 = vmatpush.msra.mxu0 %v266
    %317 = vmatpush.msra.mxu0 %v264
    %318 = vmatpush.msra.mxu0 %v262
    %319 = vmatmul.f32.gmra.mxu0 %v141
    %v320 = vpop.f32.mrf.mxu0
    %v321 = vadd.f32 %v280, %v320
    %322 = vdwg.mxu0
    %v323 = vmax.f32 %v301, 0.0
    %v324 = vmax.f32 %v321, 0.0
    %v325 = vld [vmem:[#allocation8] sm:$0xff]
    %v326 = vld [vmem:[#allocation8 + $0x8] sm:$0xff]
    %v327 = vld [vmem:[#allocation8 + $0x10] sm:$0xff]
    %v328 = vld [vmem:[#allocation8 + $0x18] sm:$0xff]
    %v329 = vld [vmem:[#allocation8 + $0x20] sm:$0xff]
    %v330 = vld [vmem:[#allocation8 + $0x28] sm:$0xff]
    %v331 = vld [vmem:[#allocation8 + $0x30] sm:$0xff]
    %v332 = vld [vmem:[#allocation8 + $0x38] sm:$0xff]
    %v333 = vld [vmem:[#allocation8 + $0x40] sm:$0xff]
    %v334 = vld [vmem:[#allocation8 + $0x48] sm:$0xff]
    %v335 = vld [vmem:[#allocation8 + $0x50] sm:$0xff]
    %v336 = vld [vmem:[#allocation8 + $0x58] sm:$0xff]
    %v337 = vld [vmem:[#allocation8 + $0x60] sm:$0xff]
    %v338 = vld [vmem:[#allocation8 + $0x68] sm:$0xff]
    %v339 = vld [vmem:[#allocation8 + $0x70] sm:$0xff]
    %v340 = vld [vmem:[#allocation8 + $0x78] sm:$0xff]
    %v341 = vld [vmem:[#allocation8 + $0x80] sm:$0xff]
    %v342 = vld [vmem:[#allocation8 + $0x88] sm:$0xff]
    %v343 = vld [vmem:[#allocation8 + $0x90] sm:$0xff]
    %v344 = vld [vmem:[#allocation8 + $0x98] sm:$0xff]
    %v345 = vld [vmem:[#allocation8 + $0xa0] sm:$0xff]
    %v346 = vld [vmem:[#allocation8 + $0xa8] sm:$0xff]
    %v347 = vld [vmem:[#allocation8 + $0xb0] sm:$0xff]
    %v348 = vld [vmem:[#allocation8 + $0xb8] sm:$0xff]
    %v349 = vld [vmem:[#allocation8 + $0xc0] sm:$0xff]
    %v350 = vld [vmem:[#allocation8 + $0xc8] sm:$0xff]
    %v351 = vld [vmem:[#allocation8 + $0xd0] sm:$0xff]
    %v352 = vld [vmem:[#allocation8 + $0xd8] sm:$0xff]
    %v353 = vld [vmem:[#allocation8 + $0xe0] sm:$0xff]
    %v354 = vld [vmem:[#allocation8 + $0xe8] sm:$0xff]
    %v355 = vld [vmem:[#allocation8 + $0xf0] sm:$0xff]
    %v356 = vld [vmem:[#allocation8 + $0xf8] sm:$0xff]
    %v357 = vld [vmem:[%s8] sm:$0x1]
    %v359 = vperm.slane %v357, 0
    %361 = vmatpush.msra.mxu0 %v340
    %362 = vmatpush.msra.mxu0 %v339
    %363 = vmatpush.msra.mxu0 %v338
    %364 = vmatpush.msra.mxu0 %v337
    %365 = vmatpush.msra.mxu0 %v336
    %366 = vmatpush.msra.mxu0 %v335
    %367 = vmatpush.msra.mxu0 %v334
    %368 = vmatpush.msra.mxu0 %v333
    %369 = vmatpush.msra.mxu0 %v332
    %370 = vmatpush.msra.mxu0 %v331
    %371 = vmatpush.msra.mxu0 %v330
    %372 = vmatpush.msra.mxu0 %v329
    %373 = vmatpush.msra.mxu0 %v328
    %374 = vmatpush.msra.mxu0 %v327
    %375 = vmatpush.msra.mxu0 %v326
    %376 = vmatpush.msra.mxu0 %v325
    %377 = vmatmul.f32.gmra.mxu0 %v323
    %v378 = vpop.f32.mrf.mxu0
    %v379 = vadd.f32 %v359, %v378
    %380 = vdwg.mxu0
    %381 = vmatpush.msra.mxu0 %v356
    %382 = vmatpush.msra.mxu0 %v355
    %383 = vmatpush.msra.mxu0 %v354
    %384 = vmatpush.msra.mxu0 %v353
    %385 = vmatpush.msra.mxu0 %v352
    %386 = vmatpush.msra.mxu0 %v351
    %387 = vmatpush.msra.mxu0 %v350
    %388 = vmatpush.msra.mxu0 %v349
    %389 = vmatpush.msra.mxu0 %v348
    %390 = vmatpush.msra.mxu0 %v347
    %391 = vmatpush.msra.mxu0 %v346
    %392 = vmatpush.msra.mxu0 %v345
    %393 = vmatpush.msra.mxu0 %v344
    %394 = vmatpush.msra.mxu0 %v343
    %395 = vmatpush.msra.mxu0 %v342
    %396 = vmatpush.msra.mxu0 %v341
    %397 = vmatmul.f32.gmra.mxu0 %v324
    %v398 = vpop.f32.mrf.mxu0
    %v399 = vadd.f32 %v379, %v398
    %400 = vdwg.mxu0
    %v401 = vlaneseq
    %v402 = vshrl.u32 %v401, 7
    %v403 = vadd.s32 %v402, 8
    %v404 = vadd.s32 %v402, 16
    %v405 = vadd.s32 %v402, 24
    %v406 = vadd.s32 %v402, 32
    %v407 = vadd.s32 %v402, 40
    %v408 = vadd.s32 %v402, 48
    %v409 = vadd.s32 %v402, 56
    %v410 = vlaneseq
    %v411 = vand.u32 %v410, 127
    %v412 = vmul.u32 %v411, 8
    %vm413 = vcmp.ge.s32.totalorder %v402, %v412
    %vm414 = vcmp.ge.s32.totalorder %v403, %v412
    %vm415 = vcmp.ge.s32.totalorder %v404, %v412
    %vm416 = vcmp.ge.s32.totalorder %v405, %v412
    %vm417 = vcmp.ge.s32.totalorder %v406, %v412
    %vm418 = vcmp.ge.s32.totalorder %v407, %v412
    %vm419 = vcmp.ge.s32.totalorder %v408, %v412
    %vm420 = vcmp.ge.s32.totalorder %v409, %v412
    %v421 = vadd.s32 %v411, 1
    %v422 = vmul.u32 %v421, 8
    %vm423 = vcmp.lt.s32.totalorder %v402, %v422
    %vm424 = vcmp.lt.s32.totalorder %v403, %v422
    %vm425 = vcmp.lt.s32.totalorder %v404, %v422
    %vm426 = vcmp.lt.s32.totalorder %v405, %v422
    %vm427 = vcmp.lt.s32.totalorder %v406, %v422
    %vm428 = vcmp.lt.s32.totalorder %v407, %v422
    %vm429 = vcmp.lt.s32.totalorder %v408, %v422
    %vm430 = vcmp.lt.s32.totalorder %v409, %v422
    %vm431 = vmand %vm413, %vm423
    %vm432 = vmand %vm414, %vm424
    %vm433 = vmand %vm415, %vm425
    %vm434 = vmand %vm416, %vm426
    %vm435 = vmand %vm417, %vm427
    %vm436 = vmand %vm418, %vm428
    %vm437 = vmand %vm419, %vm429
    %vm438 = vmand %vm420, %vm430
    %v439 = vsel %vm431, 1.0, 0.0
    %v440 = vsel %vm432, 1.0, 0.0
    %v441 = vsel %vm433, 1.0, 0.0
    %v442 = vsel %vm434, 1.0, 0.0
    %v443 = vsel %vm435, 1.0, 0.0
    %v444 = vsel %vm436, 1.0, 0.0
    %v445 = vsel %vm437, 1.0, 0.0
    %v446 = vsel %vm438, 1.0, 0.0
    %vm447 = vcmp.eq.s32.totalorder %v402, %v411
    %v448 = vsel %vm447, 1.0, 0.0
    %v449 = vmul.u32 %v402, 8
    %vm450 = vcmp.ge.s32.totalorder %v411, %v449
    %v451 = vadd.s32 %v402, 1
    %v452 = vmul.u32 %v451, 8
    %vm453 = vcmp.lt.s32.totalorder %v411, %v452
    %vm454 = vmand %vm450, %vm453
    %v455 = vsel %vm454, 1.0, 0.0
    %v456 = vld [vmem:[#allocation9] sm:$0xff]
    %v457 = vld [vmem:[#allocation9 + $0x8] sm:$0xff]
    %v458 = vld [vmem:[#allocation9 + $0x10] sm:$0xff]
    %v459 = vld [vmem:[#allocation9 + $0x18] sm:$0xff]
    %v460 = vld [vmem:[#allocation9 + $0x20] sm:$0xff]
    %v461 = vld [vmem:[#allocation9 + $0x28] sm:$0xff]
    %v462 = vld [vmem:[#allocation9 + $0x30] sm:$0xff]
    %v463 = vld [vmem:[#allocation9 + $0x38] sm:$0xff]
    %v464 = vld [vmem:[%s10] sm:$0x1]
    %v466 = vperm.slane %v464, 0
    %468 = vmatpush.msra.mxu0 0.0
    %469 = vmatpush.msra.mxu0 0.0
    %470 = vmatpush.msra.mxu0 0.0
    %471 = vmatpush.msra.mxu0 0.0
    %472 = vmatpush.msra.mxu0 0.0
    %473 = vmatpush.msra.mxu0 0.0
    %474 = vmatpush.msra.mxu0 0.0
    %475 = vmatpush.msra.mxu0 0.0
    %476 = vmatpush.msra.mxu0 %v463
    %477 = vmatpush.msra.mxu0 %v462
    %478 = vmatpush.msra.mxu0 %v461
    %479 = vmatpush.msra.mxu0 %v460
    %480 = vmatpush.msra.mxu0 %v459
    %481 = vmatpush.msra.mxu0 %v458
    %482 = vmatpush.msra.mxu0 %v457
    %483 = vmatpush.msra.mxu0 %v456
    %484 = vmatmul.f32.gmra.mxu0 %v141
    %v485 = vpop.f32.mrf.mxu0
    %v486 = vadd.f32 %v466, %v485
    %487 = vdwg.mxu0
    %v488 = vld [vmem:[#allocation9 + $0x40] sm:$0xff]
    %v489 = vld [vmem:[#allocation9 + $0x48] sm:$0xff]
    %v490 = vld [vmem:[#allocation9 + $0x50] sm:$0xff]
    %v491 = vld [vmem:[#allocation9 + $0x58] sm:$0xff]
    %v492 = vld [vmem:[#allocation9 + $0x60] sm:$0xff]
    %v493 = vld [vmem:[#allocation9 + $0x68] sm:$0xff]
    %v494 = vld [vmem:[#allocation9 + $0x70] sm:$0xff]
    %v495 = vld [vmem:[#allocation9 + $0x78] sm:$0xff]
    %496 = vmatpush.msra.mxu0 0.0
    %497 = vmatpush.msra.mxu0 0.0
    %498 = vmatpush.msra.mxu0 0.0
    %499 = vmatpush.msra.mxu0 0.0
    %500 = vmatpush.msra.mxu0 0.0
    %501 = vmatpush.msra.mxu0 0.0
    %502 = vmatpush.msra.mxu0 0.0
    %503 = vmatpush.msra.mxu0 0.0
    %504 = vmatpush.msra.mxu0 %v495
    %505 = vmatpush.msra.mxu0 %v494
    %506 = vmatpush.msra.mxu0 %v493
    %507 = vmatpush.msra.mxu0 %v492
    %508 = vmatpush.msra.mxu0 %v491
    %509 = vmatpush.msra.mxu0 %v490
    %510 = vmatpush.msra.mxu0 %v489
    %511 = vmatpush.msra.mxu0 %v488
    %512 = vmatmul.f32.gmra.mxu0 %v141
    %v513 = vpop.f32.mrf.mxu0
    %v514 = vadd.f32 0.0, %v513
    %515 = vdwg.mxu0
    %vm516 = vcmask 64512
    %v518 = vsel %vm516, %v448, 0
    %520 = vmatpush.msra.mxu0 0.0
    %521 = vmatpush.msra.mxu0 0.0
    %522 = vmatpush.msra.mxu0 0.0
    %523 = vmatpush.msra.mxu0 0.0
    %524 = vmatpush.msra.mxu0 0.0
    %525 = vmatpush.msra.mxu0 0.0
    %526 = vmatpush.msra.mxu0 0.0
    %527 = vmatpush.msra.mxu0 0.0
    %528 = vmatpush.msra.mxu0 0.0
    %529 = vmatpush.msra.mxu0 0.0
    %530 = vmatpush.msra.mxu0 0.0
    %531 = vmatpush.msra.mxu0 0.0
    %532 = vmatpush.msra.mxu0 0.0
    %533 = vmatpush.msra.mxu0 0.0
    %534 = vmatpush.msra.mxu0 0.0
    %535 = vmatpush.msra.mxu0 %v514
    %536 = vmatmul.f32.gmra.mxu0 %v518
    %v537 = vpop.f32.mrf.mxu0
    %v538 = vadd.f32 0.0, %v537
    %539 = vmatmul.f32.gmra.mxu0 %v518
    %v540 = vpop.f32.mrf.mxu0
    %v541 = vadd.f32 0.0, %v540
    %542 = vmatmul.f32.gmra.mxu0 %v518
    %v543 = vpop.f32.mrf.mxu0
    %v544 = vadd.f32 0.0, %v543
    %545 = vmatmul.f32.gmra.mxu0 %v518
    %v546 = vpop.f32.mrf.mxu0
    %v547 = vadd.f32 0.0, %v546
    %548 = vmatmul.f32.gmra.mxu0 %v518
    %v549 = vpop.f32.mrf.mxu0
    %v550 = vadd.f32 0.0, %v549
    %551 = vmatmul.f32.gmra.mxu0 %v518
    %v552 = vpop.f32.mrf.mxu0
    %v553 = vadd.f32 0.0, %v552
    %554 = vmatmul.f32.gmra.mxu0 %v518
    %v555 = vpop.f32.mrf.mxu0
    %v556 = vadd.f32 0.0, %v555
    %557 = vmatmul.f32.gmra.mxu0 %v518
    %v558 = vpop.f32.mrf.mxu0
    %v559 = vadd.f32 0.0, %v558
    %560 = vdwg.mxu0
    %v562 = vsel %vm516, %v439, 0
    %v565 = vsel %vm516, %v440, 0
    %v568 = vsel %vm516, %v441, 0
    %v571 = vsel %vm516, %v442, 0
    %v574 = vsel %vm516, %v443, 0
    %v577 = vsel %vm516, %v444, 0
    %v580 = vsel %vm516, %v445, 0
    %v583 = vsel %vm516, %v446, 0
    %585 = vmatpush.msra.mxu0 0.0
    %586 = vmatpush.msra.mxu0 0.0
    %587 = vmatpush.msra.mxu0 0.0
    %588 = vmatpush.msra.mxu0 0.0
    %589 = vmatpush.msra.mxu0 0.0
    %590 = vmatpush.msra.mxu0 0.0
    %591 = vmatpush.msra.mxu0 0.0
    %592 = vmatpush.msra.mxu0 0.0
    %593 = vmatpush.msra.mxu0 0.0
    %594 = vmatpush.msra.mxu0 0.0
    %595 = vmatpush.msra.mxu0 0.0
    %596 = vmatpush.msra.mxu0 0.0
    %597 = vmatpush.msra.mxu0 0.0
    %598 = vmatpush.msra.mxu0 0.0
    %599 = vmatpush.msra.mxu0 0.0
    %600 = vmatpush.msra.mxu0 %v486
    %601 = vmatmul.f32.gmra.mxu0 %v562
    %v602 = vpop.f32.mrf.mxu0
    %v603 = vadd.f32 %v538, %v602
    %604 = vmatmul.f32.gmra.mxu0 %v565
    %v605 = vpop.f32.mrf.mxu0
    %v606 = vadd.f32 %v541, %v605
    %607 = vmatmul.f32.gmra.mxu0 %v568
    %v608 = vpop.f32.mrf.mxu0
    %v609 = vadd.f32 %v544, %v608
    %610 = vmatmul.f32.gmra.mxu0 %v571
    %v611 = vpop.f32.mrf.mxu0
    %v612 = vadd.f32 %v547, %v611
    %613 = vmatmul.f32.gmra.mxu0 %v574
    %v614 = vpop.f32.mrf.mxu0
    %v615 = vadd.f32 %v550, %v614
    %616 = vmatmul.f32.gmra.mxu0 %v577
    %v617 = vpop.f32.mrf.mxu0
    %v618 = vadd.f32 %v553, %v617
    %619 = vmatmul.f32.gmra.mxu0 %v580
    %v620 = vpop.f32.mrf.mxu0
    %v621 = vadd.f32 %v556, %v620
    %622 = vmatmul.f32.gmra.mxu0 %v583
    %v623 = vpop.f32.mrf.mxu0
    %v624 = vadd.f32 %v559, %v623
    %625 = vdwg.mxu0
    %v626 = vmax.f32 %v603, 0.0
    %v627 = vmax.f32 %v606, 0.0
    %v628 = vmax.f32 %v609, 0.0
    %v629 = vmax.f32 %v612, 0.0
    %v630 = vmax.f32 %v615, 0.0
    %v631 = vmax.f32 %v618, 0.0
    %v632 = vmax.f32 %v621, 0.0
    %v633 = vmax.f32 %v624, 0.0
    %v634 = vld [vmem:[%s11] sm:$0xff]
    %v635 = vld [vmem:[%s11 + $0x8] sm:$0xff]
    %v636 = vld [vmem:[%s11 + $0x10] sm:$0xff]
    %v637 = vld [vmem:[%s11 + $0x18] sm:$0xff]
    %v638 = vld [vmem:[%s11 + $0x20] sm:$0xff]
    %v639 = vld [vmem:[%s11 + $0x28] sm:$0xff]
    %v640 = vld [vmem:[%s11 + $0x30] sm:$0xff]
    %v641 = vld [vmem:[%s11 + $0x38] sm:$0xff]
    %v642 = vld [vmem:[%s11 + $0x40] sm:$0xff]
    %v643 = vld [vmem:[%s11 + $0x48] sm:$0xff]
    %v644 = vld [vmem:[%s11 + $0x50] sm:$0xff]
    %v645 = vld [vmem:[%s11 + $0x58] sm:$0xff]
    %v646 = vld [vmem:[%s11 + $0x60] sm:$0xff]
    %v647 = vld [vmem:[%s11 + $0x68] sm:$0xff]
    %v648 = vld [vmem:[%s11 + $0x70] sm:$0xff]
    %v649 = vld [vmem:[%s11 + $0x78] sm:$0xff]
    %v650 = vld [vmem:[%s12] sm:$0x1]
    %v652 = vperm.slane %v650, 0
    %654 = vmatpush.msra.mxu0 %v649
    %655 = vmatpush.msra.mxu0 %v648
    %656 = vmatpush.msra.mxu0 %v647
    %657 = vmatpush.msra.mxu0 %v646
    %658 = vmatpush.msra.mxu0 %v645
    %659 = vmatpush.msra.mxu0 %v644
    %660 = vmatpush.msra.mxu0 %v643
    %661 = vmatpush.msra.mxu0 %v642
    %662 = vmatpush.msra.mxu0 %v641
    %663 = vmatpush.msra.mxu0 %v640
    %664 = vmatpush.msra.mxu0 %v639
    %665 = vmatpush.msra.mxu0 %v638
    %666 = vmatpush.msra.mxu0 %v637
    %667 = vmatpush.msra.mxu0 %v636
    %668 = vmatpush.msra.mxu0 %v635
    %669 = vmatpush.msra.mxu0 %v634
    %670 = vmatmul.f32.gmra.mxu0 %v626
    %v671 = vpop.f32.mrf.mxu0
    %v672 = vadd.f32 %v652, %v671
    %673 = vmatmul.f32.gmra.mxu0 %v627
    %v674 = vpop.f32.mrf.mxu0
    %v675 = vadd.f32 %v652, %v674
    %676 = vmatmul.f32.gmra.mxu0 %v628
    %v677 = vpop.f32.mrf.mxu0
    %v678 = vadd.f32 %v652, %v677
    %679 = vmatmul.f32.gmra.mxu0 %v629
    %v680 = vpop.f32.mrf.mxu0
    %v681 = vadd.f32 %v652, %v680
    %682 = vmatmul.f32.gmra.mxu0 %v630
    %v683 = vpop.f32.mrf.mxu0
    %v684 = vadd.f32 %v652, %v683
    %685 = vmatmul.f32.gmra.mxu0 %v631
    %v686 = vpop.f32.mrf.mxu0
    %v687 = vadd.f32 %v652, %v686
    %688 = vmatmul.f32.gmra.mxu0 %v632
    %v689 = vpop.f32.mrf.mxu0
    %v690 = vadd.f32 %v652, %v689
    %691 = vmatmul.f32.gmra.mxu0 %v633
    %v692 = vpop.f32.mrf.mxu0
    %v693 = vadd.f32 %v652, %v692
    %694 = vdwg.mxu0
    %v695 = vmax.f32 %v672, 0.0
    %v696 = vmax.f32 %v675, 0.0
    %v697 = vmax.f32 %v678, 0.0
    %v698 = vmax.f32 %v681, 0.0
    %v699 = vmax.f32 %v684, 0.0
    %v700 = vmax.f32 %v687, 0.0
    %v701 = vmax.f32 %v690, 0.0
    %v702 = vmax.f32 %v693, 0.0
    %v703 = vld [vmem:[%s13] sm:$0x1]
    %v705 = vperm.slane %v703, 0
    %v707 = vmul.f32 %v695, %v705
    %v708 = vmul.f32 %v696, %v705
    %v709 = vmul.f32 %v697, %v705
    %v710 = vmul.f32 %v698, %v705
    %v711 = vmul.f32 %v699, %v705
    %v712 = vmul.f32 %v700, %v705
    %v713 = vmul.f32 %v701, %v705
    %v714 = vmul.f32 %v702, %v705
    %v715 = vsel %vm139, %v707, 0.0
    %716 = vadd.xlane.f32.xlu0 %v715
    %v717 = vpop.xlane.xlu0 %716
    %v718 = vsel %vm139, %v708, 0.0
    %719 = vadd.xlane.f32.xlu0 %v718
    %v720 = vpop.xlane.xlu0 %719
    %v721 = vsel %vm139, %v709, 0.0
    %722 = vadd.xlane.f32.xlu0 %v721
    %v723 = vpop.xlane.xlu0 %722
    %v724 = vsel %vm139, %v710, 0.0
    %725 = vadd.xlane.f32.xlu0 %v724
    %v726 = vpop.xlane.xlu0 %725
    %v727 = vsel %vm139, %v711, 0.0
    %728 = vadd.xlane.f32.xlu0 %v727
    %v729 = vpop.xlane.xlu0 %728
    %v730 = vsel %vm139, %v712, 0.0
    %731 = vadd.xlane.f32.xlu0 %v730
    %v732 = vpop.xlane.xlu0 %731
    %v733 = vsel %vm139, %v713, 0.0
    %734 = vadd.xlane.f32.xlu0 %v733
    %v735 = vpop.xlane.xlu0 %734
    %v736 = vsel %vm139, %v714, 0.0
    %737 = vadd.xlane.f32.xlu0 %v736
    %v738 = vpop.xlane.xlu0 %737
    %v739 = vld [vmem:[#allocation2] sm:$0x1]
    %v741 = vperm.slane %v739, 0
    %v743 = vadd.f32 %v717, %v741
    %v744 = vadd.f32 %v720, %v741
    %v745 = vadd.f32 %v723, %v741
    %v746 = vadd.f32 %v726, %v741
    %v747 = vadd.f32 %v729, %v741
    %v748 = vadd.f32 %v732, %v741
    %v749 = vadd.f32 %v735, %v741
    %v750 = vadd.f32 %v738, %v741
    %752 = vset.pattern.permute.xlu0 0
    %753 = vperm.xlu0 %752, %v743
    %v754 = vpop.permute.xlu0 %753
    %757 = vset.pattern.permute.xlu0 0
    %758 = vperm.xlu0 %757, %v744
    %v759 = vpop.permute.xlu0 %758
    %762 = vset.pattern.permute.xlu0 0
    %763 = vperm.xlu0 %762, %v745
    %v764 = vpop.permute.xlu0 %763
    %767 = vset.pattern.permute.xlu0 0
    %768 = vperm.xlu0 %767, %v746
    %v769 = vpop.permute.xlu0 %768
    %772 = vset.pattern.permute.xlu0 0
    %773 = vperm.xlu0 %772, %v747
    %v774 = vpop.permute.xlu0 %773
    %777 = vset.pattern.permute.xlu0 0
    %778 = vperm.xlu0 %777, %v748
    %v779 = vpop.permute.xlu0 %778
    %782 = vset.pattern.permute.xlu0 0
    %783 = vperm.xlu0 %782, %v749
    %v784 = vpop.permute.xlu0 %783
    %787 = vset.pattern.permute.xlu0 0
    %788 = vperm.xlu0 %787, %v750
    %v789 = vpop.permute.xlu0 %788
    %v791 = vmul.f32 %v448, %v754
    %v792 = vmul.f32 %v448, %v759
    %v793 = vmul.f32 %v448, %v764
    %v794 = vmul.f32 %v448, %v769
    %v795 = vmul.f32 %v448, %v774
    %v796 = vmul.f32 %v448, %v779
    %v797 = vmul.f32 %v448, %v784
    %v798 = vmul.f32 %v448, %v789
    %799 = vmatpush.xpose.msra.mxu0 0.0
    %800 = vmatpush.xpose.msra.mxu0 0.0
    %801 = vmatpush.xpose.msra.mxu0 0.0
    %802 = vmatpush.xpose.msra.mxu0 0.0
    %803 = vmatpush.xpose.msra.mxu0 0.0
    %804 = vmatpush.xpose.msra.mxu0 0.0
    %805 = vmatpush.xpose.msra.mxu0 0.0
    %806 = vmatpush.xpose.msra.mxu0 0.0
    %807 = vmatpush.xpose.msra.mxu0 0.0
    %808 = vmatpush.xpose.msra.mxu0 0.0
    %809 = vmatpush.xpose.msra.mxu0 0.0
    %810 = vmatpush.xpose.msra.mxu0 0.0
    %811 = vmatpush.xpose.msra.mxu0 0.0
    %812 = vmatpush.xpose.msra.mxu0 0.0
    %813 = vmatpush.xpose.msra.mxu0 0.0
    %814 = vmatpush.xpose.msra.mxu0 %v399
    %815 = vmatmul.f32.gmra.mxu0 %v259
    %v816 = vpop.f32.mrf.mxu0
    %v817 = vadd.f32 0.0, %v816
    %818 = vdwg.mxu0
    %v820 = vsel %vm139, %v455, 0
    %822 = vmatpush.msra.mxu0 0.0
    %823 = vmatpush.msra.mxu0 0.0
    %824 = vmatpush.msra.mxu0 0.0
    %825 = vmatpush.msra.mxu0 0.0
    %826 = vmatpush.msra.mxu0 0.0
    %827 = vmatpush.msra.mxu0 0.0
    %828 = vmatpush.msra.mxu0 0.0
    %829 = vmatpush.msra.mxu0 0.0
    %830 = vmatpush.msra.mxu0 %v798
    %831 = vmatpush.msra.mxu0 %v797
    %832 = vmatpush.msra.mxu0 %v796
    %833 = vmatpush.msra.mxu0 %v795
    %834 = vmatpush.msra.mxu0 %v794
    %835 = vmatpush.msra.mxu0 %v793
    %836 = vmatpush.msra.mxu0 %v792
    %837 = vmatpush.msra.mxu0 %v791
    %838 = vmatmul.f32.gmra.mxu0 %v820
    %v839 = vpop.f32.mrf.mxu0
    %v840 = vadd.f32 %v817, %v839
    %841 = vdwg.mxu0
    %842 = vst.msk [vmem:[#allocation11] sm:$0xff] %vm516, %v840
    // Predicated region
    $region78: #{model_forward.3} parent=1 // pred_check
      _
    $region79: #{model_forward.3} parent=1 // pred_check_branch
      %844 = sbr.rel (0) target = $region81
    $region80: #{model_forward.3} parent=1 // pred_region
      %846 = vsyncadd [#allocation5], 0
      %s848 = sshll.u32 [#allocation11], 4
      %s849 = int_to_ptr.vmem [resolvable:$true] %s848
      %s850 = sshll.u32 %s15, 4
      %s851 = int_to_ptr.hbm [resolvable:$true] %s850
      %853 = dma.vmem_to_hbm [thread:$0]  %s849, 128, %s851, [#allocation5]
    $region81: #{model_forward.3} parent=1 // pred_fallthru
      _
    // Predicated region
    $region82: #{model_forward.3} parent=1 // pred_check
      _
    $region83: #{model_forward.3} parent=1 // pred_check_branch
      %855 = sbr.rel (0) target = $region85
    $region84: #{model_forward.3} parent=1 // pred_region
      %857 = dma.done [#allocation5], 128
    $region85: #{model_forward.3} parent=1 // pred_fallthru
      _
    %858 = vsyncpa [#allocation4], 1
    %859 = vsyncpa [#allocation7], 1
    %860 = vsyncpa [#allocation10], 1
    %861 = vsyncpa [#allocation5], 1

// kernel: model_forward.2
$region0: #{model_forward.2}
  #allocation0 [shape = 'u32[]', space=smem, size = 0x4, offset = 0x4, fixed_abs, tag = 'smem constant byte address 0x4 - core index']
  #allocation1 [shape = 'u32[72,128]{1,0:T(1,128)}', space=vmem, size = 0x9000, scoped, tag = 'internal scratch']
  #allocation2 [shape = 'f32[64,256]{1,0:T(8,128)}', space=vmem, size = 0x10000, scoped, tag = 'scratch operand']
  #allocation3 [shape = 'f32[64,32]{1,0:T(8,128)}', space=vmem, size = 0x8000, scoped, tag = 'scratch operand']
  #allocation4 [shape = 'f32[64,32]{1,0:T(8,128)}', space=vmem, size = 0x8000, scoped, tag = 'scratch operand']
  %s0 = inlined_call_operand.vmem [shape: f32[64,64], index: 0, kind: input, shape index: {}]
  %s1 = inlined_call_operand.vmem [shape: f32[64,256], index: 1, kind: input, shape index: {}]
  %s2 = inlined_call_operand.vmem [shape: f32[32,128], index: 2, kind: input, shape index: {}]
  %s3 = inlined_call_operand.vmem [shape: f32[32,128], index: 3, kind: input, shape index: {}]
  %s4 = inlined_call_operand.vmem [shape: f32[1,256], index: 4, kind: input, shape index: {}]
  %s5 = inlined_call_operand.hbm [shape: f32[64,256], index: 5, kind: input, shape index: {}]
  %s6 = inlined_call_operand.vmem [shape: f32[32,128], index: 6, kind: input, shape index: {}]
  %s7 = inlined_call_operand.vmem [shape: f32[32,128], index: 7, kind: input, shape index: {}]
  %s8 = inlined_call_operand.vmem [shape: f32[1,256], index: 8, kind: input, shape index: {}]
  %s9 = inlined_call_operand.vmem [shape: f32[64,64], index: 9, kind: output, shape index: {}]
  %s10 = sld [smem:[#allocation0]]
  $region50: #{model_forward.2} parent=0
    _
  %s12 = ssub.s32 1, %s10
  %s13 = scalar_select 0, %s12, %s10
  $region1: #{model_forward.2} parent=0
    #allocation5 [shape = 'u8[65536]{0}', space=vmem, size = 0x10000, scoped, tag = 'input window, operand 5, single buffered']
    #allocation6 [shape = 's32[1]{0}', space=sflag, size = 0x4, scoped, tag = 'scoped memory for model_forward.2']
    %14 = vsyncpa [#allocation6], 0
    // Predicated region
    $region2: #{model_forward.2} parent=1 // pred_check
      _
    $region3: #{model_forward.2} parent=1 // pred_check_branch
      %16 = sbr.rel (0) target = $region5
    $region4: #{model_forward.2} parent=1 // pred_region
      _
    $region5: #{model_forward.2} parent=1 // pred_fallthru
      _
    // Predicated region
    $region6: #{model_forward.2} parent=1 // pred_check
      _
    $region7: #{model_forward.2} parent=1 // pred_check_branch
      %18 = sbr.rel (0) target = $region9
    $region8: #{model_forward.2} parent=1 // pred_region
      _
    $region9: #{model_forward.2} parent=1 // pred_fallthru
      _
    // Predicated region
    $region10: #{model_forward.2} parent=1 // pred_check
      _
    $region11: #{model_forward.2} parent=1 // pred_check_branch
      %20 = sbr.rel (0) target = $region13
    $region12: #{model_forward.2} parent=1 // pred_region
      _
    $region13: #{model_forward.2} parent=1 // pred_fallthru
      _
    // Predicated region
    $region14: #{model_forward.2} parent=1 // pred_check
      _
    $region15: #{model_forward.2} parent=1 // pred_check_branch
      %22 = sbr.rel (0) target = $region17
    $region16: #{model_forward.2} parent=1 // pred_region
      _
    $region17: #{model_forward.2} parent=1 // pred_fallthru
      _
    // Predicated region
    $region18: #{model_forward.2} parent=1 // pred_check
      _
    $region19: #{model_forward.2} parent=1 // pred_check_branch
      %24 = sbr.rel (0) target = $region21
    $region20: #{model_forward.2} parent=1 // pred_region
      _
    $region21: #{model_forward.2} parent=1 // pred_fallthru
      _
    // Predicated region
    $region22: #{model_forward.2} parent=1 // pred_check
      _
    $region23: #{model_forward.2} parent=1 // pred_check_branch
      %26 = sbr.rel (0) target = $region25
    $region24: #{model_forward.2} parent=1 // pred_region
      %28 = vsyncadd [#allocation6], 0
      %s29 = sshll.u32 %s5, 4
      %s30 = int_to_ptr.hbm [resolvable:$true] %s29
      %s31 = sshll.u32 [#allocation5], 4
      %s32 = int_to_ptr.vmem [resolvable:$true] %s31
      %37 = dma.hbm_to_vmem [thread:$0]  %s30, 2048, %s32, [#allocation6], 256, 256, 16
    $region25: #{model_forward.2} parent=1 // pred_fallthru
      _
    // Predicated region
    $region26: #{model_forward.2} parent=1 // pred_check
      _
    $region27: #{model_forward.2} parent=1 // pred_check_branch
      %39 = sbr.rel (0) target = $region29
    $region28: #{model_forward.2} parent=1 // pred_region
      _
    $region29: #{model_forward.2} parent=1 // pred_fallthru
      _
    // Predicated region
    $region30: #{model_forward.2} parent=1 // pred_check
      _
    $region31: #{model_forward.2} parent=1 // pred_check_branch
      %41 = sbr.rel (0) target = $region33
    $region32: #{model_forward.2} parent=1 // pred_region
      _
    $region33: #{model_forward.2} parent=1 // pred_fallthru
      _
    // Predicated region
    $region34: #{model_forward.2} parent=1 // pred_check
      _
    $region35: #{model_forward.2} parent=1 // pred_check_branch
      %43 = sbr.rel (0) target = $region37
    $region36: #{model_forward.2} parent=1 // pred_region
      _
    $region37: #{model_forward.2} parent=1 // pred_fallthru
      _
    // Predicated region
    $region38: #{model_forward.2} parent=1 // pred_check
      _
    $region39: #{model_forward.2} parent=1 // pred_check_branch
      %45 = sbr.rel (0) target = $region41
    $region40: #{model_forward.2} parent=1 // pred_region
      %47 = dma.done [#allocation6], 2048
    $region41: #{model_forward.2} parent=1 // pred_fallthru
      _
    %v48 = vlaneseq
    %v49 = vand.u32 %v48, 127
    %vm50 = vcmp.ge.s32.totalorder %v49, 64
    %vm51 = vcmp.lt.s32.totalorder %v49, 96
    %vm52 = vmand %vm50, %vm51
    %v53 = vld [vmem:[%s0] sm:$0xff]
    %v54 = vld [vmem:[%s0 + $0x8] sm:$0xff]
    %v55 = vld [vmem:[%s0 + $0x10] sm:$0xff]
    %v56 = vld [vmem:[%s0 + $0x18] sm:$0xff]
    %v57 = vld [vmem:[%s0 + $0x20] sm:$0xff]
    %v58 = vld [vmem:[%s0 + $0x28] sm:$0xff]
    %v59 = vld [vmem:[%s0 + $0x30] sm:$0xff]
    %v60 = vld [vmem:[%s0 + $0x38] sm:$0xff]
    %v61 = vld [vmem:[%s1] sm:$0xff]
    %v62 = vld [vmem:[%s1 + $0x8] sm:$0xff]
    %v63 = vld [vmem:[%s1 + $0x10] sm:$0xff]
    %v64 = vld [vmem:[%s1 + $0x18] sm:$0xff]
    %v65 = vld [vmem:[%s1 + $0x20] sm:$0xff]
    %v66 = vld [vmem:[%s1 + $0x28] sm:$0xff]
    %v67 = vld [vmem:[%s1 + $0x30] sm:$0xff]
    %v68 = vld [vmem:[%s1 + $0x38] sm:$0xff]
    %v69 = vld [vmem:[%s1 + $0x40] sm:$0xff]
    %v70 = vld [vmem:[%s1 + $0x48] sm:$0xff]
    %v71 = vld [vmem:[%s1 + $0x50] sm:$0xff]
    %v72 = vld [vmem:[%s1 + $0x58] sm:$0xff]
    %v73 = vld [vmem:[%s1 + $0x60] sm:$0xff]
    %v74 = vld [vmem:[%s1 + $0x68] sm:$0xff]
    %v75 = vld [vmem:[%s1 + $0x70] sm:$0xff]
    %v76 = vld [vmem:[%s1 + $0x78] sm:$0xff]
    %v77 = vld [vmem:[%s4] sm:$0x3]
    %v79 = vperm.slane %v77, 0
    %v80 = vperm.slane %v77, 1
    %vm83 = vcmask 523264
    %v85 = vsel %vm83, %v53, 0
    %v88 = vsel %vm83, %v54, 0
    %v91 = vsel %vm83, %v55, 0
    %v94 = vsel %vm83, %v56, 0
    %v97 = vsel %vm83, %v57, 0
    %v100 = vsel %vm83, %v58, 0
    %v103 = vsel %vm83, %v59, 0
    %v106 = vsel %vm83, %v60, 0
    %108 = vmatpush.msra.mxu0 0.0
    %109 = vmatpush.msra.mxu0 0.0
    %110 = vmatpush.msra.mxu0 0.0
    %111 = vmatpush.msra.mxu0 0.0
    %112 = vmatpush.msra.mxu0 0.0
    %113 = vmatpush.msra.mxu0 0.0
    %114 = vmatpush.msra.mxu0 0.0
    %115 = vmatpush.msra.mxu0 0.0
    %116 = vmatpush.msra.mxu0 %v75
    %117 = vmatpush.msra.mxu0 %v73
    %118 = vmatpush.msra.mxu0 %v71
    %119 = vmatpush.msra.mxu0 %v69
    %120 = vmatpush.msra.mxu0 %v67
    %121 = vmatpush.msra.mxu0 %v65
    %122 = vmatpush.msra.mxu0 %v63
    %123 = vmatpush.msra.mxu0 %v61
    %124 = vmatmul.f32.gmra.mxu0 %v85
    %v125 = vpop.f32.mrf.mxu0
    %v126 = vadd.f32 %v79, %v125
    %127 = vmatmul.f32.gmra.mxu0 %v88
    %v128 = vpop.f32.mrf.mxu0
    %v129 = vadd.f32 %v79, %v128
    %130 = vmatmul.f32.gmra.mxu0 %v91
    %v131 = vpop.f32.mrf.mxu0
    %v132 = vadd.f32 %v79, %v131
    %133 = vmatmul.f32.gmra.mxu0 %v94
    %v134 = vpop.f32.mrf.mxu0
    %v135 = vadd.f32 %v79, %v134
    %136 = vmatmul.f32.gmra.mxu0 %v97
    %v137 = vpop.f32.mrf.mxu0
    %v138 = vadd.f32 %v79, %v137
    %139 = vmatmul.f32.gmra.mxu0 %v100
    %v140 = vpop.f32.mrf.mxu0
    %v141 = vadd.f32 %v79, %v140
    %142 = vmatmul.f32.gmra.mxu0 %v103
    %v143 = vpop.f32.mrf.mxu0
    %v144 = vadd.f32 %v79, %v143
    %145 = vmatmul.f32.gmra.mxu0 %v106
    %v146 = vpop.f32.mrf.mxu0
    %v147 = vadd.f32 %v79, %v146
    %148 = vdwg.mxu0
    %149 = vmatpush.msra.mxu0 0.0
    %150 = vmatpush.msra.mxu0 0.0
    %151 = vmatpush.msra.mxu0 0.0
    %152 = vmatpush.msra.mxu0 0.0
    %153 = vmatpush.msra.mxu0 0.0
    %154 = vmatpush.msra.mxu0 0.0
    %155 = vmatpush.msra.mxu0 0.0
    %156 = vmatpush.msra.mxu0 0.0
    %157 = vmatpush.msra.mxu0 %v76
    %158 = vmatpush.msra.mxu0 %v74
    %159 = vmatpush.msra.mxu0 %v72
    %160 = vmatpush.msra.mxu0 %v70
    %161 = vmatpush.msra.mxu0 %v68
    %162 = vmatpush.msra.mxu0 %v66
    %163 = vmatpush.msra.mxu0 %v64
    %164 = vmatpush.msra.mxu0 %v62
    %165 = vmatmul.f32.gmra.mxu0 %v85
    %v166 = vpop.f32.mrf.mxu0
    %v167 = vadd.f32 %v80, %v166
    %168 = vmatmul.f32.gmra.mxu0 %v88
    %v169 = vpop.f32.mrf.mxu0
    %v170 = vadd.f32 %v80, %v169
    %171 = vmatmul.f32.gmra.mxu0 %v91
    %v172 = vpop.f32.mrf.mxu0
    %v173 = vadd.f32 %v80, %v172
    %174 = vmatmul.f32.gmra.mxu0 %v94
    %v175 = vpop.f32.mrf.mxu0
    %v176 = vadd.f32 %v80, %v175
    %177 = vmatmul.f32.gmra.mxu0 %v97
    %v178 = vpop.f32.mrf.mxu0
    %v179 = vadd.f32 %v80, %v178
    %180 = vmatmul.f32.gmra.mxu0 %v100
    %v181 = vpop.f32.mrf.mxu0
    %v182 = vadd.f32 %v80, %v181
    %183 = vmatmul.f32.gmra.mxu0 %v103
    %v184 = vpop.f32.mrf.mxu0
    %v185 = vadd.f32 %v80, %v184
    %186 = vmatmul.f32.gmra.mxu0 %v106
    %v187 = vpop.f32.mrf.mxu0
    %v188 = vadd.f32 %v80, %v187
    %189 = vdwg.mxu0
    %190 = vst [vmem:[#allocation2] sm:$0xff] %v126
    %191 = vst [vmem:[#allocation2 + $0x8] sm:$0xff] %v167
    %192 = vst [vmem:[#allocation2 + $0x10] sm:$0xff] %v129
    %193 = vst [vmem:[#allocation2 + $0x18] sm:$0xff] %v170
    %194 = vst [vmem:[#allocation2 + $0x20] sm:$0xff] %v132
    %195 = vst [vmem:[#allocation2 + $0x28] sm:$0xff] %v173
    %196 = vst [vmem:[#allocation2 + $0x30] sm:$0xff] %v135
    %197 = vst [vmem:[#allocation2 + $0x38] sm:$0xff] %v176
    %198 = vst [vmem:[#allocation2 + $0x40] sm:$0xff] %v138
    %199 = vst [vmem:[#allocation2 + $0x48] sm:$0xff] %v179
    %200 = vst [vmem:[#allocation2 + $0x50] sm:$0xff] %v141
    %201 = vst [vmem:[#allocation2 + $0x58] sm:$0xff] %v182
    %202 = vst [vmem:[#allocation2 + $0x60] sm:$0xff] %v144
    %203 = vst [vmem:[#allocation2 + $0x68] sm:$0xff] %v185
    %204 = vst [vmem:[#allocation2 + $0x70] sm:$0xff] %v147
    %205 = vst [vmem:[#allocation2 + $0x78] sm:$0xff] %v188
    %v206 = vld [vmem:[%s2] sm:$0xff]
    %v207 = vld [vmem:[%s2 + $0x8] sm:$0xff]
    %v208 = vld [vmem:[%s2 + $0x10] sm:$0xff]
    %v209 = vld [vmem:[%s2 + $0x18] sm:$0xff]
    %v210 = vld [vmem:[%s3] sm:$0xff]
    %v211 = vld [vmem:[%s3 + $0x8] sm:$0xff]
    %v212 = vld [vmem:[%s3 + $0x10] sm:$0xff]
    %v213 = vld [vmem:[%s3 + $0x18] sm:$0xff]
    %s214 = smul.u32 0, 2
    %s215 = smul.addr %s214, 8
    %s216 = scalar_lea.vmem [#allocation2], %s215
    %v217 = vld [vmem:[%s216] sm:$0xff]
    %vm218 = vcmask 261120
    %v220 = vsel %vm218, 0.0, 0
    %222 = vmatpush.msra.mxu0 0.0
    %223 = vmatpush.msra.mxu0 0.0
    %224 = vmatpush.msra.mxu0 0.0
    %225 = vmatpush.msra.mxu0 0.0
    %226 = vmatpush.msra.mxu0 0.0
    %227 = vmatpush.msra.mxu0 0.0
    %228 = vmatpush.msra.mxu0 0.0
    %229 = vmatpush.msra.mxu0 0.0
    %230 = vmatpush.msra.mxu0 0.0
    %231 = vmatpush.msra.mxu0 0.0
    %232 = vmatpush.msra.mxu0 0.0
    %233 = vmatpush.msra.mxu0 0.0
    %234 = vmatpush.msra.mxu0 %v209
    %235 = vmatpush.msra.mxu0 %v208
    %236 = vmatpush.msra.mxu0 %v207
    %237 = vmatpush.msra.mxu0 %v206
    %238 = vmatmul.f32.gmra.mxu0 %v220
    %v239 = vpop.f32.mrf.mxu0
    %v240 = vadd.f32 0.0, %v239
    %241 = vdwg.mxu0
    %v242 = vadd.f32 %v217, %v240
    %s243 = smul.u32 7, 2
    %s244 = smul.addr %s243, 8
    %s245 = scalar_lea.vmem [#allocation2], %s244
    %v246 = vld [vmem:[%s245 + $0x8] sm:$0xff]
    %247 = vmatpush.msra.mxu0 0.0
    %248 = vmatpush.msra.mxu0 0.0
    %249 = vmatpush.msra.mxu0 0.0
    %250 = vmatpush.msra.mxu0 0.0
    %251 = vmatpush.msra.mxu0 0.0
    %252 = vmatpush.msra.mxu0 0.0
    %253 = vmatpush.msra.mxu0 0.0
    %254 = vmatpush.msra.mxu0 0.0
    %255 = vmatpush.msra.mxu0 0.0
    %256 = vmatpush.msra.mxu0 0.0
    %257 = vmatpush.msra.mxu0 0.0
    %258 = vmatpush.msra.mxu0 0.0
    %259 = vmatpush.msra.mxu0 %v213
    %260 = vmatpush.msra.mxu0 %v212
    %261 = vmatpush.msra.mxu0 %v211
    %262 = vmatpush.msra.mxu0 %v210
    %263 = vmatmul.f32.gmra.mxu0 %v220
    %v264 = vpop.f32.mrf.mxu0
    %v265 = vadd.f32 0.0, %v264
    %266 = vdwg.mxu0
    %v267 = vadd.f32 %v246, %v265
    %v268 = vmul.f32 %v242, 0.5
    %v269 = vsel %vm52, %v242, %v268
    %v270 = vtanh.pop %v269
    %v271 = vadd.f32 %v270, 1.0
    %v272 = vmul.f32 %v271, 0.5
    %v273 = vsel %vm52, %v270, %v272
    %v274 = vmul.f32 %v273, 0.0
    %276 = vrot.lane.b32.xlu0 %v273, 64
    %v277 = vpop.permute.xlu0 %276
    %v279 = vmul.f32 %v273, %v277
    %281 = vrot.lane.b32.xlu0 %v279, 32
    %v282 = vpop.permute.xlu0 %281
    %v284 = vadd.f32 %v274, %v282
    %v285 = vtanh.pop %v284
    %287 = vrot.lane.b32.xlu0 %v285, 64
    %v288 = vpop.permute.xlu0 %287
    %v290 = vmul.f32 %v273, %v288
    %v291 = vmul.f32 %v267, 0.5
    %v292 = vsel %vm52, %v267, %v291
    %v293 = vtanh.pop %v292
    %v294 = vadd.f32 %v293, 1.0
    %v295 = vmul.f32 %v294, 0.5
    %v296 = vsel %vm52, %v293, %v295
    %v297 = vmul.f32 %v296, 0.0
    %299 = vrot.lane.b32.xlu0 %v296, 64
    %v300 = vpop.permute.xlu0 %299
    %v302 = vmul.f32 %v296, %v300
    %304 = vrot.lane.b32.xlu0 %v302, 32
    %v305 = vpop.permute.xlu0 %304
    %v307 = vadd.f32 %v297, %v305
    %v308 = vtanh.pop %v307
    %310 = vrot.lane.b32.xlu0 %v308, 64
    %v311 = vpop.permute.xlu0 %310
    %v313 = vmul.f32 %v296, %v311
    %315 = vrot.lane.b32.xlu0 %v290, 32
    %v316 = vpop.permute.xlu0 %315
    %318 = vst.msk [vmem:[#allocation3] sm:$0xff] %vm218, %v316
    %320 = vrot.lane.b32.xlu0 %v313, 32
    %v321 = vpop.permute.xlu0 %320
    %s323 = scalar_lea.vmem [#allocation4], 56
    %324 = vst.msk [vmem:[%s323] sm:$0xff] %vm218, %v321
    %s325 = smul.u32 1, 2
    %s326 = smul.addr %s325, 8
    %s327 = scalar_lea.vmem [#allocation2], %s326
    %v328 = vld [vmem:[%s327] sm:$0xff]
    %v329 = vsel %vm218, %v316, 0
    %331 = vmatpush.msra.mxu0 0.0
    %332 = vmatpush.msra.mxu0 0.0
    %333 = vmatpush.msra.mxu0 0.0
    %334 = vmatpush.msra.mxu0 0.0
    %335 = vmatpush.msra.mxu0 0.0
    %336 = vmatpush.msra.mxu0 0.0
    %337 = vmatpush.msra.mxu0 0.0
    %338 = vmatpush.msra.mxu0 0.0
    %339 = vmatpush.msra.mxu0 0.0
    %340 = vmatpush.msra.mxu0 0.0
    %341 = vmatpush.msra.mxu0 0.0
    %342 = vmatpush.msra.mxu0 0.0
    %343 = vmatpush.msra.mxu0 %v209
    %344 = vmatpush.msra.mxu0 %v208
    %345 = vmatpush.msra.mxu0 %v207
    %346 = vmatpush.msra.mxu0 %v206
    %347 = vmatmul.f32.gmra.mxu0 %v329
    %v348 = vpop.f32.mrf.mxu0
    %v349 = vadd.f32 0.0, %v348
    %350 = vdwg.mxu0
    %v351 = vadd.f32 %v328, %v349
    %s352 = smul.u32 6, 2
    %s353 = smul.addr %s352, 8
    %s354 = scalar_lea.vmem [#allocation2], %s353
    %v355 = vld [vmem:[%s354 + $0x8] sm:$0xff]
    %v356 = vsel %vm218, %v321, 0
    %358 = vmatpush.msra.mxu0 0.0
    %359 = vmatpush.msra.mxu0 0.0
    %360 = vmatpush.msra.mxu0 0.0
    %361 = vmatpush.msra.mxu0 0.0
    %362 = vmatpush.msra.mxu0 0.0
    %363 = vmatpush.msra.mxu0 0.0
    %364 = vmatpush.msra.mxu0 0.0
    %365 = vmatpush.msra.mxu0 0.0
    %366 = vmatpush.msra.mxu0 0.0
    %367 = vmatpush.msra.mxu0 0.0
    %368 = vmatpush.msra.mxu0 0.0
    %369 = vmatpush.msra.mxu0 0.0
    %370 = vmatpush.msra.mxu0 %v213
    %371 = vmatpush.msra.mxu0 %v212
    %372 = vmatpush.msra.mxu0 %v211
    %373 = vmatpush.msra.mxu0 %v210
    %374 = vmatmul.f32.gmra.mxu0 %v356
    %v375 = vpop.f32.mrf.mxu0
    %v376 = vadd.f32 0.0, %v375
    %377 = vdwg.mxu0
    %v378 = vadd.f32 %v355, %v376
    %v379 = vmul.f32 %v351, 0.5
    %v380 = vsel %vm52, %v351, %v379
    %v381 = vtanh.pop %v380
    %v382 = vadd.f32 %v381, 1.0
    %v383 = vmul.f32 %v382, 0.5
    %v384 = vsel %vm52, %v381, %v383
    %v385 = vmul.f32 %v384, %v284
    %387 = vrot.lane.b32.xlu0 %v384, 64
    %v388 = vpop.permute.xlu0 %387
    %v390 = vmul.f32 %v384, %v388
    %392 = vrot.lane.b32.xlu0 %v390, 32
    %v393 = vpop.permute.xlu0 %392
    %v395 = vadd.f32 %v385, %v393
    %v396 = vtanh.pop %v395
    %398 = vrot.lane.b32.xlu0 %v396, 64
    %v399 = vpop.permute.xlu0 %398
    %v401 = vmul.f32 %v384, %v399
    %v402 = vmul.f32 %v378, 0.5
    %v403 = vsel %vm52, %v378, %v402
    %v404 = vtanh.pop %v403
    %v405 = vadd.f32 %v404, 1.0
    %v406 = vmul.f32 %v405, 0.5
    %v407 = vsel %vm52, %v404, %v406
    %v408 = vmul.f32 %v407, %v307
    %410 = vrot.lane.b32.xlu0 %v407, 64
    %v411 = vpop.permute.xlu0 %410
    %v413 = vmul.f32 %v407, %v411
    %415 = vrot.lane.b32.xlu0 %v413, 32
    %v416 = vpop.permute.xlu0 %415
    %v418 = vadd.f32 %v408, %v416
    %v419 = vtanh.pop %v418
    %421 = vrot.lane.b32.xlu0 %v419, 64
    %v422 = vpop.permute.xlu0 %421
    %v424 = vmul.f32 %v407, %v422
    %426 = vrot.lane.b32.xlu0 %v401, 32
    %v427 = vpop.permute.xlu0 %426
    %s429 = scalar_lea.vmem [#allocation3], 8
    %430 = vst.msk [vmem:[%s429] sm:$0xff] %vm218, %v427
    %432 = vrot.lane.b32.xlu0 %v424, 32
    %v433 = vpop.permute.xlu0 %432
    %s435 = scalar_lea.vmem [#allocation4], 48
    %436 = vst.msk [vmem:[%s435] sm:$0xff] %vm218, %v433
    %s437 = smul.u32 2, 2
    %s438 = smul.addr %s437, 8
    %s439 = scalar_lea.vmem [#allocation2], %s438
    %v440 = vld [vmem:[%s439] sm:$0xff]
    %v441 = vsel %vm218, %v427, 0
    %443 = vmatpush.msra.mxu0 0.0
    %444 = vmatpush.msra.mxu0 0.0
    %445 = vmatpush.msra.mxu0 0.0
    %446 = vmatpush.msra.mxu0 0.0
    %447 = vmatpush.msra.mxu0 0.0
    %448 = vmatpush.msra.mxu0 0.0
    %449 = vmatpush.msra.mxu0 0.0
    %450 = vmatpush.msra.mxu0 0.0
    %451 = vmatpush.msra.mxu0 0.0
    %452 = vmatpush.msra.mxu0 0.0
    %453 = vmatpush.msra.mxu0 0.0
    %454 = vmatpush.msra.mxu0 0.0
    %455 = vmatpush.msra.mxu0 %v209
    %456 = vmatpush.msra.mxu0 %v208
    %457 = vmatpush.msra.mxu0 %v207
    %458 = vmatpush.msra.mxu0 %v206
    %459 = vmatmul.f32.gmra.mxu0 %v441
    %v460 = vpop.f32.mrf.mxu0
    %v461 = vadd.f32 0.0, %v460
    %462 = vdwg.mxu0
    %v463 = vadd.f32 %v440, %v461
    %s464 = smul.u32 5, 2
    %s465 = smul.addr %s464, 8
    %s466 = scalar_lea.vmem [#allocation2], %s465
    %v467 = vld [vmem:[%s466 + $0x8] sm:$0xff]
    %v468 = vsel %vm218, %v433, 0
    %470 = vmatpush.msra.mxu0 0.0
    %471 = vmatpush.msra.mxu0 0.0
    %472 = vmatpush.msra.mxu0 0.0
    %473 = vmatpush.msra.mxu0 0.0
    %474 = vmatpush.msra.mxu0 0.0
    %475 = vmatpush.msra.mxu0 0.0
    %476 = vmatpush.msra.mxu0 0.0
    %477 = vmatpush.msra.mxu0 0.0
    %478 = vmatpush.msra.mxu0 0.0
    %479 = vmatpush.msra.mxu0 0.0
    %480 = vmatpush.msra.mxu0 0.0
    %481 = vmatpush.msra.mxu0 0.0
    %482 = vmatpush.msra.mxu0 %v213
    %483 = vmatpush.msra.mxu0 %v212
    %484 = vmatpush.msra.mxu0 %v211
    %485 = vmatpush.msra.mxu0 %v210
    %486 = vmatmul.f32.gmra.mxu0 %v468
    %v487 = vpop.f32.mrf.mxu0
    %v488 = vadd.f32 0.0, %v487
    %489 = vdwg.mxu0
    %v490 = vadd.f32 %v467, %v488
    %v491 = vmul.f32 %v463, 0.5
    %v492 = vsel %vm52, %v463, %v491
    %v493 = vtanh.pop %v492
    %v494 = vadd.f32 %v493, 1.0
    %v495 = vmul.f32 %v494, 0.5
    %v496 = vsel %vm52, %v493, %v495
    %v497 = vmul.f32 %v496, %v395
    %499 = vrot.lane.b32.xlu0 %v496, 64
    %v500 = vpop.permute.xlu0 %499
    %v502 = vmul.f32 %v496, %v500
    %504 = vrot.lane.b32.xlu0 %v502, 32
    %v505 = vpop.permute.xlu0 %504
    %v507 = vadd.f32 %v497, %v505
    %v508 = vtanh.pop %v507
    %510 = vrot.lane.b32.xlu0 %v508, 64
    %v511 = vpop.permute.xlu0 %510
    %v513 = vmul.f32 %v496, %v511
    %v514 = vmul.f32 %v490, 0.5
    %v515 = vsel %vm52, %v490, %v514
    %v516 = vtanh.pop %v515
    %v517 = vadd.f32 %v516, 1.0
    %v518 = vmul.f32 %v517, 0.5
    %v519 = vsel %vm52, %v516, %v518
    %v520 = vmul.f32 %v519, %v418
    %522 = vrot.lane.b32.xlu0 %v519, 64
    %v523 = vpop.permute.xlu0 %522
    %v525 = vmul.f32 %v519, %v523
    %527 = vrot.lane.b32.xlu0 %v525, 32
    %v528 = vpop.permute.xlu0 %527
    %v530 = vadd.f32 %v520, %v528
    %v531 = vtanh.pop %v530
    %533 = vrot.lane.b32.xlu0 %v531, 64
    %v534 = vpop.permute.xlu0 %533
    %v536 = vmul.f32 %v519, %v534
    %538 = vrot.lane.b32.xlu0 %v513, 32
    %v539 = vpop.permute.xlu0 %538
    %s541 = scalar_lea.vmem [#allocation3], 16
    %542 = vst.msk [vmem:[%s541] sm:$0xff] %vm218, %v539
    %544 = vrot.lane.b32.xlu0 %v536, 32
    %v545 = vpop.permute.xlu0 %544
    %s547 = scalar_lea.vmem [#allocation4], 40
    %548 = vst.msk [vmem:[%s547] sm:$0xff] %vm218, %v545
    %s549 = smul.u32 3, 2
    %s550 = smul.addr %s549, 8
    %s551 = scalar_lea.vmem [#allocation2], %s550
    %v552 = vld [vmem:[%s551] sm:$0xff]
    %v553 = vsel %vm218, %v539, 0
    %555 = vmatpush.msra.mxu0 0.0
    %556 = vmatpush.msra.mxu0 0.0
    %557 = vmatpush.msra.mxu0 0.0
    %558 = vmatpush.msra.mxu0 0.0
    %559 = vmatpush.msra.mxu0 0.0
    %560 = vmatpush.msra.mxu0 0.0
    %561 = vmatpush.msra.mxu0 0.0
    %562 = vmatpush.msra.mxu0 0.0
    %563 = vmatpush.msra.mxu0 0.0
    %564 = vmatpush.msra.mxu0 0.0
    %565 = vmatpush.msra.mxu0 0.0
    %566 = vmatpush.msra.mxu0 0.0
    %567 = vmatpush.msra.mxu0 %v209
    %568 = vmatpush.msra.mxu0 %v208
    %569 = vmatpush.msra.mxu0 %v207
    %570 = vmatpush.msra.mxu0 %v206
    %571 = vmatmul.f32.gmra.mxu0 %v553
    %v572 = vpop.f32.mrf.mxu0
    %v573 = vadd.f32 0.0, %v572
    %574 = vdwg.mxu0
    %v575 = vadd.f32 %v552, %v573
    %s576 = smul.u32 4, 2
    %s577 = smul.addr %s576, 8
    %s578 = scalar_lea.vmem [#allocation2], %s577
    %v579 = vld [vmem:[%s578 + $0x8] sm:$0xff]
    %v580 = vsel %vm218, %v545, 0
    %582 = vmatpush.msra.mxu0 0.0
    %583 = vmatpush.msra.mxu0 0.0
    %584 = vmatpush.msra.mxu0 0.0
    %585 = vmatpush.msra.mxu0 0.0
    %586 = vmatpush.msra.mxu0 0.0
    %587 = vmatpush.msra.mxu0 0.0
    %588 = vmatpush.msra.mxu0 0.0
    %589 = vmatpush.msra.mxu0 0.0
    %590 = vmatpush.msra.mxu0 0.0
    %591 = vmatpush.msra.mxu0 0.0
    %592 = vmatpush.msra.mxu0 0.0
    %593 = vmatpush.msra.mxu0 0.0
    %594 = vmatpush.msra.mxu0 %v213
    %595 = vmatpush.msra.mxu0 %v212
    %596 = vmatpush.msra.mxu0 %v211
    %597 = vmatpush.msra.mxu0 %v210
    %598 = vmatmul.f32.gmra.mxu0 %v580
    %v599 = vpop.f32.mrf.mxu0
    %v600 = vadd.f32 0.0, %v599
    %601 = vdwg.mxu0
    %v602 = vadd.f32 %v579, %v600
    %v603 = vmul.f32 %v575, 0.5
    %v604 = vsel %vm52, %v575, %v603
    %v605 = vtanh.pop %v604
    %v606 = vadd.f32 %v605, 1.0
    %v607 = vmul.f32 %v606, 0.5
    %v608 = vsel %vm52, %v605, %v607
    %v609 = vmul.f32 %v608, %v507
    %611 = vrot.lane.b32.xlu0 %v608, 64
    %v612 = vpop.permute.xlu0 %611
    %v614 = vmul.f32 %v608, %v612
    %616 = vrot.lane.b32.xlu0 %v614, 32
    %v617 = vpop.permute.xlu0 %616
    %v619 = vadd.f32 %v609, %v617
    %v620 = vtanh.pop %v619
    %622 = vrot.lane.b32.xlu0 %v620, 64
    %v623 = vpop.permute.xlu0 %622
    %v625 = vmul.f32 %v608, %v623
    %v626 = vmul.f32 %v602, 0.5
    %v627 = vsel %vm52, %v602, %v626
    %v628 = vtanh.pop %v627
    %v629 = vadd.f32 %v628, 1.0
    %v630 = vmul.f32 %v629, 0.5
    %v631 = vsel %vm52, %v628, %v630
    %v632 = vmul.f32 %v631, %v530
    %634 = vrot.lane.b32.xlu0 %v631, 64
    %v635 = vpop.permute.xlu0 %634
    %v637 = vmul.f32 %v631, %v635
    %639 = vrot.lane.b32.xlu0 %v637, 32
    %v640 = vpop.permute.xlu0 %639
    %v642 = vadd.f32 %v632, %v640
    %v643 = vtanh.pop %v642
    %645 = vrot.lane.b32.xlu0 %v643, 64
    %v646 = vpop.permute.xlu0 %645
    %v648 = vmul.f32 %v631, %v646
    %650 = vrot.lane.b32.xlu0 %v625, 32
    %v651 = vpop.permute.xlu0 %650
    %s653 = scalar_lea.vmem [#allocation3], 24
    %654 = vst.msk [vmem:[%s653] sm:$0xff] %vm218, %v651
    %656 = vrot.lane.b32.xlu0 %v648, 32
    %v657 = vpop.permute.xlu0 %656
    %s659 = scalar_lea.vmem [#allocation4], 32
    %660 = vst.msk [vmem:[%s659] sm:$0xff] %vm218, %v657
    %v661 = vld [vmem:[%s578] sm:$0xff]
    %v662 = vsel %vm218, %v651, 0
    %664 = vmatpush.msra.mxu0 0.0
    %665 = vmatpush.msra.mxu0 0.0
    %666 = vmatpush.msra.mxu0 0.0
    %667 = vmatpush.msra.mxu0 0.0
    %668 = vmatpush.msra.mxu0 0.0
    %669 = vmatpush.msra.mxu0 0.0
    %670 = vmatpush.msra.mxu0 0.0
    %671 = vmatpush.msra.mxu0 0.0
    %672 = vmatpush.msra.mxu0 0.0
    %673 = vmatpush.msra.mxu0 0.0
    %674 = vmatpush.msra.mxu0 0.0
    %675 = vmatpush.msra.mxu0 0.0
    %676 = vmatpush.msra.mxu0 %v209
    %677 = vmatpush.msra.mxu0 %v208
    %678 = vmatpush.msra.mxu0 %v207
    %679 = vmatpush.msra.mxu0 %v206
    %680 = vmatmul.f32.gmra.mxu0 %v662
    %v681 = vpop.f32.mrf.mxu0
    %v682 = vadd.f32 0.0, %v681
    %683 = vdwg.mxu0
    %v684 = vadd.f32 %v661, %v682
    %v685 = vld [vmem:[%s551 + $0x8] sm:$0xff]
    %v686 = vsel %vm218, %v657, 0
    %688 = vmatpush.msra.mxu0 0.0
    %689 = vmatpush.msra.mxu0 0.0
    %690 = vmatpush.msra.mxu0 0.0
    %691 = vmatpush.msra.mxu0 0.0
    %692 = vmatpush.msra.mxu0 0.0
    %693 = vmatpush.msra.mxu0 0.0
    %694 = vmatpush.msra.mxu0 0.0
    %695 = vmatpush.msra.mxu0 0.0
    %696 = vmatpush.msra.mxu0 0.0
    %697 = vmatpush.msra.mxu0 0.0
    %698 = vmatpush.msra.mxu0 0.0
    %699 = vmatpush.msra.mxu0 0.0
    %700 = vmatpush.msra.mxu0 %v213
    %701 = vmatpush.msra.mxu0 %v212
    %702 = vmatpush.msra.mxu0 %v211
    %703 = vmatpush.msra.mxu0 %v210
    %704 = vmatmul.f32.gmra.mxu0 %v686
    %v705 = vpop.f32.mrf.mxu0
    %v706 = vadd.f32 0.0, %v705
    %707 = vdwg.mxu0
    %v708 = vadd.f32 %v685, %v706
    %v709 = vmul.f32 %v684, 0.5
    %v710 = vsel %vm52, %v684, %v709
    %v711 = vtanh.pop %v710
    %v712 = vadd.f32 %v711, 1.0
    %v713 = vmul.f32 %v712, 0.5
    %v714 = vsel %vm52, %v711, %v713
    %v715 = vmul.f32 %v714, %v619
    %717 = vrot.lane.b32.xlu0 %v714, 64
    %v718 = vpop.permute.xlu0 %717
    %v720 = vmul.f32 %v714, %v718
    %722 = vrot.lane.b32.xlu0 %v720, 32
    %v723 = vpop.permute.xlu0 %722
    %v725 = vadd.f32 %v715, %v723
    %v726 = vtanh.pop %v725
    %728 = vrot.lane.b32.xlu0 %v726, 64
    %v729 = vpop.permute.xlu0 %728
    %v731 = vmul.f32 %v714, %v729
    %v732 = vmul.f32 %v708, 0.5
    %v733 = vsel %vm52, %v708, %v732
    %v734 = vtanh.pop %v733
    %v735 = vadd.f32 %v734, 1.0
    %v736 = vmul.f32 %v735, 0.5
    %v737 = vsel %vm52, %v734, %v736
    %v738 = vmul.f32 %v737, %v642
    %740 = vrot.lane.b32.xlu0 %v737, 64
    %v741 = vpop.permute.xlu0 %740
    %v743 = vmul.f32 %v737, %v741
    %745 = vrot.lane.b32.xlu0 %v743, 32
    %v746 = vpop.permute.xlu0 %745
    %v748 = vadd.f32 %v738, %v746
    %v749 = vtanh.pop %v748
    %751 = vrot.lane.b32.xlu0 %v749, 64
    %v752 = vpop.permute.xlu0 %751
    %v754 = vmul.f32 %v737, %v752
    %756 = vrot.lane.b32.xlu0 %v731, 32
    %v757 = vpop.permute.xlu0 %756
    %s759 = scalar_lea.vmem [#allocation3], 32
    %760 = vst.msk [vmem:[%s759] sm:$0xff] %vm218, %v757
    %762 = vrot.lane.b32.xlu0 %v754, 32
    %v763 = vpop.permute.xlu0 %762
    %s765 = scalar_lea.vmem [#allocation4], 24
    %766 = vst.msk [vmem:[%s765] sm:$0xff] %vm218, %v763
    %v767 = vld [vmem:[%s466] sm:$0xff]
    %v768 = vsel %vm218, %v757, 0
    %770 = vmatpush.msra.mxu0 0.0
    %771 = vmatpush.msra.mxu0 0.0
    %772 = vmatpush.msra.mxu0 0.0
    %773 = vmatpush.msra.mxu0 0.0
    %774 = vmatpush.msra.mxu0 0.0
    %775 = vmatpush.msra.mxu0 0.0
    %776 = vmatpush.msra.mxu0 0.0
    %777 = vmatpush.msra.mxu0 0.0
    %778 = vmatpush.msra.mxu0 0.0
    %779 = vmatpush.msra.mxu0 0.0
    %780 = vmatpush.msra.mxu0 0.0
    %781 = vmatpush.msra.mxu0 0.0
    %782 = vmatpush.msra.mxu0 %v209
    %783 = vmatpush.msra.mxu0 %v208
    %784 = vmatpush.msra.mxu0 %v207
    %785 = vmatpush.msra.mxu0 %v206
    %786 = vmatmul.f32.gmra.mxu0 %v768
    %v787 = vpop.f32.mrf.mxu0
    %v788 = vadd.f32 0.0, %v787
    %789 = vdwg.mxu0
    %v790 = vadd.f32 %v767, %v788
    %v791 = vld [vmem:[%s439 + $0x8] sm:$0xff]
    %v792 = vsel %vm218, %v763, 0
    %794 = vmatpush.msra.mxu0 0.0
    %795 = vmatpush.msra.mxu0 0.0
    %796 = vmatpush.msra.mxu0 0.0
    %797 = vmatpush.msra.mxu0 0.0
    %798 = vmatpush.msra.mxu0 0.0
    %799 = vmatpush.msra.mxu0 0.0
    %800 = vmatpush.msra.mxu0 0.0
    %801 = vmatpush.msra.mxu0 0.0
    %802 = vmatpush.msra.mxu0 0.0
    %803 = vmatpush.msra.mxu0 0.0
    %804 = vmatpush.msra.mxu0 0.0
    %805 = vmatpush.msra.mxu0 0.0
    %806 = vmatpush.msra.mxu0 %v213
    %807 = vmatpush.msra.mxu0 %v212
    %808 = vmatpush.msra.mxu0 %v211
    %809 = vmatpush.msra.mxu0 %v210
    %810 = vmatmul.f32.gmra.mxu0 %v792
    %v811 = vpop.f32.mrf.mxu0
    %v812 = vadd.f32 0.0, %v811
    %813 = vdwg.mxu0
    %v814 = vadd.f32 %v791, %v812
    %v815 = vmul.f32 %v790, 0.5
    %v816 = vsel %vm52, %v790, %v815
    %v817 = vtanh.pop %v816
    %v818 = vadd.f32 %v817, 1.0
    %v819 = vmul.f32 %v818, 0.5
    %v820 = vsel %vm52, %v817, %v819
    %v821 = vmul.f32 %v820, %v725
    %823 = vrot.lane.b32.xlu0 %v820, 64
    %v824 = vpop.permute.xlu0 %823
    %v826 = vmul.f32 %v820, %v824
    %828 = vrot.lane.b32.xlu0 %v826, 32
    %v829 = vpop.permute.xlu0 %828
    %v831 = vadd.f32 %v821, %v829
    %v832 = vtanh.pop %v831
    %834 = vrot.lane.b32.xlu0 %v832, 64
    %v835 = vpop.permute.xlu0 %834
    %v837 = vmul.f32 %v820, %v835
    %v838 = vmul.f32 %v814, 0.5
    %v839 = vsel %vm52, %v814, %v838
    %v840 = vtanh.pop %v839
    %v841 = vadd.f32 %v840, 1.0
    %v842 = vmul.f32 %v841, 0.5
    %v843 = vsel %vm52, %v840, %v842
    %v844 = vmul.f32 %v843, %v748
    %846 = vrot.lane.b32.xlu0 %v843, 64
    %v847 = vpop.permute.xlu0 %846
    %v849 = vmul.f32 %v843, %v847
    %851 = vrot.lane.b32.xlu0 %v849, 32
    %v852 = vpop.permute.xlu0 %851
    %v854 = vadd.f32 %v844, %v852
    %v855 = vtanh.pop %v854
    %857 = vrot.lane.b32.xlu0 %v855, 64
    %v858 = vpop.permute.xlu0 %857
    %v860 = vmul.f32 %v843, %v858
    %862 = vrot.lane.b32.xlu0 %v837, 32
    %v863 = vpop.permute.xlu0 %862
    %s865 = scalar_lea.vmem [#allocation3], 40
    %866 = vst.msk [vmem:[%s865] sm:$0xff] %vm218, %v863
    %868 = vrot.lane.b32.xlu0 %v860, 32
    %v869 = vpop.permute.xlu0 %868
    %s871 = scalar_lea.vmem [#allocation4], 16
    %872 = vst.msk [vmem:[%s871] sm:$0xff] %vm218, %v869
    %v873 = vld [vmem:[%s354] sm:$0xff]
    %v874 = vsel %vm218, %v863, 0
    %876 = vmatpush.msra.mxu0 0.0
    %877 = vmatpush.msra.mxu0 0.0
    %878 = vmatpush.msra.mxu0 0.0
    %879 = vmatpush.msra.mxu0 0.0
    %880 = vmatpush.msra.mxu0 0.0
    %881 = vmatpush.msra.mxu0 0.0
    %882 = vmatpush.msra.mxu0 0.0
    %883 = vmatpush.msra.mxu0 0.0
    %884 = vmatpush.msra.mxu0 0.0
    %885 = vmatpush.msra.mxu0 0.0
    %886 = vmatpush.msra.mxu0 0.0
    %887 = vmatpush.msra.mxu0 0.0
    %888 = vmatpush.msra.mxu0 %v209
    %889 = vmatpush.msra.mxu0 %v208
    %890 = vmatpush.msra.mxu0 %v207
    %891 = vmatpush.msra.mxu0 %v206
    %892 = vmatmul.f32.gmra.mxu0 %v874
    %v893 = vpop.f32.mrf.mxu0
    %v894 = vadd.f32 0.0, %v893
    %895 = vdwg.mxu0
    %v896 = vadd.f32 %v873, %v894
    %v897 = vld [vmem:[%s327 + $0x8] sm:$0xff]
    %v898 = vsel %vm218, %v869, 0
    %900 = vmatpush.msra.mxu0 0.0
    %901 = vmatpush.msra.mxu0 0.0
    %902 = vmatpush.msra.mxu0 0.0
    %903 = vmatpush.msra.mxu0 0.0
    %904 = vmatpush.msra.mxu0 0.0
    %905 = vmatpush.msra.mxu0 0.0
    %906 = vmatpush.msra.mxu0 0.0
    %907 = vmatpush.msra.mxu0 0.0
    %908 = vmatpush.msra.mxu0 0.0
    %909 = vmatpush.msra.mxu0 0.0
    %910 = vmatpush.msra.mxu0 0.0
    %911 = vmatpush.msra.mxu0 0.0
    %912 = vmatpush.msra.mxu0 %v213
    %913 = vmatpush.msra.mxu0 %v212
    %914 = vmatpush.msra.mxu0 %v211
    %915 = vmatpush.msra.mxu0 %v210
    %916 = vmatmul.f32.gmra.mxu0 %v898
    %v917 = vpop.f32.mrf.mxu0
    %v918 = vadd.f32 0.0, %v917
    %919 = vdwg.mxu0
    %v920 = vadd.f32 %v897, %v918
    %v921 = vmul.f32 %v896, 0.5
    %v922 = vsel %vm52, %v896, %v921
    %v923 = vtanh.pop %v922
    %v924 = vadd.f32 %v923, 1.0
    %v925 = vmul.f32 %v924, 0.5
    %v926 = vsel %vm52, %v923, %v925
    %v927 = vmul.f32 %v926, %v831
    %929 = vrot.lane.b32.xlu0 %v926, 64
    %v930 = vpop.permute.xlu0 %929
    %v932 = vmul.f32 %v926, %v930
    %934 = vrot.lane.b32.xlu0 %v932, 32
    %v935 = vpop.permute.xlu0 %934
    %v937 = vadd.f32 %v927, %v935
    %v938 = vtanh.pop %v937
    %940 = vrot.lane.b32.xlu0 %v938, 64
    %v941 = vpop.permute.xlu0 %940
    %v943 = vmul.f32 %v926, %v941
    %v944 = vmul.f32 %v920, 0.5
    %v945 = vsel %vm52, %v920, %v944
    %v946 = vtanh.pop %v945
    %v947 = vadd.f32 %v946, 1.0
    %v948 = vmul.f32 %v947, 0.5
    %v949 = vsel %vm52, %v946, %v948
    %v950 = vmul.f32 %v949, %v854
    %952 = vrot.lane.b32.xlu0 %v949, 64
    %v953 = vpop.permute.xlu0 %952
    %v955 = vmul.f32 %v949, %v953
    %957 = vrot.lane.b32.xlu0 %v955, 32
    %v958 = vpop.permute.xlu0 %957
    %v960 = vadd.f32 %v950, %v958
    %v961 = vtanh.pop %v960
    %963 = vrot.lane.b32.xlu0 %v961, 64
    %v964 = vpop.permute.xlu0 %963
    %v966 = vmul.f32 %v949, %v964
    %968 = vrot.lane.b32.xlu0 %v943, 32
    %v969 = vpop.permute.xlu0 %968
    %s971 = scalar_lea.vmem [#allocation3], 48
    %972 = vst.msk [vmem:[%s971] sm:$0xff] %vm218, %v969
    %974 = vrot.lane.b32.xlu0 %v966, 32
    %v975 = vpop.permute.xlu0 %974
    %s977 = scalar_lea.vmem [#allocation4], 8
    %978 = vst.msk [vmem:[%s977] sm:$0xff] %vm218, %v975
    %v979 = vld [vmem:[%s245] sm:$0xff]
    %v980 = vsel %vm218, %v969, 0
    %982 = vmatpush.msra.mxu0 0.0
    %983 = vmatpush.msra.mxu0 0.0
    %984 = vmatpush.msra.mxu0 0.0
    %985 = vmatpush.msra.mxu0 0.0
    %986 = vmatpush.msra.mxu0 0.0
    %987 = vmatpush.msra.mxu0 0.0
    %988 = vmatpush.msra.mxu0 0.0
    %989 = vmatpush.msra.mxu0 0.0
    %990 = vmatpush.msra.mxu0 0.0
    %991 = vmatpush.msra.mxu0 0.0
    %992 = vmatpush.msra.mxu0 0.0
    %993 = vmatpush.msra.mxu0 0.0
    %994 = vmatpush.msra.mxu0 %v209
    %995 = vmatpush.msra.mxu0 %v208
    %996 = vmatpush.msra.mxu0 %v207
    %997 = vmatpush.msra.mxu0 %v206
    %998 = vmatmul.f32.gmra.mxu0 %v980
    %v999 = vpop.f32.mrf.mxu0
    %v1000 = vadd.f32 0.0, %v999
    %1001 = vdwg.mxu0
    %v1002 = vadd.f32 %v979, %v1000
    %v1003 = vld [vmem:[%s216 + $0x8] sm:$0xff]
    %v1004 = vsel %vm218, %v975, 0
    %1006 = vmatpush.msra.mxu0 0.0
    %1007 = vmatpush.msra.mxu0 0.0
    %1008 = vmatpush.msra.mxu0 0.0
    %1009 = vmatpush.msra.mxu0 0.0
    %1010 = vmatpush.msra.mxu0 0.0
    %1011 = vmatpush.msra.mxu0 0.0
    %1012 = vmatpush.msra.mxu0 0.0
    %1013 = vmatpush.msra.mxu0 0.0
    %1014 = vmatpush.msra.mxu0 0.0
    %1015 = vmatpush.msra.mxu0 0.0
    %1016 = vmatpush.msra.mxu0 0.0
    %1017 = vmatpush.msra.mxu0 0.0
    %1018 = vmatpush.msra.mxu0 %v213
    %1019 = vmatpush.msra.mxu0 %v212
    %1020 = vmatpush.msra.mxu0 %v211
    %1021 = vmatpush.msra.mxu0 %v210
    %1022 = vmatmul.f32.gmra.mxu0 %v1004
    %v1023 = vpop.f32.mrf.mxu0
    %v1024 = vadd.f32 0.0, %v1023
    %1025 = vdwg.mxu0
    %v1026 = vadd.f32 %v1003, %v1024
    %v1027 = vmul.f32 %v1002, 0.5
    %v1028 = vsel %vm52, %v1002, %v1027
    %v1029 = vtanh.pop %v1028
    %v1030 = vadd.f32 %v1029, 1.0
    %v1031 = vmul.f32 %v1030, 0.5
    %v1032 = vsel %vm52, %v1029, %v1031
    %v1033 = vmul.f32 %v1032, %v937
    %1035 = vrot.lane.b32.xlu0 %v1032, 64
    %v1036 = vpop.permute.xlu0 %1035
    %v1038 = vmul.f32 %v1032, %v1036
    %1040 = vrot.lane.b32.xlu0 %v1038, 32
    %v1041 = vpop.permute.xlu0 %1040
    %v1043 = vadd.f32 %v1033, %v1041
    %v1044 = vtanh.pop %v1043
    %1046 = vrot.lane.b32.xlu0 %v1044, 64
    %v1047 = vpop.permute.xlu0 %1046
    %v1049 = vmul.f32 %v1032, %v1047
    %v1050 = vmul.f32 %v1026, 0.5
    %v1051 = vsel %vm52, %v1026, %v1050
    %v1052 = vtanh.pop %v1051
    %v1053 = vadd.f32 %v1052, 1.0
    %v1054 = vmul.f32 %v1053, 0.5
    %v1055 = vsel %vm52, %v1052, %v1054
    %v1056 = vmul.f32 %v1055, %v960
    %1058 = vrot.lane.b32.xlu0 %v1055, 64
    %v1059 = vpop.permute.xlu0 %1058
    %v1061 = vmul.f32 %v1055, %v1059
    %1063 = vrot.lane.b32.xlu0 %v1061, 32
    %v1064 = vpop.permute.xlu0 %1063
    %v1066 = vadd.f32 %v1056, %v1064
    %v1067 = vtanh.pop %v1066
    %1069 = vrot.lane.b32.xlu0 %v1067, 64
    %v1070 = vpop.permute.xlu0 %1069
    %v1072 = vmul.f32 %v1055, %v1070
    %1074 = vrot.lane.b32.xlu0 %v1049, 32
    %v1075 = vpop.permute.xlu0 %1074
    %s1077 = scalar_lea.vmem [#allocation3], 56
    %1078 = vst.msk [vmem:[%s1077] sm:$0xff] %vm218, %v1075
    %1080 = vrot.lane.b32.xlu0 %v1072, 32
    %v1081 = vpop.permute.xlu0 %1080
    %1083 = vst.msk [vmem:[#allocation4] sm:$0xff] %vm218, %v1081
    %v1084 = vld [vmem:[#allocation3] sm:$0xff]
    %v1085 = vld [vmem:[#allocation3 + $0x8] sm:$0xff]
    %v1086 = vld [vmem:[#allocation3 + $0x10] sm:$0xff]
    %v1087 = vld [vmem:[#allocation3 + $0x18] sm:$0xff]
    %v1088 = vld [vmem:[#allocation3 + $0x20] sm:$0xff]
    %v1089 = vld [vmem:[#allocation3 + $0x28] sm:$0xff]
    %v1090 = vld [vmem:[#allocation3 + $0x30] sm:$0xff]
    %v1091 = vld [vmem:[#allocation3 + $0x38] sm:$0xff]
    %v1092 = vld [vmem:[#allocation4] sm:$0xff]
    %v1093 = vld [vmem:[#allocation4 + $0x8] sm:$0xff]
    %v1094 = vld [vmem:[#allocation4 + $0x10] sm:$0xff]
    %v1095 = vld [vmem:[#allocation4 + $0x18] sm:$0xff]
    %v1096 = vld [vmem:[#allocation4 + $0x20] sm:$0xff]
    %v1097 = vld [vmem:[#allocation4 + $0x28] sm:$0xff]
    %v1098 = vld [vmem:[#allocation4 + $0x30] sm:$0xff]
    %v1099 = vld [vmem:[#allocation4 + $0x38] sm:$0xff]
    %1108 = vrot.lane.b32.xlu0 %v1092, 32
    %v1109 = vpop.permute.xlu0 %1108
    %1110 = vrot.lane.b32.xlu0 %v1093, 32
    %v1111 = vpop.permute.xlu0 %1110
    %1112 = vrot.lane.b32.xlu0 %v1094, 32
    %v1113 = vpop.permute.xlu0 %1112
    %1114 = vrot.lane.b32.xlu0 %v1095, 32
    %v1115 = vpop.permute.xlu0 %1114
    %1116 = vrot.lane.b32.xlu0 %v1096, 32
    %v1117 = vpop.permute.xlu0 %1116
    %1118 = vrot.lane.b32.xlu0 %v1097, 32
    %v1119 = vpop.permute.xlu0 %1118
    %1120 = vrot.lane.b32.xlu0 %v1098, 32
    %v1121 = vpop.permute.xlu0 %1120
    %1122 = vrot.lane.b32.xlu0 %v1099, 32
    %v1123 = vpop.permute.xlu0 %1122
    %v1132 = vsel %vm218, %v1084, %v1109
    %v1133 = vsel %vm218, %v1085, %v1111
    %v1134 = vsel %vm218, %v1086, %v1113
    %v1135 = vsel %vm218, %v1087, %v1115
    %v1136 = vsel %vm218, %v1088, %v1117
    %v1137 = vsel %vm218, %v1089, %v1119
    %v1138 = vsel %vm218, %v1090, %v1121
    %v1139 = vsel %vm218, %v1091, %v1123
    %v1140 = vld [vmem:[#allocation5] sm:$0xff]
    %v1141 = vld [vmem:[#allocation5 + $0x8] sm:$0xff]
    %v1142 = vld [vmem:[#allocation5 + $0x10] sm:$0xff]
    %v1143 = vld [vmem:[#allocation5 + $0x18] sm:$0xff]
    %v1144 = vld [vmem:[#allocation5 + $0x20] sm:$0xff]
    %v1145 = vld [vmem:[#allocation5 + $0x28] sm:$0xff]
    %v1146 = vld [vmem:[#allocation5 + $0x30] sm:$0xff]
    %v1147 = vld [vmem:[#allocation5 + $0x38] sm:$0xff]
    %v1148 = vld [vmem:[#allocation5 + $0x40] sm:$0xff]
    %v1149 = vld [vmem:[#allocation5 + $0x48] sm:$0xff]
    %v1150 = vld [vmem:[#allocation5 + $0x50] sm:$0xff]
    %v1151 = vld [vmem:[#allocation5 + $0x58] sm:$0xff]
    %v1152 = vld [vmem:[#allocation5 + $0x60] sm:$0xff]
    %v1153 = vld [vmem:[#allocation5 + $0x68] sm:$0xff]
    %v1154 = vld [vmem:[#allocation5 + $0x70] sm:$0xff]
    %v1155 = vld [vmem:[#allocation5 + $0x78] sm:$0xff]
    %v1156 = vld [vmem:[%s8] sm:$0x3]
    %v1158 = vperm.slane %v1156, 0
    %v1159 = vperm.slane %v1156, 1
    %v1163 = vsel %vm83, %v1132, 0
    %v1166 = vsel %vm83, %v1133, 0
    %v1169 = vsel %vm83, %v1134, 0
    %v1172 = vsel %vm83, %v1135, 0
    %v1175 = vsel %vm83, %v1136, 0
    %v1178 = vsel %vm83, %v1137, 0
    %v1181 = vsel %vm83, %v1138, 0
    %v1184 = vsel %vm83, %v1139, 0
    %1186 = vmatpush.msra.mxu0 0.0
    %1187 = vmatpush.msra.mxu0 0.0
    %1188 = vmatpush.msra.mxu0 0.0
    %1189 = vmatpush.msra.mxu0 0.0
    %1190 = vmatpush.msra.mxu0 0.0
    %1191 = vmatpush.msra.mxu0 0.0
    %1192 = vmatpush.msra.mxu0 0.0
    %1193 = vmatpush.msra.mxu0 0.0
    %1194 = vmatpush.msra.mxu0 %v1154
    %1195 = vmatpush.msra.mxu0 %v1152
    %1196 = vmatpush.msra.mxu0 %v1150
    %1197 = vmatpush.msra.mxu0 %v1148
    %1198 = vmatpush.msra.mxu0 %v1146
    %1199 = vmatpush.msra.mxu0 %v1144
    %1200 = vmatpush.msra.mxu0 %v1142
    %1201 = vmatpush.msra.mxu0 %v1140
    %1202 = vmatmul.f32.gmra.mxu0 %v1163
    %v1203 = vpop.f32.mrf.mxu0
    %v1204 = vadd.f32 %v1158, %v1203
    %1205 = vmatmul.f32.gmra.mxu0 %v1166
    %v1206 = vpop.f32.mrf.mxu0
    %v1207 = vadd.f32 %v1158, %v1206
    %1208 = vmatmul.f32.gmra.mxu0 %v1169
    %v1209 = vpop.f32.mrf.mxu0
    %v1210 = vadd.f32 %v1158, %v1209
    %1211 = vmatmul.f32.gmra.mxu0 %v1172
    %v1212 = vpop.f32.mrf.mxu0
    %v1213 = vadd.f32 %v1158, %v1212
    %1214 = vmatmul.f32.gmra.mxu0 %v1175
    %v1215 = vpop.f32.mrf.mxu0
    %v1216 = vadd.f32 %v1158, %v1215
    %1217 = vmatmul.f32.gmra.mxu0 %v1178
    %v1218 = vpop.f32.mrf.mxu0
    %v1219 = vadd.f32 %v1158, %v1218
    %1220 = vmatmul.f32.gmra.mxu0 %v1181
    %v1221 = vpop.f32.mrf.mxu0
    %v1222 = vadd.f32 %v1158, %v1221
    %1223 = vmatmul.f32.gmra.mxu0 %v1184
    %v1224 = vpop.f32.mrf.mxu0
    %v1225 = vadd.f32 %v1158, %v1224
    %1226 = vdwg.mxu0
    %1227 = vmatpush.msra.mxu0 0.0
    %1228 = vmatpush.msra.mxu0 0.0
    %1229 = vmatpush.msra.mxu0 0.0
    %1230 = vmatpush.msra.mxu0 0.0
    %1231 = vmatpush.msra.mxu0 0.0
    %1232 = vmatpush.msra.mxu0 0.0
    %1233 = vmatpush.msra.mxu0 0.0
    %1234 = vmatpush.msra.mxu0 0.0
    %1235 = vmatpush.msra.mxu0 %v1155
    %1236 = vmatpush.msra.mxu0 %v1153
    %1237 = vmatpush.msra.mxu0 %v1151
    %1238 = vmatpush.msra.mxu0 %v1149
    %1239 = vmatpush.msra.mxu0 %v1147
    %1240 = vmatpush.msra.mxu0 %v1145
    %1241 = vmatpush.msra.mxu0 %v1143
    %1242 = vmatpush.msra.mxu0 %v1141
    %1243 = vmatmul.f32.gmra.mxu0 %v1163
    %v1244 = vpop.f32.mrf.mxu0
    %v1245 = vadd.f32 %v1159, %v1244
    %1246 = vmatmul.f32.gmra.mxu0 %v1166
    %v1247 = vpop.f32.mrf.mxu0
    %v1248 = vadd.f32 %v1159, %v1247
    %1249 = vmatmul.f32.gmra.mxu0 %v1169
    %v1250 = vpop.f32.mrf.mxu0
    %v1251 = vadd.f32 %v1159, %v1250
    %1252 = vmatmul.f32.gmra.mxu0 %v1172
    %v1253 = vpop.f32.mrf.mxu0
    %v1254 = vadd.f32 %v1159, %v1253
    %1255 = vmatmul.f32.gmra.mxu0 %v1175
    %v1256 = vpop.f32.mrf.mxu0
    %v1257 = vadd.f32 %v1159, %v1256
    %1258 = vmatmul.f32.gmra.mxu0 %v1178
    %v1259 = vpop.f32.mrf.mxu0
    %v1260 = vadd.f32 %v1159, %v1259
    %1261 = vmatmul.f32.gmra.mxu0 %v1181
    %v1262 = vpop.f32.mrf.mxu0
    %v1263 = vadd.f32 %v1159, %v1262
    %1264 = vmatmul.f32.gmra.mxu0 %v1184
    %v1265 = vpop.f32.mrf.mxu0
    %v1266 = vadd.f32 %v1159, %v1265
    %1267 = vdwg.mxu0
    %1268 = vst [vmem:[#allocation2] sm:$0xff] %v1204
    %1269 = vst [vmem:[#allocation2 + $0x8] sm:$0xff] %v1245
    %1270 = vst [vmem:[#allocation2 + $0x10] sm:$0xff] %v1207
    %1271 = vst [vmem:[#allocation2 + $0x18] sm:$0xff] %v1248
    %1272 = vst [vmem:[#allocation2 + $0x20] sm:$0xff] %v1210
    %1273 = vst [vmem:[#allocation2 + $0x28] sm:$0xff] %v1251
    %1274 = vst [vmem:[#allocation2 + $0x30] sm:$0xff] %v1213
    %1275 = vst [vmem:[#allocation2 + $0x38] sm:$0xff] %v1254
    %1276 = vst [vmem:[#allocation2 + $0x40] sm:$0xff] %v1216
    %1277 = vst [vmem:[#allocation2 + $0x48] sm:$0xff] %v1257
    %1278 = vst [vmem:[#allocation2 + $0x50] sm:$0xff] %v1219
    %1279 = vst [vmem:[#allocation2 + $0x58] sm:$0xff] %v1260
    %1280 = vst [vmem:[#allocation2 + $0x60] sm:$0xff] %v1222
    %1281 = vst [vmem:[#allocation2 + $0x68] sm:$0xff] %v1263
    %1282 = vst [vmem:[#allocation2 + $0x70] sm:$0xff] %v1225
    %1283 = vst [vmem:[#allocation2 + $0x78] sm:$0xff] %v1266
    %v1284 = vld [vmem:[%s6] sm:$0xff]
    %v1285 = vld [vmem:[%s6 + $0x8] sm:$0xff]
    %v1286 = vld [vmem:[%s6 + $0x10] sm:$0xff]
    %v1287 = vld [vmem:[%s6 + $0x18] sm:$0xff]
    %v1288 = vld [vmem:[%s7] sm:$0xff]
    %v1289 = vld [vmem:[%s7 + $0x8] sm:$0xff]
    %v1290 = vld [vmem:[%s7 + $0x10] sm:$0xff]
    %v1291 = vld [vmem:[%s7 + $0x18] sm:$0xff]
    %v1292 = vld [vmem:[%s216] sm:$0xff]
    %1293 = vmatpush.msra.mxu0 0.0
    %1294 = vmatpush.msra.mxu0 0.0
    %1295 = vmatpush.msra.mxu0 0.0
    %1296 = vmatpush.msra.mxu0 0.0
    %1297 = vmatpush.msra.mxu0 0.0
    %1298 = vmatpush.msra.mxu0 0.0
    %1299 = vmatpush.msra.mxu0 0.0
    %1300 = vmatpush.msra.mxu0 0.0
    %1301 = vmatpush.msra.mxu0 0.0
    %1302 = vmatpush.msra.mxu0 0.0
    %1303 = vmatpush.msra.mxu0 0.0
    %1304 = vmatpush.msra.mxu0 0.0
    %1305 = vmatpush.msra.mxu0 %v1287
    %1306 = vmatpush.msra.mxu0 %v1286
    %1307 = vmatpush.msra.mxu0 %v1285
    %1308 = vmatpush.msra.mxu0 %v1284
    %1309 = vmatmul.f32.gmra.mxu0 %v220
    %v1310 = vpop.f32.mrf.mxu0
    %v1311 = vadd.f32 0.0, %v1310
    %1312 = vdwg.mxu0
    %v1313 = vadd.f32 %v1292, %v1311
    %v1314 = vld [vmem:[%s245 + $0x8] sm:$0xff]
    %1315 = vmatpush.msra.mxu0 0.0
    %1316 = vmatpush.msra.mxu0 0.0
    %1317 = vmatpush.msra.mxu0 0.0
    %1318 = vmatpush.msra.mxu0 0.0
    %1319 = vmatpush.msra.mxu0 0.0
    %1320 = vmatpush.msra.mxu0 0.0
    %1321 = vmatpush.msra.mxu0 0.0
    %1322 = vmatpush.msra.mxu0 0.0
    %1323 = vmatpush.msra.mxu0 0.0
    %1324 = vmatpush.msra.mxu0 0.0
    %1325 = vmatpush.msra.mxu0 0.0
    %1326 = vmatpush.msra.mxu0 0.0
    %1327 = vmatpush.msra.mxu0 %v1291
    %1328 = vmatpush.msra.mxu0 %v1290
    %1329 = vmatpush.msra.mxu0 %v1289
    %1330 = vmatpush.msra.mxu0 %v1288
    %1331 = vmatmul.f32.gmra.mxu0 %v220
    %v1332 = vpop.f32.mrf.mxu0
    %v1333 = vadd.f32 0.0, %v1332
    %1334 = vdwg.mxu0
    %v1335 = vadd.f32 %v1314, %v1333
    %v1336 = vmul.f32 %v1313, 0.5
    %v1337 = vsel %vm52, %v1313, %v1336
    %v1338 = vtanh.pop %v1337
    %v1339 = vadd.f32 %v1338, 1.0
    %v1340 = vmul.f32 %v1339, 0.5
    %v1341 = vsel %vm52, %v1338, %v1340
    %v1342 = vmul.f32 %v1341, 0.0
    %1344 = vrot.lane.b32.xlu0 %v1341, 64
    %v1345 = vpop.permute.xlu0 %1344
    %v1347 = vmul.f32 %v1341, %v1345
    %1349 = vrot.lane.b32.xlu0 %v1347, 32
    %v1350 = vpop.permute.xlu0 %1349
    %v1352 = vadd.f32 %v1342, %v1350
    %v1353 = vtanh.pop %v1352
    %1355 = vrot.lane.b32.xlu0 %v1353, 64
    %v1356 = vpop.permute.xlu0 %1355
    %v1358 = vmul.f32 %v1341, %v1356
    %v1359 = vmul.f32 %v1335, 0.5
    %v1360 = vsel %vm52, %v1335, %v1359
    %v1361 = vtanh.pop %v1360
    %v1362 = vadd.f32 %v1361, 1.0
    %v1363 = vmul.f32 %v1362, 0.5
    %v1364 = vsel %vm52, %v1361, %v1363
    %v1365 = vmul.f32 %v1364, 0.0
    %1367 = vrot.lane.b32.xlu0 %v1364, 64
    %v1368 = vpop.permute.xlu0 %1367
    %v1370 = vmul.f32 %v1364, %v1368
    %1372 = vrot.lane.b32.xlu0 %v1370, 32
    %v1373 = vpop.permute.xlu0 %1372
    %v1375 = vadd.f32 %v1365, %v1373
    %v1376 = vtanh.pop %v1375
    %1378 = vrot.lane.b32.xlu0 %v1376, 64
    %v1379 = vpop.permute.xlu0 %1378
    %v1381 = vmul.f32 %v1364, %v1379
    %1383 = vrot.lane.b32.xlu0 %v1358, 32
    %v1384 = vpop.permute.xlu0 %1383
    %1386 = vst.msk [vmem:[#allocation3] sm:$0xff] %vm218, %v1384
    %1388 = vrot.lane.b32.xlu0 %v1381, 32
    %v1389 = vpop.permute.xlu0 %1388
    %1391 = vst.msk [vmem:[%s323] sm:$0xff] %vm218, %v1389
    %v1392 = vld [vmem:[%s327] sm:$0xff]
    %v1393 = vsel %vm218, %v1384, 0
    %1395 = vmatpush.msra.mxu0 0.0
    %1396 = vmatpush.msra.mxu0 0.0
    %1397 = vmatpush.msra.mxu0 0.0
    %1398 = vmatpush.msra.mxu0 0.0
    %1399 = vmatpush.msra.mxu0 0.0
    %1400 = vmatpush.msra.mxu0 0.0
    %1401 = vmatpush.msra.mxu0 0.0
    %1402 = vmatpush.msra.mxu0 0.0
    %1403 = vmatpush.msra.mxu0 0.0
    %1404 = vmatpush.msra.mxu0 0.0
    %1405 = vmatpush.msra.mxu0 0.0
    %1406 = vmatpush.msra.mxu0 0.0
    %1407 = vmatpush.msra.mxu0 %v1287
    %1408 = vmatpush.msra.mxu0 %v1286
    %1409 = vmatpush.msra.mxu0 %v1285
    %1410 = vmatpush.msra.mxu0 %v1284
    %1411 = vmatmul.f32.gmra.mxu0 %v1393
    %v1412 = vpop.f32.mrf.mxu0
    %v1413 = vadd.f32 0.0, %v1412
    %1414 = vdwg.mxu0
    %v1415 = vadd.f32 %v1392, %v1413
    %v1416 = vld [vmem:[%s354 + $0x8] sm:$0xff]
    %v1417 = vsel %vm218, %v1389, 0
    %1419 = vmatpush.msra.mxu0 0.0
    %1420 = vmatpush.msra.mxu0 0.0
    %1421 = vmatpush.msra.mxu0 0.0
    %1422 = vmatpush.msra.mxu0 0.0
    %1423 = vmatpush.msra.mxu0 0.0
    %1424 = vmatpush.msra.mxu0 0.0
    %1425 = vmatpush.msra.mxu0 0.0
    %1426 = vmatpush.msra.mxu0 0.0
    %1427 = vmatpush.msra.mxu0 0.0
    %1428 = vmatpush.msra.mxu0 0.0
    %1429 = vmatpush.msra.mxu0 0.0
    %1430 = vmatpush.msra.mxu0 0.0
    %1431 = vmatpush.msra.mxu0 %v1291
    %1432 = vmatpush.msra.mxu0 %v1290
    %1433 = vmatpush.msra.mxu0 %v1289
    %1434 = vmatpush.msra.mxu0 %v1288
    %1435 = vmatmul.f32.gmra.mxu0 %v1417
    %v1436 = vpop.f32.mrf.mxu0
    %v1437 = vadd.f32 0.0, %v1436
    %1438 = vdwg.mxu0
    %v1439 = vadd.f32 %v1416, %v1437
    %v1440 = vmul.f32 %v1415, 0.5
    %v1441 = vsel %vm52, %v1415, %v1440
    %v1442 = vtanh.pop %v1441
    %v1443 = vadd.f32 %v1442, 1.0
    %v1444 = vmul.f32 %v1443, 0.5
    %v1445 = vsel %vm52, %v1442, %v1444
    %v1446 = vmul.f32 %v1445, %v1352
    %1448 = vrot.lane.b32.xlu0 %v1445, 64
    %v1449 = vpop.permute.xlu0 %1448
    %v1451 = vmul.f32 %v1445, %v1449
    %1453 = vrot.lane.b32.xlu0 %v1451, 32
    %v1454 = vpop.permute.xlu0 %1453
    %v1456 = vadd.f32 %v1446, %v1454
    %v1457 = vtanh.pop %v1456
    %1459 = vrot.lane.b32.xlu0 %v1457, 64
    %v1460 = vpop.permute.xlu0 %1459
    %v1462 = vmul.f32 %v1445, %v1460
    %v1463 = vmul.f32 %v1439, 0.5
    %v1464 = vsel %vm52, %v1439, %v1463
    %v1465 = vtanh.pop %v1464
    %v1466 = vadd.f32 %v1465, 1.0
    %v1467 = vmul.f32 %v1466, 0.5
    %v1468 = vsel %vm52, %v1465, %v1467
    %v1469 = vmul.f32 %v1468, %v1375
    %1471 = vrot.lane.b32.xlu0 %v1468, 64
    %v1472 = vpop.permute.xlu0 %1471
    %v1474 = vmul.f32 %v1468, %v1472
    %1476 = vrot.lane.b32.xlu0 %v1474, 32
    %v1477 = vpop.permute.xlu0 %1476
    %v1479 = vadd.f32 %v1469, %v1477
    %v1480 = vtanh.pop %v1479
    %1482 = vrot.lane.b32.xlu0 %v1480, 64
    %v1483 = vpop.permute.xlu0 %1482
    %v1485 = vmul.f32 %v1468, %v1483
    %1487 = vrot.lane.b32.xlu0 %v1462, 32
    %v1488 = vpop.permute.xlu0 %1487
    %1490 = vst.msk [vmem:[%s429] sm:$0xff] %vm218, %v1488
    %1492 = vrot.lane.b32.xlu0 %v1485, 32
    %v1493 = vpop.permute.xlu0 %1492
    %1495 = vst.msk [vmem:[%s435] sm:$0xff] %vm218, %v1493
    %v1496 = vld [vmem:[%s439] sm:$0xff]
    %v1497 = vsel %vm218, %v1488, 0
    %1499 = vmatpush.msra.mxu0 0.0
    %1500 = vmatpush.msra.mxu0 0.0
    %1501 = vmatpush.msra.mxu0 0.0
    %1502 = vmatpush.msra.mxu0 0.0
    %1503 = vmatpush.msra.mxu0 0.0
    %1504 = vmatpush.msra.mxu0 0.0
    %1505 = vmatpush.msra.mxu0 0.0
    %1506 = vmatpush.msra.mxu0 0.0
    %1507 = vmatpush.msra.mxu0 0.0
    %1508 = vmatpush.msra.mxu0 0.0
    %1509 = vmatpush.msra.mxu0 0.0
    %1510 = vmatpush.msra.mxu0 0.0
    %1511 = vmatpush.msra.mxu0 %v1287
    %1512 = vmatpush.msra.mxu0 %v1286
    %1513 = vmatpush.msra.mxu0 %v1285
    %1514 = vmatpush.msra.mxu0 %v1284
    %1515 = vmatmul.f32.gmra.mxu0 %v1497
    %v1516 = vpop.f32.mrf.mxu0
    %v1517 = vadd.f32 0.0, %v1516
    %1518 = vdwg.mxu0
    %v1519 = vadd.f32 %v1496, %v1517
    %v1520 = vld [vmem:[%s466 + $0x8] sm:$0xff]
    %v1521 = vsel %vm218, %v1493, 0
    %1523 = vmatpush.msra.mxu0 0.0
    %1524 = vmatpush.msra.mxu0 0.0
    %1525 = vmatpush.msra.mxu0 0.0
    %1526 = vmatpush.msra.mxu0 0.0
    %1527 = vmatpush.msra.mxu0 0.0
    %1528 = vmatpush.msra.mxu0 0.0
    %1529 = vmatpush.msra.mxu0 0.0
    %1530 = vmatpush.msra.mxu0 0.0
    %1531 = vmatpush.msra.mxu0 0.0
    %1532 = vmatpush.msra.mxu0 0.0
    %1533 = vmatpush.msra.mxu0 0.0
    %1534 = vmatpush.msra.mxu0 0.0
    %1535 = vmatpush.msra.mxu0 %v1291
    %1536 = vmatpush.msra.mxu0 %v1290
    %1537 = vmatpush.msra.mxu0 %v1289
    %1538 = vmatpush.msra.mxu0 %v1288
    %1539 = vmatmul.f32.gmra.mxu0 %v1521
    %v1540 = vpop.f32.mrf.mxu0
    %v1541 = vadd.f32 0.0, %v1540
    %1542 = vdwg.mxu0
    %v1543 = vadd.f32 %v1520, %v1541
    %v1544 = vmul.f32 %v1519, 0.5
    %v1545 = vsel %vm52, %v1519, %v1544
    %v1546 = vtanh.pop %v1545
    %v1547 = vadd.f32 %v1546, 1.0
    %v1548 = vmul.f32 %v1547, 0.5
    %v1549 = vsel %vm52, %v1546, %v1548
    %v1550 = vmul.f32 %v1549, %v1456
    %1552 = vrot.lane.b32.xlu0 %v1549, 64
    %v1553 = vpop.permute.xlu0 %1552
    %v1555 = vmul.f32 %v1549, %v1553
    %1557 = vrot.lane.b32.xlu0 %v1555, 32
    %v1558 = vpop.permute.xlu0 %1557
    %v1560 = vadd.f32 %v1550, %v1558
    %v1561 = vtanh.pop %v1560
    %1563 = vrot.lane.b32.xlu0 %v1561, 64
    %v1564 = vpop.permute.xlu0 %1563
    %v1566 = vmul.f32 %v1549, %v1564
    %v1567 = vmul.f32 %v1543, 0.5
    %v1568 = vsel %vm52, %v1543, %v1567
    %v1569 = vtanh.pop %v1568
    %v1570 = vadd.f32 %v1569, 1.0
    %v1571 = vmul.f32 %v1570, 0.5
    %v1572 = vsel %vm52, %v1569, %v1571
    %v1573 = vmul.f32 %v1572, %v1479
    %1575 = vrot.lane.b32.xlu0 %v1572, 64
    %v1576 = vpop.permute.xlu0 %1575
    %v1578 = vmul.f32 %v1572, %v1576
    %1580 = vrot.lane.b32.xlu0 %v1578, 32
    %v1581 = vpop.permute.xlu0 %1580
    %v1583 = vadd.f32 %v1573, %v1581
    %v1584 = vtanh.pop %v1583
    %1586 = vrot.lane.b32.xlu0 %v1584, 64
    %v1587 = vpop.permute.xlu0 %1586
    %v1589 = vmul.f32 %v1572, %v1587
    %1591 = vrot.lane.b32.xlu0 %v1566, 32
    %v1592 = vpop.permute.xlu0 %1591
    %1594 = vst.msk [vmem:[%s541] sm:$0xff] %vm218, %v1592
    %1596 = vrot.lane.b32.xlu0 %v1589, 32
    %v1597 = vpop.permute.xlu0 %1596
    %1599 = vst.msk [vmem:[%s547] sm:$0xff] %vm218, %v1597
    %v1600 = vld [vmem:[%s551] sm:$0xff]
    %v1601 = vsel %vm218, %v1592, 0
    %1603 = vmatpush.msra.mxu0 0.0
    %1604 = vmatpush.msra.mxu0 0.0
    %1605 = vmatpush.msra.mxu0 0.0
    %1606 = vmatpush.msra.mxu0 0.0
    %1607 = vmatpush.msra.mxu0 0.0
    %1608 = vmatpush.msra.mxu0 0.0
    %1609 = vmatpush.msra.mxu0 0.0
    %1610 = vmatpush.msra.mxu0 0.0
    %1611 = vmatpush.msra.mxu0 0.0
    %1612 = vmatpush.msra.mxu0 0.0
    %1613 = vmatpush.msra.mxu0 0.0
    %1614 = vmatpush.msra.mxu0 0.0
    %1615 = vmatpush.msra.mxu0 %v1287
    %1616 = vmatpush.msra.mxu0 %v1286
    %1617 = vmatpush.msra.mxu0 %v1285
    %1618 = vmatpush.msra.mxu0 %v1284
    %1619 = vmatmul.f32.gmra.mxu0 %v1601
    %v1620 = vpop.f32.mrf.mxu0
    %v1621 = vadd.f32 0.0, %v1620
    %1622 = vdwg.mxu0
    %v1623 = vadd.f32 %v1600, %v1621
    %v1624 = vld [vmem:[%s578 + $0x8] sm:$0xff]
    %v1625 = vsel %vm218, %v1597, 0
    %1627 = vmatpush.msra.mxu0 0.0
    %1628 = vmatpush.msra.mxu0 0.0
    %1629 = vmatpush.msra.mxu0 0.0
    %1630 = vmatpush.msra.mxu0 0.0
    %1631 = vmatpush.msra.mxu0 0.0
    %1632 = vmatpush.msra.mxu0 0.0
    %1633 = vmatpush.msra.mxu0 0.0
    %1634 = vmatpush.msra.mxu0 0.0
    %1635 = vmatpush.msra.mxu0 0.0
    %1636 = vmatpush.msra.mxu0 0.0
    %1637 = vmatpush.msra.mxu0 0.0
    %1638 = vmatpush.msra.mxu0 0.0
    %1639 = vmatpush.msra.mxu0 %v1291
    %1640 = vmatpush.msra.mxu0 %v1290
    %1641 = vmatpush.msra.mxu0 %v1289
    %1642 = vmatpush.msra.mxu0 %v1288
    %1643 = vmatmul.f32.gmra.mxu0 %v1625
    %v1644 = vpop.f32.mrf.mxu0
    %v1645 = vadd.f32 0.0, %v1644
    %1646 = vdwg.mxu0
    %v1647 = vadd.f32 %v1624, %v1645
    %v1648 = vmul.f32 %v1623, 0.5
    %v1649 = vsel %vm52, %v1623, %v1648
    %v1650 = vtanh.pop %v1649
    %v1651 = vadd.f32 %v1650, 1.0
    %v1652 = vmul.f32 %v1651, 0.5
    %v1653 = vsel %vm52, %v1650, %v1652
    %v1654 = vmul.f32 %v1653, %v1560
    %1656 = vrot.lane.b32.xlu0 %v1653, 64
    %v1657 = vpop.permute.xlu0 %1656
    %v1659 = vmul.f32 %v1653, %v1657
    %1661 = vrot.lane.b32.xlu0 %v1659, 32
    %v1662 = vpop.permute.xlu0 %1661
    %v1664 = vadd.f32 %v1654, %v1662
    %v1665 = vtanh.pop %v1664
    %1667 = vrot.lane.b32.xlu0 %v1665, 64
    %v1668 = vpop.permute.xlu0 %1667
    %v1670 = vmul.f32 %v1653, %v1668
    %v1671 = vmul.f32 %v1647, 0.5
    %v1672 = vsel %vm52, %v1647, %v1671
    %v1673 = vtanh.pop %v1672
    %v1674 = vadd.f32 %v1673, 1.0
    %v1675 = vmul.f32 %v1674, 0.5
    %v1676 = vsel %vm52, %v1673, %v1675
    %v1677 = vmul.f32 %v1676, %v1583
    %1679 = vrot.lane.b32.xlu0 %v1676, 64
    %v1680 = vpop.permute.xlu0 %1679
    %v1682 = vmul.f32 %v1676, %v1680
    %1684 = vrot.lane.b32.xlu0 %v1682, 32
    %v1685 = vpop.permute.xlu0 %1684
    %v1687 = vadd.f32 %v1677, %v1685
    %v1688 = vtanh.pop %v1687
    %1690 = vrot.lane.b32.xlu0 %v1688, 64
    %v1691 = vpop.permute.xlu0 %1690
    %v1693 = vmul.f32 %v1676, %v1691
    %1695 = vrot.lane.b32.xlu0 %v1670, 32
    %v1696 = vpop.permute.xlu0 %1695
    %1698 = vst.msk [vmem:[%s653] sm:$0xff] %vm218, %v1696
    %1700 = vrot.lane.b32.xlu0 %v1693, 32
    %v1701 = vpop.permute.xlu0 %1700
    %1703 = vst.msk [vmem:[%s659] sm:$0xff] %vm218, %v1701
    %v1704 = vld [vmem:[%s578] sm:$0xff]
    %v1705 = vsel %vm218, %v1696, 0
    %1707 = vmatpush.msra.mxu0 0.0
    %1708 = vmatpush.msra.mxu0 0.0
    %1709 = vmatpush.msra.mxu0 0.0
    %1710 = vmatpush.msra.mxu0 0.0
    %1711 = vmatpush.msra.mxu0 0.0
    %1712 = vmatpush.msra.mxu0 0.0
    %1713 = vmatpush.msra.mxu0 0.0
    %1714 = vmatpush.msra.mxu0 0.0
    %1715 = vmatpush.msra.mxu0 0.0
    %1716 = vmatpush.msra.mxu0 0.0
    %1717 = vmatpush.msra.mxu0 0.0
    %1718 = vmatpush.msra.mxu0 0.0
    %1719 = vmatpush.msra.mxu0 %v1287
    %1720 = vmatpush.msra.mxu0 %v1286
    %1721 = vmatpush.msra.mxu0 %v1285
    %1722 = vmatpush.msra.mxu0 %v1284
    %1723 = vmatmul.f32.gmra.mxu0 %v1705
    %v1724 = vpop.f32.mrf.mxu0
    %v1725 = vadd.f32 0.0, %v1724
    %1726 = vdwg.mxu0
    %v1727 = vadd.f32 %v1704, %v1725
    %v1728 = vld [vmem:[%s551 + $0x8] sm:$0xff]
    %v1729 = vsel %vm218, %v1701, 0
    %1731 = vmatpush.msra.mxu0 0.0
    %1732 = vmatpush.msra.mxu0 0.0
    %1733 = vmatpush.msra.mxu0 0.0
    %1734 = vmatpush.msra.mxu0 0.0
    %1735 = vmatpush.msra.mxu0 0.0
    %1736 = vmatpush.msra.mxu0 0.0
    %1737 = vmatpush.msra.mxu0 0.0
    %1738 = vmatpush.msra.mxu0 0.0
    %1739 = vmatpush.msra.mxu0 0.0
    %1740 = vmatpush.msra.mxu0 0.0
    %1741 = vmatpush.msra.mxu0 0.0
    %1742 = vmatpush.msra.mxu0 0.0
    %1743 = vmatpush.msra.mxu0 %v1291
    %1744 = vmatpush.msra.mxu0 %v1290
    %1745 = vmatpush.msra.mxu0 %v1289
    %1746 = vmatpush.msra.mxu0 %v1288
    %1747 = vmatmul.f32.gmra.mxu0 %v1729
    %v1748 = vpop.f32.mrf.mxu0
    %v1749 = vadd.f32 0.0, %v1748
    %1750 = vdwg.mxu0
    %v1751 = vadd.f32 %v1728, %v1749
    %v1752 = vmul.f32 %v1727, 0.5
    %v1753 = vsel %vm52, %v1727, %v1752
    %v1754 = vtanh.pop %v1753
    %v1755 = vadd.f32 %v1754, 1.0
    %v1756 = vmul.f32 %v1755, 0.5
    %v1757 = vsel %vm52, %v1754, %v1756
    %v1758 = vmul.f32 %v1757, %v1664
    %1760 = vrot.lane.b32.xlu0 %v1757, 64
    %v1761 = vpop.permute.xlu0 %1760
    %v1763 = vmul.f32 %v1757, %v1761
    %1765 = vrot.lane.b32.xlu0 %v1763, 32
    %v1766 = vpop.permute.xlu0 %1765
    %v1768 = vadd.f32 %v1758, %v1766
    %v1769 = vtanh.pop %v1768
    %1771 = vrot.lane.b32.xlu0 %v1769, 64
    %v1772 = vpop.permute.xlu0 %1771
    %v1774 = vmul.f32 %v1757, %v1772
    %v1775 = vmul.f32 %v1751, 0.5
    %v1776 = vsel %vm52, %v1751, %v1775
    %v1777 = vtanh.pop %v1776
    %v1778 = vadd.f32 %v1777, 1.0
    %v1779 = vmul.f32 %v1778, 0.5
    %v1780 = vsel %vm52, %v1777, %v1779
    %v1781 = vmul.f32 %v1780, %v1687
    %1783 = vrot.lane.b32.xlu0 %v1780, 64
    %v1784 = vpop.permute.xlu0 %1783
    %v1786 = vmul.f32 %v1780, %v1784
    %1788 = vrot.lane.b32.xlu0 %v1786, 32
    %v1789 = vpop.permute.xlu0 %1788
    %v1791 = vadd.f32 %v1781, %v1789
    %v1792 = vtanh.pop %v1791
    %1794 = vrot.lane.b32.xlu0 %v1792, 64
    %v1795 = vpop.permute.xlu0 %1794
    %v1797 = vmul.f32 %v1780, %v1795
    %1799 = vrot.lane.b32.xlu0 %v1774, 32
    %v1800 = vpop.permute.xlu0 %1799
    %1802 = vst.msk [vmem:[%s759] sm:$0xff] %vm218, %v1800
    %1804 = vrot.lane.b32.xlu0 %v1797, 32
    %v1805 = vpop.permute.xlu0 %1804
    %1807 = vst.msk [vmem:[%s765] sm:$0xff] %vm218, %v1805
    %v1808 = vld [vmem:[%s466] sm:$0xff]
    %v1809 = vsel %vm218, %v1800, 0
    %1811 = vmatpush.msra.mxu0 0.0
    %1812 = vmatpush.msra.mxu0 0.0
    %1813 = vmatpush.msra.mxu0 0.0
    %1814 = vmatpush.msra.mxu0 0.0
    %1815 = vmatpush.msra.mxu0 0.0
    %1816 = vmatpush.msra.mxu0 0.0
    %1817 = vmatpush.msra.mxu0 0.0
    %1818 = vmatpush.msra.mxu0 0.0
    %1819 = vmatpush.msra.mxu0 0.0
    %1820 = vmatpush.msra.mxu0 0.0
    %1821 = vmatpush.msra.mxu0 0.0
    %1822 = vmatpush.msra.mxu0 0.0
    %1823 = vmatpush.msra.mxu0 %v1287
    %1824 = vmatpush.msra.mxu0 %v1286
    %1825 = vmatpush.msra.mxu0 %v1285
    %1826 = vmatpush.msra.mxu0 %v1284
    %1827 = vmatmul.f32.gmra.mxu0 %v1809
    %v1828 = vpop.f32.mrf.mxu0
    %v1829 = vadd.f32 0.0, %v1828
    %1830 = vdwg.mxu0
    %v1831 = vadd.f32 %v1808, %v1829
    %v1832 = vld [vmem:[%s439 + $0x8] sm:$0xff]
    %v1833 = vsel %vm218, %v1805, 0
    %1835 = vmatpush.msra.mxu0 0.0
    %1836 = vmatpush.msra.mxu0 0.0
    %1837 = vmatpush.msra.mxu0 0.0
    %1838 = vmatpush.msra.mxu0 0.0
    %1839 = vmatpush.msra.mxu0 0.0
    %1840 = vmatpush.msra.mxu0 0.0
    %1841 = vmatpush.msra.mxu0 0.0
    %1842 = vmatpush.msra.mxu0 0.0
    %1843 = vmatpush.msra.mxu0 0.0
    %1844 = vmatpush.msra.mxu0 0.0
    %1845 = vmatpush.msra.mxu0 0.0
    %1846 = vmatpush.msra.mxu0 0.0
    %1847 = vmatpush.msra.mxu0 %v1291
    %1848 = vmatpush.msra.mxu0 %v1290
    %1849 = vmatpush.msra.mxu0 %v1289
    %1850 = vmatpush.msra.mxu0 %v1288
    %1851 = vmatmul.f32.gmra.mxu0 %v1833
    %v1852 = vpop.f32.mrf.mxu0
    %v1853 = vadd.f32 0.0, %v1852
    %1854 = vdwg.mxu0
    %v1855 = vadd.f32 %v1832, %v1853
    %v1856 = vmul.f32 %v1831, 0.5
    %v1857 = vsel %vm52, %v1831, %v1856
    %v1858 = vtanh.pop %v1857
    %v1859 = vadd.f32 %v1858, 1.0
    %v1860 = vmul.f32 %v1859, 0.5
    %v1861 = vsel %vm52, %v1858, %v1860
    %v1862 = vmul.f32 %v1861, %v1768
    %1864 = vrot.lane.b32.xlu0 %v1861, 64
    %v1865 = vpop.permute.xlu0 %1864
    %v1867 = vmul.f32 %v1861, %v1865
    %1869 = vrot.lane.b32.xlu0 %v1867, 32
    %v1870 = vpop.permute.xlu0 %1869
    %v1872 = vadd.f32 %v1862, %v1870
    %v1873 = vtanh.pop %v1872
    %1875 = vrot.lane.b32.xlu0 %v1873, 64
    %v1876 = vpop.permute.xlu0 %1875
    %v1878 = vmul.f32 %v1861, %v1876
    %v1879 = vmul.f32 %v1855, 0.5
    %v1880 = vsel %vm52, %v1855, %v1879
    %v1881 = vtanh.pop %v1880
    %v1882 = vadd.f32 %v1881, 1.0
    %v1883 = vmul.f32 %v1882, 0.5
    %v1884 = vsel %vm52, %v1881, %v1883
    %v1885 = vmul.f32 %v1884, %v1791
    %1887 = vrot.lane.b32.xlu0 %v1884, 64
    %v1888 = vpop.permute.xlu0 %1887
    %v1890 = vmul.f32 %v1884, %v1888
    %1892 = vrot.lane.b32.xlu0 %v1890, 32
    %v1893 = vpop.permute.xlu0 %1892
    %v1895 = vadd.f32 %v1885, %v1893
    %v1896 = vtanh.pop %v1895
    %1898 = vrot.lane.b32.xlu0 %v1896, 64
    %v1899 = vpop.permute.xlu0 %1898
    %v1901 = vmul.f32 %v1884, %v1899
    %1903 = vrot.lane.b32.xlu0 %v1878, 32
    %v1904 = vpop.permute.xlu0 %1903
    %1906 = vst.msk [vmem:[%s865] sm:$0xff] %vm218, %v1904
    %1908 = vrot.lane.b32.xlu0 %v1901, 32
    %v1909 = vpop.permute.xlu0 %1908
    %1911 = vst.msk [vmem:[%s871] sm:$0xff] %vm218, %v1909
    %v1912 = vld [vmem:[%s354] sm:$0xff]
    %v1913 = vsel %vm218, %v1904, 0
    %1915 = vmatpush.msra.mxu0 0.0
    %1916 = vmatpush.msra.mxu0 0.0
    %1917 = vmatpush.msra.mxu0 0.0
    %1918 = vmatpush.msra.mxu0 0.0
    %1919 = vmatpush.msra.mxu0 0.0
    %1920 = vmatpush.msra.mxu0 0.0
    %1921 = vmatpush.msra.mxu0 0.0
    %1922 = vmatpush.msra.mxu0 0.0
    %1923 = vmatpush.msra.mxu0 0.0
    %1924 = vmatpush.msra.mxu0 0.0
    %1925 = vmatpush.msra.mxu0 0.0
    %1926 = vmatpush.msra.mxu0 0.0
    %1927 = vmatpush.msra.mxu0 %v1287
    %1928 = vmatpush.msra.mxu0 %v1286
    %1929 = vmatpush.msra.mxu0 %v1285
    %1930 = vmatpush.msra.mxu0 %v1284
    %1931 = vmatmul.f32.gmra.mxu0 %v1913
    %v1932 = vpop.f32.mrf.mxu0
    %v1933 = vadd.f32 0.0, %v1932
    %1934 = vdwg.mxu0
    %v1935 = vadd.f32 %v1912, %v1933
    %v1936 = vld [vmem:[%s327 + $0x8] sm:$0xff]
    %v1937 = vsel %vm218, %v1909, 0
    %1939 = vmatpush.msra.mxu0 0.0
    %1940 = vmatpush.msra.mxu0 0.0
    %1941 = vmatpush.msra.mxu0 0.0
    %1942 = vmatpush.msra.mxu0 0.0
    %1943 = vmatpush.msra.mxu0 0.0
    %1944 = vmatpush.msra.mxu0 0.0
    %1945 = vmatpush.msra.mxu0 0.0
    %1946 = vmatpush.msra.mxu0 0.0
    %1947 = vmatpush.msra.mxu0 0.0
    %1948 = vmatpush.msra.mxu0 0.0
    %1949 = vmatpush.msra.mxu0 0.0
    %1950 = vmatpush.msra.mxu0 0.0
    %1951 = vmatpush.msra.mxu0 %v1291
    %1952 = vmatpush.msra.mxu0 %v1290
    %1953 = vmatpush.msra.mxu0 %v1289
    %1954 = vmatpush.msra.mxu0 %v1288
    %1955 = vmatmul.f32.gmra.mxu0 %v1937
    %v1956 = vpop.f32.mrf.mxu0
    %v1957 = vadd.f32 0.0, %v1956
    %1958 = vdwg.mxu0
    %v1959 = vadd.f32 %v1936, %v1957
    %v1960 = vmul.f32 %v1935, 0.5
    %v1961 = vsel %vm52, %v1935, %v1960
    %v1962 = vtanh.pop %v1961
    %v1963 = vadd.f32 %v1962, 1.0
    %v1964 = vmul.f32 %v1963, 0.5
    %v1965 = vsel %vm52, %v1962, %v1964
    %v1966 = vmul.f32 %v1965, %v1872
    %1968 = vrot.lane.b32.xlu0 %v1965, 64
    %v1969 = vpop.permute.xlu0 %1968
    %v1971 = vmul.f32 %v1965, %v1969
    %1973 = vrot.lane.b32.xlu0 %v1971, 32
    %v1974 = vpop.permute.xlu0 %1973
    %v1976 = vadd.f32 %v1966, %v1974
    %v1977 = vtanh.pop %v1976
    %1979 = vrot.lane.b32.xlu0 %v1977, 64
    %v1980 = vpop.permute.xlu0 %1979
    %v1982 = vmul.f32 %v1965, %v1980
    %v1983 = vmul.f32 %v1959, 0.5
    %v1984 = vsel %vm52, %v1959, %v1983
    %v1985 = vtanh.pop %v1984
    %v1986 = vadd.f32 %v1985, 1.0
    %v1987 = vmul.f32 %v1986, 0.5
    %v1988 = vsel %vm52, %v1985, %v1987
    %v1989 = vmul.f32 %v1988, %v1895
    %1991 = vrot.lane.b32.xlu0 %v1988, 64
    %v1992 = vpop.permute.xlu0 %1991
    %v1994 = vmul.f32 %v1988, %v1992
    %1996 = vrot.lane.b32.xlu0 %v1994, 32
    %v1997 = vpop.permute.xlu0 %1996
    %v1999 = vadd.f32 %v1989, %v1997
    %v2000 = vtanh.pop %v1999
    %2002 = vrot.lane.b32.xlu0 %v2000, 64
    %v2003 = vpop.permute.xlu0 %2002
    %v2005 = vmul.f32 %v1988, %v2003
    %2007 = vrot.lane.b32.xlu0 %v1982, 32
    %v2008 = vpop.permute.xlu0 %2007
    %2010 = vst.msk [vmem:[%s971] sm:$0xff] %vm218, %v2008
    %2012 = vrot.lane.b32.xlu0 %v2005, 32
    %v2013 = vpop.permute.xlu0 %2012
    %2015 = vst.msk [vmem:[%s977] sm:$0xff] %vm218, %v2013
    %v2016 = vld [vmem:[%s245] sm:$0xff]
    %v2017 = vsel %vm218, %v2008, 0
    %2019 = vmatpush.msra.mxu0 0.0
    %2020 = vmatpush.msra.mxu0 0.0
    %2021 = vmatpush.msra.mxu0 0.0
    %2022 = vmatpush.msra.mxu0 0.0
    %2023 = vmatpush.msra.mxu0 0.0
    %2024 = vmatpush.msra.mxu0 0.0
    %2025 = vmatpush.msra.mxu0 0.0
    %2026 = vmatpush.msra.mxu0 0.0
    %2027 = vmatpush.msra.mxu0 0.0
    %2028 = vmatpush.msra.mxu0 0.0
    %2029 = vmatpush.msra.mxu0 0.0
    %2030 = vmatpush.msra.mxu0 0.0
    %2031 = vmatpush.msra.mxu0 %v1287
    %2032 = vmatpush.msra.mxu0 %v1286
    %2033 = vmatpush.msra.mxu0 %v1285
    %2034 = vmatpush.msra.mxu0 %v1284
    %2035 = vmatmul.f32.gmra.mxu0 %v2017
    %v2036 = vpop.f32.mrf.mxu0
    %v2037 = vadd.f32 0.0, %v2036
    %2038 = vdwg.mxu0
    %v2039 = vadd.f32 %v2016, %v2037
    %v2040 = vld [vmem:[%s216 + $0x8] sm:$0xff]
    %v2041 = vsel %vm218, %v2013, 0
    %2043 = vmatpush.msra.mxu0 0.0
    %2044 = vmatpush.msra.mxu0 0.0
    %2045 = vmatpush.msra.mxu0 0.0
    %2046 = vmatpush.msra.mxu0 0.0
    %2047 = vmatpush.msra.mxu0 0.0
    %2048 = vmatpush.msra.mxu0 0.0
    %2049 = vmatpush.msra.mxu0 0.0
    %2050 = vmatpush.msra.mxu0 0.0
    %2051 = vmatpush.msra.mxu0 0.0
    %2052 = vmatpush.msra.mxu0 0.0
    %2053 = vmatpush.msra.mxu0 0.0
    %2054 = vmatpush.msra.mxu0 0.0
    %2055 = vmatpush.msra.mxu0 %v1291
    %2056 = vmatpush.msra.mxu0 %v1290
    %2057 = vmatpush.msra.mxu0 %v1289
    %2058 = vmatpush.msra.mxu0 %v1288
    %2059 = vmatmul.f32.gmra.mxu0 %v2041
    %v2060 = vpop.f32.mrf.mxu0
    %v2061 = vadd.f32 0.0, %v2060
    %2062 = vdwg.mxu0
    %v2063 = vadd.f32 %v2040, %v2061
    %v2064 = vmul.f32 %v2039, 0.5
    %v2065 = vsel %vm52, %v2039, %v2064
    %v2066 = vtanh.pop %v2065
    %v2067 = vadd.f32 %v2066, 1.0
    %v2068 = vmul.f32 %v2067, 0.5
    %v2069 = vsel %vm52, %v2066, %v2068
    %v2070 = vmul.f32 %v2069, %v1976
    %2072 = vrot.lane.b32.xlu0 %v2069, 64
    %v2073 = vpop.permute.xlu0 %2072
    %v2075 = vmul.f32 %v2069, %v2073
    %2077 = vrot.lane.b32.xlu0 %v2075, 32
    %v2078 = vpop.permute.xlu0 %2077
    %v2080 = vadd.f32 %v2070, %v2078
    %v2081 = vtanh.pop %v2080
    %2083 = vrot.lane.b32.xlu0 %v2081, 64
    %v2084 = vpop.permute.xlu0 %2083
    %v2086 = vmul.f32 %v2069, %v2084
    %v2087 = vmul.f32 %v2063, 0.5
    %v2088 = vsel %vm52, %v2063, %v2087
    %v2089 = vtanh.pop %v2088
    %v2090 = vadd.f32 %v2089, 1.0
    %v2091 = vmul.f32 %v2090, 0.5
    %v2092 = vsel %vm52, %v2089, %v2091
    %v2093 = vmul.f32 %v2092, %v1999
    %2095 = vrot.lane.b32.xlu0 %v2092, 64
    %v2096 = vpop.permute.xlu0 %2095
    %v2098 = vmul.f32 %v2092, %v2096
    %2100 = vrot.lane.b32.xlu0 %v2098, 32
    %v2101 = vpop.permute.xlu0 %2100
    %v2103 = vadd.f32 %v2093, %v2101
    %v2104 = vtanh.pop %v2103
    %2106 = vrot.lane.b32.xlu0 %v2104, 64
    %v2107 = vpop.permute.xlu0 %2106
    %v2109 = vmul.f32 %v2092, %v2107
    %2111 = vrot.lane.b32.xlu0 %v2086, 32
    %v2112 = vpop.permute.xlu0 %2111
    %2114 = vst.msk [vmem:[%s1077] sm:$0xff] %vm218, %v2112
    %2116 = vrot.lane.b32.xlu0 %v2109, 32
    %v2117 = vpop.permute.xlu0 %2116
    %2119 = vst.msk [vmem:[#allocation4] sm:$0xff] %vm218, %v2117
    %v2120 = vld [vmem:[#allocation3] sm:$0xff]
    %v2121 = vld [vmem:[#allocation3 + $0x8] sm:$0xff]
    %v2122 = vld [vmem:[#allocation3 + $0x10] sm:$0xff]
    %v2123 = vld [vmem:[#allocation3 + $0x18] sm:$0xff]
    %v2124 = vld [vmem:[#allocation3 + $0x20] sm:$0xff]
    %v2125 = vld [vmem:[#allocation3 + $0x28] sm:$0xff]
    %v2126 = vld [vmem:[#allocation3 + $0x30] sm:$0xff]
    %v2127 = vld [vmem:[#allocation3 + $0x38] sm:$0xff]
    %v2128 = vld [vmem:[#allocation4] sm:$0xff]
    %v2129 = vld [vmem:[#allocation4 + $0x8] sm:$0xff]
    %v2130 = vld [vmem:[#allocation4 + $0x10] sm:$0xff]
    %v2131 = vld [vmem:[#allocation4 + $0x18] sm:$0xff]
    %v2132 = vld [vmem:[#allocation4 + $0x20] sm:$0xff]
    %v2133 = vld [vmem:[#allocation4 + $0x28] sm:$0xff]
    %v2134 = vld [vmem:[#allocation4 + $0x30] sm:$0xff]
    %v2135 = vld [vmem:[#allocation4 + $0x38] sm:$0xff]
    %2144 = vrot.lane.b32.xlu0 %v2128, 32
    %v2145 = vpop.permute.xlu0 %2144
    %2146 = vrot.lane.b32.xlu0 %v2129, 32
    %v2147 = vpop.permute.xlu0 %2146
    %2148 = vrot.lane.b32.xlu0 %v2130, 32
    %v2149 = vpop.permute.xlu0 %2148
    %2150 = vrot.lane.b32.xlu0 %v2131, 32
    %v2151 = vpop.permute.xlu0 %2150
    %2152 = vrot.lane.b32.xlu0 %v2132, 32
    %v2153 = vpop.permute.xlu0 %2152
    %2154 = vrot.lane.b32.xlu0 %v2133, 32
    %v2155 = vpop.permute.xlu0 %2154
    %2156 = vrot.lane.b32.xlu0 %v2134, 32
    %v2157 = vpop.permute.xlu0 %2156
    %2158 = vrot.lane.b32.xlu0 %v2135, 32
    %v2159 = vpop.permute.xlu0 %2158
    %v2168 = vsel %vm218, %v2120, %v2145
    %v2169 = vsel %vm218, %v2121, %v2147
    %v2170 = vsel %vm218, %v2122, %v2149
    %v2171 = vsel %vm218, %v2123, %v2151
    %v2172 = vsel %vm218, %v2124, %v2153
    %v2173 = vsel %vm218, %v2125, %v2155
    %v2174 = vsel %vm218, %v2126, %v2157
    %v2175 = vsel %vm218, %v2127, %v2159
    %2176 = vst.msk [vmem:[%s9] sm:$0xff] %vm83, %v2168
    %2177 = vst.msk [vmem:[%s9 + $0x8] sm:$0xff] %vm83, %v2169
    %2178 = vst.msk [vmem:[%s9 + $0x10] sm:$0xff] %vm83, %v2170
    %2179 = vst.msk [vmem:[%s9 + $0x18] sm:$0xff] %vm83, %v2171
    %2180 = vst.msk [vmem:[%s9 + $0x20] sm:$0xff] %vm83, %v2172
    %2181 = vst.msk [vmem:[%s9 + $0x28] sm:$0xff] %vm83, %v2173
    %2182 = vst.msk [vmem:[%s9 + $0x30] sm:$0xff] %vm83, %v2174
    %2183 = vst.msk [vmem:[%s9 + $0x38] sm:$0xff] %vm83, %v2175
    // Predicated region
    $region42: #{model_forward.2} parent=1 // pred_check
      _
    $region43: #{model_forward.2} parent=1 // pred_check_branch
      %2185 = sbr.rel (0) target = $region45
    $region44: #{model_forward.2} parent=1 // pred_region
      _
    $region45: #{model_forward.2} parent=1 // pred_fallthru
      _
    // Predicated region
    $region46: #{model_forward.2} parent=1 // pred_check
      _
    $region47: #{model_forward.2} parent=1 // pred_check_branch
      %2187 = sbr.rel (0) target = $region49
    $region48: #{model_forward.2} parent=1 // pred_region
      _
    $region49: #{model_forward.2} parent=1 // pred_fallthru
      _
    %2188 = vsyncpa [#allocation6], 1

</llo_original>
